<compile_context>
chip_gen: v7x
topology: tpu7x:2x2x1
jax: 0.10.0
libtpu: 0.0.40
codegen_flags: <defaults>
</compile_context>

<pallas_src>
import functools
import math

import jax
import jax.numpy as jnp
from jax.experimental import pallas as pl
from jax.experimental.pallas import tpu as pltpu


def _gru_chunk_kernel(len_ref, gi_ref, whh_ref, bhn_ref,
                      out_ref, hid_ref, h_scr, *, bb, hp, tc):
    """One grid step (batch_block, chunk) runs `tc` GRU timesteps.

    len_ref : (bb, 1)        int32  per-sequence lengths (packed-seq masking)
    gi_ref  : (tc, bb, 3*hp) cd     precomputed x@W_ih^T + b_ih + b_hr/b_hz
    whh_ref : (hp, 3*hp)     cd     recurrent weights (gate-tiled, lane-padded)
    bhn_ref : (1, hp)        f32    n-gate recurrent bias (cannot be folded)
    out_ref : (tc, bb, hp)   f32    per-step outputs (zero where padded)
    hid_ref : (bb, hp)       f32    final hidden (written on last chunk only)
    h_scr   : (bb, hp)       f32    hidden carried across chunks (VMEM)
    """
    c = pl.program_id(1)
    last = pl.num_programs(1) - 1

    @pl.when(c == 0)
    def _():
        h_scr[...] = jnp.zeros_like(h_scr)

    whh = whh_ref[...]                       # (hp, 3hp), compute dtype
    bhn = bhn_ref[...]                       # (1, hp) f32
    lengths = len_ref[...]                   # (bb, 1) int32
    t0 = c * tc

    # Packed-sequence masks for the whole chunk, hoisted off the serial chain.
    masks = [lengths > (t0 + i) for i in range(tc)]

    h = h_scr[...]                           # (bb, hp) f32
    for i in range(tc):                      # fully unrolled, static indices
        gi = gi_ref[i]                       # (bb, 3hp); b_ih (+ b_hr, b_hz) folded in
        gh = jnp.dot(h.astype(whh.dtype), whh,
                     preferred_element_type=jnp.float32)     # (bb, 3hp) f32

        # PyTorch gate order (r, z, n); slices are 128-lane tile aligned.
        i_r, i_z, i_n = gi[:, :hp], gi[:, hp:2 * hp], gi[:, 2 * hp:]
        h_r, h_z, h_n = gh[:, :hp], gh[:, hp:2 * hp], gh[:, 2 * hp:]

        r = jax.nn.sigmoid(i_r + h_r)
        z = jax.nn.sigmoid(i_z + h_z)
        n = jnp.tanh(i_n + r * (h_n + bhn))
        h_new = (1.0 - z) * n + z * h

        m = masks[i]                         # (bb, 1) bool: t < length[b]
        out_ref[i] = jnp.where(m, h_new, 0.0).astype(out_ref.dtype)
        h = jnp.where(m, h_new, h)

    h_scr[...] = h

    @pl.when(c == last)
    def _():
        hid_ref[...] = h.astype(hid_ref.dtype)


def _pad_gate_weights(w, hp):
    """(3H, In) PyTorch gate-stacked weights -> (In, 3*hp), gate g in lanes [g*hp, g*hp+H)."""
    three_h, in_dim = w.shape
    h = three_h // 3
    wg = w.reshape(3, h, in_dim).astype(jnp.float32)             # (3, H, In)
    wp = jnp.zeros((3, hp, in_dim), jnp.float32).at[:, :h, :].set(wg)
    return jnp.transpose(wp, (2, 0, 1)).reshape(in_dim, 3 * hp)  # (In, 3*hp)


def _pad_gate_bias(bvec, hp):
    h = bvec.shape[0] // 3
    bg = bvec.reshape(3, h).astype(jnp.float32)
    bp = jnp.zeros((3, hp), jnp.float32).at[:, :h].set(bg)
    return bp.reshape(1, 3 * hp)


def encoder_rnn_forward(input_seq, input_lengths, emb_table,
                        w_ih, w_hh, b_ih, b_hh, *,
                        time_chunk=16, batch_block=None,
                        compute_dtype=jnp.bfloat16):
    """Mirrors EncoderRNN.forward: embedding -> packed GRU -> padded outputs.

    compute_dtype controls the HBM/streamed dtype of gi and W_hh (bf16 default
    per perf review); the hidden state and gate math are always float32.
    batch_block < B splits independent batch rows across megacore TensorCores
    (v7x); it must be a multiple of 8.
    """
    T, B = input_seq.shape
    E = emb_table.shape[1]
    H = w_hh.shape[1]
    HP = ((H + 127) // 128) * 128            # lane-pad hidden/gate dim to 128

    BB = B if batch_block is None else int(batch_block)
    assert B % BB == 0, "batch_block must divide B"
    assert BB == B or BB % 8 == 0, "batch_block must be sublane (8) aligned"

    # ---- weights / biases: gate-tiled, lane-padded --------------------------
    wih_t = _pad_gate_weights(w_ih, HP).astype(compute_dtype)     # (E, 3*HP)
    whh_t = _pad_gate_weights(w_hh, HP)                           # (H, 3*HP)
    whh_t = jnp.zeros((HP, 3 * HP), jnp.float32).at[:H, :].set(whh_t)
    whh_t = whh_t.astype(compute_dtype)                           # (HP, 3*HP)

    bih_p = _pad_gate_bias(b_ih, HP)                              # (1, 3*HP)
    bhh_p = _pad_gate_bias(b_hh, HP)                              # (1, 3*HP)
    # Fold only the r/z thirds of b_hh; the n third is applied inside r*(...).
    b_fold = bih_p + bhh_p.at[:, 2 * HP:].set(0.0)                # (1, 3*HP)
    bhn = bhh_p[:, 2 * HP:]                                       # (1, HP)

    # ---- plain-XLA glue: embedding gather + hoisted input projection -------
    embedded = emb_table[input_seq].astype(compute_dtype)         # (T, B, E)
    gi_all = jnp.dot(embedded.reshape(T * B, E), wih_t,
                     preferred_element_type=jnp.float32) + b_fold
    gi_all = gi_all.astype(compute_dtype).reshape(T, B, 3 * HP)

    lengths = input_lengths.astype(jnp.int32).reshape(B, 1)

    # ---- chunk the time axis; recurrence runs inside each chunk ------------
    TC = min(time_chunk, T)
    TP = ((T + TC - 1) // TC) * TC
    if TP != T:
        gi_all = jnp.pad(gi_all, ((0, TP - T), (0, 0), (0, 0)))
    num_chunks = TP // TC
    num_bblk = B // BB

    # Explicit scoped-VMEM budget (double-buffered pipeline blocks + scratch).
    def nbytes(shape, dtype):
        return math.prod(shape) * jnp.dtype(dtype).itemsize

    est = (2 * nbytes((TC, BB, 3 * HP), compute_dtype)   # gi double buffer
           + 2 * nbytes((TC, BB, HP), jnp.float32)       # outputs double buffer
           + 2 * nbytes((HP, 3 * HP), compute_dtype)     # W_hh (double-buffered)
           + 2 * nbytes((BB, HP), jnp.float32)           # final hidden out
           + 4 * nbytes((8, 128), jnp.float32)           # bhn / lengths tiles
           + nbytes((BB, HP), jnp.float32))              # h carry scratch
    vmem_limit = int(min(max(4 * est, 32 * 1024 * 1024), 100 * 1024 * 1024))
    # NOTE: W_hh / bhn / lengths are grid-invariant; single-buffering them via
    # pipeline_mode=pl.Buffered(1) would save more VMEM on v7x if needed.

    kernel = functools.partial(_gru_chunk_kernel, bb=BB, hp=HP, tc=TC)

    out_pad, hid_pad = pl.pallas_call(
        kernel,
        out_shape=(
            jax.ShapeDtypeStruct((TP, B, HP), jnp.float32),
            jax.ShapeDtypeStruct((B, HP), jnp.float32),
        ),
        grid_spec=pltpu.PrefetchScalarGridSpec(
            num_scalar_prefetch=0,
            grid=(num_bblk, num_chunks),
            in_specs=[
                pl.BlockSpec((BB, 1), lambda bb_, c: (bb_, 0)),              # lengths
                pl.BlockSpec((TC, BB, 3 * HP), lambda bb_, c: (c, bb_, 0)),  # gi chunk
                pl.BlockSpec((HP, 3 * HP), lambda bb_, c: (0, 0)),           # W_hh^T
                pl.BlockSpec((1, HP), lambda bb_, c: (0, 0)),                # b_hn
            ],
            out_specs=[
                pl.BlockSpec((TC, BB, HP), lambda bb_, c: (c, bb_, 0)),      # outputs
                pl.BlockSpec((BB, HP), lambda bb_, c: (bb_, 0)),             # final h
            ],
            scratch_shapes=[pltpu.VMEM((BB, HP), jnp.float32)],
        ),
        compiler_params=pltpu.CompilerParams(
            dimension_semantics=("parallel", "arbitrary"),
            vmem_limit_bytes=vmem_limit),
    )(lengths, gi_all, whh_t, bhn)

    # No-op when TP == T and HP == H (avoids extra HBM passes in that case).
    outputs = out_pad if (TP == T and HP == H) else out_pad[:T, :, :H]
    hidden = (hid_pad if HP == H else hid_pad[:, :H])[None, :, :]
    return outputs, hidden


def _reference_forward(input_seq, input_lengths, emb_table, w_ih, w_hh, b_ih, b_hh):
    """Pure-JAX f32 reference implementing the same packed-GRU semantics as PyTorch."""
    T, B = input_seq.shape
    H = w_hh.shape[1]
    embedded = emb_table[input_seq]

    def step(h, inp):
        x, t = inp
        gi = x @ w_ih.T + b_ih
        gh = h @ w_hh.T + b_hh
        i_r, i_z, i_n = jnp.split(gi, 3, axis=-1)
        h_r, h_z, h_n = jnp.split(gh, 3, axis=-1)
        r = jax.nn.sigmoid(i_r + h_r)
        z = jax.nn.sigmoid(i_z + h_z)
        n = jnp.tanh(i_n + r * h_n)
        h_new = (1.0 - z) * n + z * h
        mask = (input_lengths > t)[:, None]
        h_out = jnp.where(mask, h_new, h)
        y = jnp.where(mask, h_new, 0.0)
        return h_out, y

    h0 = jnp.zeros((B, H), jnp.float32)
    h_last, ys = jax.lax.scan(step, h0, (embedded, jnp.arange(T)))
    return ys, h_last[None]


if __name__ == "__main__":
    # Small shapes consistent with the module (hidden_size == embedding_dim).
    VOCAB, E, H, T, B = 40, 64, 64, 20, 8

    key = jax.random.PRNGKey(0)
    k_emb, k_wih, k_whh, k_bih, k_bhh, k_seq = jax.random.split(key, 6)

    scale = 1.0 / math.sqrt(H)
    emb_table = jax.random.normal(k_emb, (VOCAB, E), jnp.float32)
    w_ih = jax.random.uniform(k_wih, (3 * H, E), jnp.float32, -scale, scale)
    w_hh = jax.random.uniform(k_whh, (3 * H, H), jnp.float32, -scale, scale)
    b_ih = jax.random.uniform(k_bih, (3 * H,), jnp.float32, -scale, scale)
    b_hh = jax.random.uniform(k_bhh, (3 * H,), jnp.float32, -scale, scale)

    input_seq = jax.random.randint(k_seq, (T, B), 0, VOCAB, jnp.int32)
    # pack_padded_sequence expects lengths sorted in decreasing order, <= T.
    input_lengths = jnp.array([20, 18, 16, 13, 10, 7, 4, 1], jnp.int32)

    ref_out, ref_hid = _reference_forward(
        input_seq, input_lengths, emb_table, w_ih, w_hh, b_ih, b_hh)

    # Exact-semantics check: f32 compute path must match the reference tightly.
    out32, hid32 = encoder_rnn_forward(
        input_seq, input_lengths, emb_table, w_ih, w_hh, b_ih, b_hh,
        compute_dtype=jnp.float32)
    jax.block_until_ready((out32, hid32))
    assert out32.shape == (T, B, H) and hid32.shape == (1, B, H)
    assert jnp.allclose(out32, ref_out, atol=1e-4, rtol=1e-4)
    assert jnp.allclose(hid32, ref_hid, atol=1e-4, rtol=1e-4)

    # Performance path (default): bf16 gi / W_hh stream, f32 state & gate math.
    outbf, hidbf = encoder_rnn_forward(
        input_seq, input_lengths, emb_table, w_ih, w_hh, b_ih, b_hh)
    jax.block_until_ready((outbf, hidbf))
    assert outbf.shape == (T, B, H) and hidbf.shape == (1, B, H)
    assert jnp.allclose(outbf, ref_out, atol=8e-2)
    assert jnp.allclose(hidbf, ref_hid, atol=8e-2)

    print("KERNEL_OK")
</pallas_src>

<mosaic_0001>
module attributes {stable_mosaic.version = 11 : i64} {
  func.func @_gru_chunk_kernel(%arg0: i32, %arg1: i32, %arg2: memref<8x1xi32, #tpu.memory_space<vmem>>, %arg3: memref<16x8x384xf32, #tpu.memory_space<vmem>>, %arg4: memref<128x384xf32, #tpu.memory_space<vmem>>, %arg5: memref<1x128xf32, #tpu.memory_space<vmem>>, %arg6: memref<16x8x128xf32, #tpu.memory_space<vmem>>, %arg7: memref<8x128xf32, #tpu.memory_space<vmem>>, %arg8: memref<8x128xf32, #tpu.memory_space<vmem>>) attributes {dimension_semantics = [#tpu.dimension_semantics<parallel>, #tpu.dimension_semantics<arbitrary>], iteration_bounds = array<i64: 1, 2>, scalar_prefetch = 0 : i64, scratch_operands = 1 : i64, tpu.core_type = #tpu.core_type<tc>, window_params = [{transform_indices = @transform_0, window_bounds = array<i64: 8, 1>}, {transform_indices = @transform_1, window_bounds = array<i64: 16, 8, 384>}, {pipeline_mode = #tpu.pipeline_mode<synchronous>, transform_indices = @transform_2, window_bounds = array<i64: 128, 384>}, {pipeline_mode = #tpu.pipeline_mode<synchronous>, transform_indices = @transform_3, window_bounds = array<i64: 1, 128>}, {transform_indices = @transform_4, window_bounds = array<i64: 16, 8, 128>}, {transform_indices = @transform_5, window_bounds = array<i64: 8, 128>}]} {
    %c0_i32 = arith.constant 0 : i32
    %0 = arith.cmpi eq, %arg1, %c0_i32 : i32
    %1 = arith.extui %0 : i1 to i32
    %c0_i32_0 = arith.constant 0 : i32
    %2 = arith.cmpi ne, %1, %c0_i32_0 : i32
    scf.if %2 {
      %cst_173 = arith.constant 0.000000e+00 : f32
      %716 = vector.broadcast %cst_173 : f32 to vector<8x128xf32>
      %c0_174 = arith.constant 0 : index
      %c0_175 = arith.constant 0 : index
      %717 = vector.load %arg8[%c0_174, %c0_175] : memref<8x128xf32, #tpu.memory_space<vmem>>, vector<8x128xf32>
      tpu.vector_store %arg8[%c0_174, %c0_175], %716 {strides = array<i32>} : memref<8x128xf32, #tpu.memory_space<vmem>>, vector<8x128xf32>,
    } else {
    }
    %c0 = arith.constant 0 : index
    %c0_1 = arith.constant 0 : index
    %3 = vector.load %arg4[%c0, %c0_1] : memref<128x384xf32, #tpu.memory_space<vmem>>, vector<128x384xf32>
    %c0_2 = arith.constant 0 : index
    %c0_3 = arith.constant 0 : index
    %4 = vector.load %arg5[%c0_2, %c0_3] : memref<1x128xf32, #tpu.memory_space<vmem>>, vector<1x128xf32>
    %c0_4 = arith.constant 0 : index
    %c0_5 = arith.constant 0 : index
    %5 = vector.load %arg2[%c0_4, %c0_5] : memref<8x1xi32, #tpu.memory_space<vmem>>, vector<8x1xi32>
    %c16_i32 = arith.constant 16 : i32
    %6 = arith.muli %arg1, %c16_i32 : i32
    %c0_i32_6 = arith.constant 0 : i32
    %7 = arith.addi %6, %c0_i32_6 : i32
    %8 = vector.broadcast %7 : i32 to vector<8x1xi32>
    %9 = arith.cmpi sgt, %5, %8 : vector<8x1xi32>
    %c1_i32 = arith.constant 1 : i32
    %10 = arith.addi %6, %c1_i32 : i32
    %11 = vector.broadcast %10 : i32 to vector<8x1xi32>
    %12 = arith.cmpi sgt, %5, %11 : vector<8x1xi32>
    %c2_i32 = arith.constant 2 : i32
    %13 = arith.addi %6, %c2_i32 : i32
    %14 = vector.broadcast %13 : i32 to vector<8x1xi32>
    %15 = arith.cmpi sgt, %5, %14 : vector<8x1xi32>
    %c3_i32 = arith.constant 3 : i32
    %16 = arith.addi %6, %c3_i32 : i32
    %17 = vector.broadcast %16 : i32 to vector<8x1xi32>
    %18 = arith.cmpi sgt, %5, %17 : vector<8x1xi32>
    %c4_i32 = arith.constant 4 : i32
    %19 = arith.addi %6, %c4_i32 : i32
    %20 = vector.broadcast %19 : i32 to vector<8x1xi32>
    %21 = arith.cmpi sgt, %5, %20 : vector<8x1xi32>
    %c5_i32 = arith.constant 5 : i32
    %22 = arith.addi %6, %c5_i32 : i32
    %23 = vector.broadcast %22 : i32 to vector<8x1xi32>
    %24 = arith.cmpi sgt, %5, %23 : vector<8x1xi32>
    %c6_i32 = arith.constant 6 : i32
    %25 = arith.addi %6, %c6_i32 : i32
    %26 = vector.broadcast %25 : i32 to vector<8x1xi32>
    %27 = arith.cmpi sgt, %5, %26 : vector<8x1xi32>
    %c7_i32 = arith.constant 7 : i32
    %28 = arith.addi %6, %c7_i32 : i32
    %29 = vector.broadcast %28 : i32 to vector<8x1xi32>
    %30 = arith.cmpi sgt, %5, %29 : vector<8x1xi32>
    %c8_i32 = arith.constant 8 : i32
    %31 = arith.addi %6, %c8_i32 : i32
    %32 = vector.broadcast %31 : i32 to vector<8x1xi32>
    %33 = arith.cmpi sgt, %5, %32 : vector<8x1xi32>
    %c9_i32 = arith.constant 9 : i32
    %34 = arith.addi %6, %c9_i32 : i32
    %35 = vector.broadcast %34 : i32 to vector<8x1xi32>
    %36 = arith.cmpi sgt, %5, %35 : vector<8x1xi32>
    %c10_i32 = arith.constant 10 : i32
    %37 = arith.addi %6, %c10_i32 : i32
    %38 = vector.broadcast %37 : i32 to vector<8x1xi32>
    %39 = arith.cmpi sgt, %5, %38 : vector<8x1xi32>
    %c11_i32 = arith.constant 11 : i32
    %40 = arith.addi %6, %c11_i32 : i32
    %41 = vector.broadcast %40 : i32 to vector<8x1xi32>
    %42 = arith.cmpi sgt, %5, %41 : vector<8x1xi32>
    %c12_i32 = arith.constant 12 : i32
    %43 = arith.addi %6, %c12_i32 : i32
    %44 = vector.broadcast %43 : i32 to vector<8x1xi32>
    %45 = arith.cmpi sgt, %5, %44 : vector<8x1xi32>
    %c13_i32 = arith.constant 13 : i32
    %46 = arith.addi %6, %c13_i32 : i32
    %47 = vector.broadcast %46 : i32 to vector<8x1xi32>
    %48 = arith.cmpi sgt, %5, %47 : vector<8x1xi32>
    %c14_i32 = arith.constant 14 : i32
    %49 = arith.addi %6, %c14_i32 : i32
    %50 = vector.broadcast %49 : i32 to vector<8x1xi32>
    %51 = arith.cmpi sgt, %5, %50 : vector<8x1xi32>
    %c15_i32 = arith.constant 15 : i32
    %52 = arith.addi %6, %c15_i32 : i32
    %53 = vector.broadcast %52 : i32 to vector<8x1xi32>
    %54 = arith.cmpi sgt, %5, %53 : vector<8x1xi32>
    %c0_7 = arith.constant 0 : index
    %c0_8 = arith.constant 0 : index
    %55 = vector.load %arg8[%c0_7, %c0_8] : memref<8x128xf32, #tpu.memory_space<vmem>>, vector<8x128xf32>
    %c0_9 = arith.constant 0 : index
    %c0_10 = arith.constant 0 : index
    %c0_11 = arith.constant 0 : index
    %56 = vector.load %arg3[%c0_9, %c0_10, %c0_11] : memref<16x8x384xf32, #tpu.memory_space<vmem>>, vector<1x8x384xf32>
    %57 = vector.shape_cast %56 : vector<1x8x384xf32> to vector<8x384xf32>
    %cst = arith.constant dense<0.000000e+00> : vector<8x384xf32>
    %58 = tpu.matmul %55, %3, %cst {dimension_numbers = #tpu.dot_dimension_numbers<[1], [0], [0], [1], [0, 0, 1, 1], [], []>} : vector<8x128xf32>, vector<128x384xf32>, vector<8x384xf32> -> vector<8x384xf32>
    %59 = vector.extract_strided_slice %57 {offsets = [0, 0], sizes = [8, 128], strides = [1, 1]} : vector<8x384xf32> to vector<8x128xf32>
    %60 = vector.extract_strided_slice %57 {offsets = [0, 128], sizes = [8, 128], strides = [1, 1]} : vector<8x384xf32> to vector<8x128xf32>
    %61 = vector.extract_strided_slice %57 {offsets = [0, 256], sizes = [8, 128], strides = [1, 1]} : vector<8x384xf32> to vector<8x128xf32>
    %62 = vector.extract_strided_slice %58 {offsets = [0, 0], sizes = [8, 128], strides = [1, 1]} : vector<8x384xf32> to vector<8x128xf32>
    %63 = vector.extract_strided_slice %58 {offsets = [0, 128], sizes = [8, 128], strides = [1, 1]} : vector<8x384xf32> to vector<8x128xf32>
    %64 = vector.extract_strided_slice %58 {offsets = [0, 256], sizes = [8, 128], strides = [1, 1]} : vector<8x384xf32> to vector<8x128xf32>
    %65 = arith.addf %59, %62 : vector<8x128xf32>
    %66 = arith.negf %65 : vector<8x128xf32>
    %67 = math.exp %66 : vector<8x128xf32>
    %cst_12 = arith.constant 1.000000e+00 : f32
    %68 = vector.broadcast %cst_12 : f32 to vector<8x128xf32>
    %69 = arith.addf %68, %67 : vector<8x128xf32>
    %70 = arith.divf %68, %69 : vector<8x128xf32>
    %71 = arith.addf %60, %63 : vector<8x128xf32>
    %72 = arith.negf %71 : vector<8x128xf32>
    %73 = math.exp %72 : vector<8x128xf32>
    %cst_13 = arith.constant 1.000000e+00 : f32
    %74 = vector.broadcast %cst_13 : f32 to vector<8x128xf32>
    %75 = arith.addf %74, %73 : vector<8x128xf32>
    %76 = arith.divf %74, %75 : vector<8x128xf32>
    %77 = vector.broadcast %4 : vector<1x128xf32> to vector<8x128xf32>
    %78 = arith.addf %64, %77 : vector<8x128xf32>
    %79 = arith.mulf %70, %78 : vector<8x128xf32>
    %80 = arith.addf %61, %79 : vector<8x128xf32>
    %81 = math.tanh %80 : vector<8x128xf32>
    %cst_14 = arith.constant 1.000000e+00 : f32
    %82 = vector.broadcast %cst_14 : f32 to vector<8x128xf32>
    %83 = arith.subf %82, %76 : vector<8x128xf32>
    %84 = arith.mulf %83, %81 : vector<8x128xf32>
    %85 = arith.mulf %76, %55 : vector<8x128xf32>
    %86 = arith.addf %84, %85 : vector<8x128xf32>
    %cst_15 = arith.constant 0.000000e+00 : f32
    %87 = vector.shape_cast %9 : vector<8x1xi1> to vector<8x1xi1>
    %88 = vector.broadcast %87 : vector<8x1xi1> to vector<8x128xi1>
    %89 = vector.broadcast %cst_15 : f32 to vector<8x128xf32>
    %90 = arith.select %88, %86, %89 : vector<8x128xi1>, vector<8x128xf32>
    %c0_16 = arith.constant 0 : index
    %c0_17 = arith.constant 0 : index
    %c0_18 = arith.constant 0 : index
    %91 = vector.load %arg6[%c0_16, %c0_17, %c0_18] : memref<16x8x128xf32, #tpu.memory_space<vmem>>, vector<1x8x128xf32>
    %92 = vector.shape_cast %91 : vector<1x8x128xf32> to vector<8x128xf32>
    %93 = vector.shape_cast %90 : vector<8x128xf32> to vector<1x8x128xf32>
    tpu.vector_store %arg6[%c0_16, %c0_17, %c0_18], %93 {strides = array<i32>} : memref<16x8x128xf32, #tpu.memory_space<vmem>>, vector<1x8x128xf32>,
    %94 = vector.shape_cast %9 : vector<8x1xi1> to vector<8x1xi1>
    %95 = vector.broadcast %94 : vector<8x1xi1> to vector<8x128xi1>
    %96 = arith.select %95, %86, %55 : vector<8x128xi1>, vector<8x128xf32>
    %c1 = arith.constant 1 : index
    %c0_19 = arith.constant 0 : index
    %c0_20 = arith.constant 0 : index
    %97 = vector.load %arg3[%c1, %c0_19, %c0_20] : memref<16x8x384xf32, #tpu.memory_space<vmem>>, vector<1x8x384xf32>
    %98 = vector.shape_cast %97 : vector<1x8x384xf32> to vector<8x384xf32>
    %cst_21 = arith.constant dense<0.000000e+00> : vector<8x384xf32>
    %99 = tpu.matmul %96, %3, %cst_21 {dimension_numbers = #tpu.dot_dimension_numbers<[1], [0], [0], [1], [0, 0, 1, 1], [], []>} : vector<8x128xf32>, vector<128x384xf32>, vector<8x384xf32> -> vector<8x384xf32>
    %100 = vector.extract_strided_slice %98 {offsets = [0, 0], sizes = [8, 128], strides = [1, 1]} : vector<8x384xf32> to vector<8x128xf32>
    %101 = vector.extract_strided_slice %98 {offsets = [0, 128], sizes = [8, 128], strides = [1, 1]} : vector<8x384xf32> to vector<8x128xf32>
    %102 = vector.extract_strided_slice %98 {offsets = [0, 256], sizes = [8, 128], strides = [1, 1]} : vector<8x384xf32> to vector<8x128xf32>
    %103 = vector.extract_strided_slice %99 {offsets = [0, 0], sizes = [8, 128], strides = [1, 1]} : vector<8x384xf32> to vector<8x128xf32>
    %104 = vector.extract_strided_slice %99 {offsets = [0, 128], sizes = [8, 128], strides = [1, 1]} : vector<8x384xf32> to vector<8x128xf32>
    %105 = vector.extract_strided_slice %99 {offsets = [0, 256], sizes = [8, 128], strides = [1, 1]} : vector<8x384xf32> to vector<8x128xf32>
    %106 = arith.addf %100, %103 : vector<8x128xf32>
    %107 = arith.negf %106 : vector<8x128xf32>
    %108 = math.exp %107 : vector<8x128xf32>
    %cst_22 = arith.constant 1.000000e+00 : f32
    %109 = vector.broadcast %cst_22 : f32 to vector<8x128xf32>
    %110 = arith.addf %109, %108 : vector<8x128xf32>
    %111 = arith.divf %109, %110 : vector<8x128xf32>
    %112 = arith.addf %101, %104 : vector<8x128xf32>
    %113 = arith.negf %112 : vector<8x128xf32>
    %114 = math.exp %113 : vector<8x128xf32>
    %cst_23 = arith.constant 1.000000e+00 : f32
    %115 = vector.broadcast %cst_23 : f32 to vector<8x128xf32>
    %116 = arith.addf %115, %114 : vector<8x128xf32>
    %117 = arith.divf %115, %116 : vector<8x128xf32>
    %118 = vector.broadcast %4 : vector<1x128xf32> to vector<8x128xf32>
    %119 = arith.addf %105, %118 : vector<8x128xf32>
    %120 = arith.mulf %111, %119 : vector<8x128xf32>
    %121 = arith.addf %102, %120 : vector<8x128xf32>
    %122 = math.tanh %121 : vector<8x128xf32>
    %cst_24 = arith.constant 1.000000e+00 : f32
    %123 = vector.broadcast %cst_24 : f32 to vector<8x128xf32>
    %124 = arith.subf %123, %117 : vector<8x128xf32>
    %125 = arith.mulf %124, %122 : vector<8x128xf32>
    %126 = arith.mulf %117, %96 : vector<8x128xf32>
    %127 = arith.addf %125, %126 : vector<8x128xf32>
    %cst_25 = arith.constant 0.000000e+00 : f32
    %128 = vector.shape_cast %12 : vector<8x1xi1> to vector<8x1xi1>
    %129 = vector.broadcast %128 : vector<8x1xi1> to vector<8x128xi1>
    %130 = vector.broadcast %cst_25 : f32 to vector<8x128xf32>
    %131 = arith.select %129, %127, %130 : vector<8x128xi1>, vector<8x128xf32>
    %c1_26 = arith.constant 1 : index
    %c0_27 = arith.constant 0 : index
    %c0_28 = arith.constant 0 : index
    %132 = vector.load %arg6[%c1_26, %c0_27, %c0_28] : memref<16x8x128xf32, #tpu.memory_space<vmem>>, vector<1x8x128xf32>
    %133 = vector.shape_cast %132 : vector<1x8x128xf32> to vector<8x128xf32>
    %134 = vector.shape_cast %131 : vector<8x128xf32> to vector<1x8x128xf32>
    tpu.vector_store %arg6[%c1_26, %c0_27, %c0_28], %134 {strides = array<i32>} : memref<16x8x128xf32, #tpu.memory_space<vmem>>, vector<1x8x128xf32>,
    %135 = vector.shape_cast %12 : vector<8x1xi1> to vector<8x1xi1>
    %136 = vector.broadcast %135 : vector<8x1xi1> to vector<8x128xi1>
    %137 = arith.select %136, %127, %96 : vector<8x128xi1>, vector<8x128xf32>
    %c2 = arith.constant 2 : index
    %c0_29 = arith.constant 0 : index
    %c0_30 = arith.constant 0 : index
    %138 = vector.load %arg3[%c2, %c0_29, %c0_30] : memref<16x8x384xf32, #tpu.memory_space<vmem>>, vector<1x8x384xf32>
    %139 = vector.shape_cast %138 : vector<1x8x384xf32> to vector<8x384xf32>
    %cst_31 = arith.constant dense<0.000000e+00> : vector<8x384xf32>
    %140 = tpu.matmul %137, %3, %cst_31 {dimension_numbers = #tpu.dot_dimension_numbers<[1], [0], [0], [1], [0, 0, 1, 1], [], []>} : vector<8x128xf32>, vector<128x384xf32>, vector<8x384xf32> -> vector<8x384xf32>
    %141 = vector.extract_strided_slice %139 {offsets = [0, 0], sizes = [8, 128], strides = [1, 1]} : vector<8x384xf32> to vector<8x128xf32>
    %142 = vector.extract_strided_slice %139 {offsets = [0, 128], sizes = [8, 128], strides = [1, 1]} : vector<8x384xf32> to vector<8x128xf32>
    %143 = vector.extract_strided_slice %139 {offsets = [0, 256], sizes = [8, 128], strides = [1, 1]} : vector<8x384xf32> to vector<8x128xf32>
    %144 = vector.extract_strided_slice %140 {offsets = [0, 0], sizes = [8, 128], strides = [1, 1]} : vector<8x384xf32> to vector<8x128xf32>
    %145 = vector.extract_strided_slice %140 {offsets = [0, 128], sizes = [8, 128], strides = [1, 1]} : vector<8x384xf32> to vector<8x128xf32>
    %146 = vector.extract_strided_slice %140 {offsets = [0, 256], sizes = [8, 128], strides = [1, 1]} : vector<8x384xf32> to vector<8x128xf32>
    %147 = arith.addf %141, %144 : vector<8x128xf32>
    %148 = arith.negf %147 : vector<8x128xf32>
    %149 = math.exp %148 : vector<8x128xf32>
    %cst_32 = arith.constant 1.000000e+00 : f32
    %150 = vector.broadcast %cst_32 : f32 to vector<8x128xf32>
    %151 = arith.addf %150, %149 : vector<8x128xf32>
    %152 = arith.divf %150, %151 : vector<8x128xf32>
    %153 = arith.addf %142, %145 : vector<8x128xf32>
    %154 = arith.negf %153 : vector<8x128xf32>
    %155 = math.exp %154 : vector<8x128xf32>
    %cst_33 = arith.constant 1.000000e+00 : f32
    %156 = vector.broadcast %cst_33 : f32 to vector<8x128xf32>
    %157 = arith.addf %156, %155 : vector<8x128xf32>
    %158 = arith.divf %156, %157 : vector<8x128xf32>
    %159 = vector.broadcast %4 : vector<1x128xf32> to vector<8x128xf32>
    %160 = arith.addf %146, %159 : vector<8x128xf32>
    %161 = arith.mulf %152, %160 : vector<8x128xf32>
    %162 = arith.addf %143, %161 : vector<8x128xf32>
    %163 = math.tanh %162 : vector<8x128xf32>
    %cst_34 = arith.constant 1.000000e+00 : f32
    %164 = vector.broadcast %cst_34 : f32 to vector<8x128xf32>
    %165 = arith.subf %164, %158 : vector<8x128xf32>
    %166 = arith.mulf %165, %163 : vector<8x128xf32>
    %167 = arith.mulf %158, %137 : vector<8x128xf32>
    %168 = arith.addf %166, %167 : vector<8x128xf32>
    %cst_35 = arith.constant 0.000000e+00 : f32
    %169 = vector.shape_cast %15 : vector<8x1xi1> to vector<8x1xi1>
    %170 = vector.broadcast %169 : vector<8x1xi1> to vector<8x128xi1>
    %171 = vector.broadcast %cst_35 : f32 to vector<8x128xf32>
    %172 = arith.select %170, %168, %171 : vector<8x128xi1>, vector<8x128xf32>
    %c2_36 = arith.constant 2 : index
    %c0_37 = arith.constant 0 : index
    %c0_38 = arith.constant 0 : index
    %173 = vector.load %arg6[%c2_36, %c0_37, %c0_38] : memref<16x8x128xf32, #tpu.memory_space<vmem>>, vector<1x8x128xf32>
    %174 = vector.shape_cast %173 : vector<1x8x128xf32> to vector<8x128xf32>
    %175 = vector.shape_cast %172 : vector<8x128xf32> to vector<1x8x128xf32>
    tpu.vector_store %arg6[%c2_36, %c0_37, %c0_38], %175 {strides = array<i32>} : memref<16x8x128xf32, #tpu.memory_space<vmem>>, vector<1x8x128xf32>,
    %176 = vector.shape_cast %15 : vector<8x1xi1> to vector<8x1xi1>
    %177 = vector.broadcast %176 : vector<8x1xi1> to vector<8x128xi1>
    %178 = arith.select %177, %168, %137 : vector<8x128xi1>, vector<8x128xf32>
    %c3 = arith.constant 3 : index
    %c0_39 = arith.constant 0 : index
    %c0_40 = arith.constant 0 : index
    %179 = vector.load %arg3[%c3, %c0_39, %c0_40] : memref<16x8x384xf32, #tpu.memory_space<vmem>>, vector<1x8x384xf32>
    %180 = vector.shape_cast %179 : vector<1x8x384xf32> to vector<8x384xf32>
    %cst_41 = arith.constant dense<0.000000e+00> : vector<8x384xf32>
    %181 = tpu.matmul %178, %3, %cst_41 {dimension_numbers = #tpu.dot_dimension_numbers<[1], [0], [0], [1], [0, 0, 1, 1], [], []>} : vector<8x128xf32>, vector<128x384xf32>, vector<8x384xf32> -> vector<8x384xf32>
    %182 = vector.extract_strided_slice %180 {offsets = [0, 0], sizes = [8, 128], strides = [1, 1]} : vector<8x384xf32> to vector<8x128xf32>
    %183 = vector.extract_strided_slice %180 {offsets = [0, 128], sizes = [8, 128], strides = [1, 1]} : vector<8x384xf32> to vector<8x128xf32>
    %184 = vector.extract_strided_slice %180 {offsets = [0, 256], sizes = [8, 128], strides = [1, 1]} : vector<8x384xf32> to vector<8x128xf32>
    %185 = vector.extract_strided_slice %181 {offsets = [0, 0], sizes = [8, 128], strides = [1, 1]} : vector<8x384xf32> to vector<8x128xf32>
    %186 = vector.extract_strided_slice %181 {offsets = [0, 128], sizes = [8, 128], strides = [1, 1]} : vector<8x384xf32> to vector<8x128xf32>
    %187 = vector.extract_strided_slice %181 {offsets = [0, 256], sizes = [8, 128], strides = [1, 1]} : vector<8x384xf32> to vector<8x128xf32>
    %188 = arith.addf %182, %185 : vector<8x128xf32>
    %189 = arith.negf %188 : vector<8x128xf32>
    %190 = math.exp %189 : vector<8x128xf32>
    %cst_42 = arith.constant 1.000000e+00 : f32
    %191 = vector.broadcast %cst_42 : f32 to vector<8x128xf32>
    %192 = arith.addf %191, %190 : vector<8x128xf32>
    %193 = arith.divf %191, %192 : vector<8x128xf32>
    %194 = arith.addf %183, %186 : vector<8x128xf32>
    %195 = arith.negf %194 : vector<8x128xf32>
    %196 = math.exp %195 : vector<8x128xf32>
    %cst_43 = arith.constant 1.000000e+00 : f32
    %197 = vector.broadcast %cst_43 : f32 to vector<8x128xf32>
    %198 = arith.addf %197, %196 : vector<8x128xf32>
    %199 = arith.divf %197, %198 : vector<8x128xf32>
    %200 = vector.broadcast %4 : vector<1x128xf32> to vector<8x128xf32>
    %201 = arith.addf %187, %200 : vector<8x128xf32>
    %202 = arith.mulf %193, %201 : vector<8x128xf32>
    %203 = arith.addf %184, %202 : vector<8x128xf32>
    %204 = math.tanh %203 : vector<8x128xf32>
    %cst_44 = arith.constant 1.000000e+00 : f32
    %205 = vector.broadcast %cst_44 : f32 to vector<8x128xf32>
    %206 = arith.subf %205, %199 : vector<8x128xf32>
    %207 = arith.mulf %206, %204 : vector<8x128xf32>
    %208 = arith.mulf %199, %178 : vector<8x128xf32>
    %209 = arith.addf %207, %208 : vector<8x128xf32>
    %cst_45 = arith.constant 0.000000e+00 : f32
    %210 = vector.shape_cast %18 : vector<8x1xi1> to vector<8x1xi1>
    %211 = vector.broadcast %210 : vector<8x1xi1> to vector<8x128xi1>
    %212 = vector.broadcast %cst_45 : f32 to vector<8x128xf32>
    %213 = arith.select %211, %209, %212 : vector<8x128xi1>, vector<8x128xf32>
    %c3_46 = arith.constant 3 : index
    %c0_47 = arith.constant 0 : index
    %c0_48 = arith.constant 0 : index
    %214 = vector.load %arg6[%c3_46, %c0_47, %c0_48] : memref<16x8x128xf32, #tpu.memory_space<vmem>>, vector<1x8x128xf32>
    %215 = vector.shape_cast %214 : vector<1x8x128xf32> to vector<8x128xf32>
    %216 = vector.shape_cast %213 : vector<8x128xf32> to vector<1x8x128xf32>
    tpu.vector_store %arg6[%c3_46, %c0_47, %c0_48], %216 {strides = array<i32>} : memref<16x8x128xf32, #tpu.memory_space<vmem>>, vector<1x8x128xf32>,
    %217 = vector.shape_cast %18 : vector<8x1xi1> to vector<8x1xi1>
    %218 = vector.broadcast %217 : vector<8x1xi1> to vector<8x128xi1>
    %219 = arith.select %218, %209, %178 : vector<8x128xi1>, vector<8x128xf32>
    %c4 = arith.constant 4 : index
    %c0_49 = arith.constant 0 : index
    %c0_50 = arith.constant 0 : index
    %220 = vector.load %arg3[%c4, %c0_49, %c0_50] : memref<16x8x384xf32, #tpu.memory_space<vmem>>, vector<1x8x384xf32>
    %221 = vector.shape_cast %220 : vector<1x8x384xf32> to vector<8x384xf32>
    %cst_51 = arith.constant dense<0.000000e+00> : vector<8x384xf32>
    %222 = tpu.matmul %219, %3, %cst_51 {dimension_numbers = #tpu.dot_dimension_numbers<[1], [0], [0], [1], [0, 0, 1, 1], [], []>} : vector<8x128xf32>, vector<128x384xf32>, vector<8x384xf32> -> vector<8x384xf32>
    %223 = vector.extract_strided_slice %221 {offsets = [0, 0], sizes = [8, 128], strides = [1, 1]} : vector<8x384xf32> to vector<8x128xf32>
    %224 = vector.extract_strided_slice %221 {offsets = [0, 128], sizes = [8, 128], strides = [1, 1]} : vector<8x384xf32> to vector<8x128xf32>
    %225 = vector.extract_strided_slice %221 {offsets = [0, 256], sizes = [8, 128], strides = [1, 1]} : vector<8x384xf32> to vector<8x128xf32>
    %226 = vector.extract_strided_slice %222 {offsets = [0, 0], sizes = [8, 128], strides = [1, 1]} : vector<8x384xf32> to vector<8x128xf32>
    %227 = vector.extract_strided_slice %222 {offsets = [0, 128], sizes = [8, 128], strides = [1, 1]} : vector<8x384xf32> to vector<8x128xf32>
    %228 = vector.extract_strided_slice %222 {offsets = [0, 256], sizes = [8, 128], strides = [1, 1]} : vector<8x384xf32> to vector<8x128xf32>
    %229 = arith.addf %223, %226 : vector<8x128xf32>
    %230 = arith.negf %229 : vector<8x128xf32>
    %231 = math.exp %230 : vector<8x128xf32>
    %cst_52 = arith.constant 1.000000e+00 : f32
    %232 = vector.broadcast %cst_52 : f32 to vector<8x128xf32>
    %233 = arith.addf %232, %231 : vector<8x128xf32>
    %234 = arith.divf %232, %233 : vector<8x128xf32>
    %235 = arith.addf %224, %227 : vector<8x128xf32>
    %236 = arith.negf %235 : vector<8x128xf32>
    %237 = math.exp %236 : vector<8x128xf32>
    %cst_53 = arith.constant 1.000000e+00 : f32
    %238 = vector.broadcast %cst_53 : f32 to vector<8x128xf32>
    %239 = arith.addf %238, %237 : vector<8x128xf32>
    %240 = arith.divf %238, %239 : vector<8x128xf32>
    %241 = vector.broadcast %4 : vector<1x128xf32> to vector<8x128xf32>
    %242 = arith.addf %228, %241 : vector<8x128xf32>
    %243 = arith.mulf %234, %242 : vector<8x128xf32>
    %244 = arith.addf %225, %243 : vector<8x128xf32>
    %245 = math.tanh %244 : vector<8x128xf32>
    %cst_54 = arith.constant 1.000000e+00 : f32
    %246 = vector.broadcast %cst_54 : f32 to vector<8x128xf32>
    %247 = arith.subf %246, %240 : vector<8x128xf32>
    %248 = arith.mulf %247, %245 : vector<8x128xf32>
    %249 = arith.mulf %240, %219 : vector<8x128xf32>
    %250 = arith.addf %248, %249 : vector<8x128xf32>
    %cst_55 = arith.constant 0.000000e+00 : f32
    %251 = vector.shape_cast %21 : vector<8x1xi1> to vector<8x1xi1>
    %252 = vector.broadcast %251 : vector<8x1xi1> to vector<8x128xi1>
    %253 = vector.broadcast %cst_55 : f32 to vector<8x128xf32>
    %254 = arith.select %252, %250, %253 : vector<8x128xi1>, vector<8x128xf32>
    %c4_56 = arith.constant 4 : index
    %c0_57 = arith.constant 0 : index
    %c0_58 = arith.constant 0 : index
    %255 = vector.load %arg6[%c4_56, %c0_57, %c0_58] : memref<16x8x128xf32, #tpu.memory_space<vmem>>, vector<1x8x128xf32>
    %256 = vector.shape_cast %255 : vector<1x8x128xf32> to vector<8x128xf32>
    %257 = vector.shape_cast %254 : vector<8x128xf32> to vector<1x8x128xf32>
    tpu.vector_store %arg6[%c4_56, %c0_57, %c0_58], %257 {strides = array<i32>} : memref<16x8x128xf32, #tpu.memory_space<vmem>>, vector<1x8x128xf32>,
    %258 = vector.shape_cast %21 : vector<8x1xi1> to vector<8x1xi1>
    %259 = vector.broadcast %258 : vector<8x1xi1> to vector<8x128xi1>
    %260 = arith.select %259, %250, %219 : vector<8x128xi1>, vector<8x128xf32>
    %c5 = arith.constant 5 : index
    %c0_59 = arith.constant 0 : index
    %c0_60 = arith.constant 0 : index
    %261 = vector.load %arg3[%c5, %c0_59, %c0_60] : memref<16x8x384xf32, #tpu.memory_space<vmem>>, vector<1x8x384xf32>
    %262 = vector.shape_cast %261 : vector<1x8x384xf32> to vector<8x384xf32>
    %cst_61 = arith.constant dense<0.000000e+00> : vector<8x384xf32>
    %263 = tpu.matmul %260, %3, %cst_61 {dimension_numbers = #tpu.dot_dimension_numbers<[1], [0], [0], [1], [0, 0, 1, 1], [], []>} : vector<8x128xf32>, vector<128x384xf32>, vector<8x384xf32> -> vector<8x384xf32>
    %264 = vector.extract_strided_slice %262 {offsets = [0, 0], sizes = [8, 128], strides = [1, 1]} : vector<8x384xf32> to vector<8x128xf32>
    %265 = vector.extract_strided_slice %262 {offsets = [0, 128], sizes = [8, 128], strides = [1, 1]} : vector<8x384xf32> to vector<8x128xf32>
    %266 = vector.extract_strided_slice %262 {offsets = [0, 256], sizes = [8, 128], strides = [1, 1]} : vector<8x384xf32> to vector<8x128xf32>
    %267 = vector.extract_strided_slice %263 {offsets = [0, 0], sizes = [8, 128], strides = [1, 1]} : vector<8x384xf32> to vector<8x128xf32>
    %268 = vector.extract_strided_slice %263 {offsets = [0, 128], sizes = [8, 128], strides = [1, 1]} : vector<8x384xf32> to vector<8x128xf32>
    %269 = vector.extract_strided_slice %263 {offsets = [0, 256], sizes = [8, 128], strides = [1, 1]} : vector<8x384xf32> to vector<8x128xf32>
    %270 = arith.addf %264, %267 : vector<8x128xf32>
    %271 = arith.negf %270 : vector<8x128xf32>
    %272 = math.exp %271 : vector<8x128xf32>
    %cst_62 = arith.constant 1.000000e+00 : f32
    %273 = vector.broadcast %cst_62 : f32 to vector<8x128xf32>
    %274 = arith.addf %273, %272 : vector<8x128xf32>
    %275 = arith.divf %273, %274 : vector<8x128xf32>
    %276 = arith.addf %265, %268 : vector<8x128xf32>
    %277 = arith.negf %276 : vector<8x128xf32>
    %278 = math.exp %277 : vector<8x128xf32>
    %cst_63 = arith.constant 1.000000e+00 : f32
    %279 = vector.broadcast %cst_63 : f32 to vector<8x128xf32>
    %280 = arith.addf %279, %278 : vector<8x128xf32>
    %281 = arith.divf %279, %280 : vector<8x128xf32>
    %282 = vector.broadcast %4 : vector<1x128xf32> to vector<8x128xf32>
    %283 = arith.addf %269, %282 : vector<8x128xf32>
    %284 = arith.mulf %275, %283 : vector<8x128xf32>
    %285 = arith.addf %266, %284 : vector<8x128xf32>
    %286 = math.tanh %285 : vector<8x128xf32>
    %cst_64 = arith.constant 1.000000e+00 : f32
    %287 = vector.broadcast %cst_64 : f32 to vector<8x128xf32>
    %288 = arith.subf %287, %281 : vector<8x128xf32>
    %289 = arith.mulf %288, %286 : vector<8x128xf32>
    %290 = arith.mulf %281, %260 : vector<8x128xf32>
    %291 = arith.addf %289, %290 : vector<8x128xf32>
    %cst_65 = arith.constant 0.000000e+00 : f32
    %292 = vector.shape_cast %24 : vector<8x1xi1> to vector<8x1xi1>
    %293 = vector.broadcast %292 : vector<8x1xi1> to vector<8x128xi1>
    %294 = vector.broadcast %cst_65 : f32 to vector<8x128xf32>
    %295 = arith.select %293, %291, %294 : vector<8x128xi1>, vector<8x128xf32>
    %c5_66 = arith.constant 5 : index
    %c0_67 = arith.constant 0 : index
    %c0_68 = arith.constant 0 : index
    %296 = vector.load %arg6[%c5_66, %c0_67, %c0_68] : memref<16x8x128xf32, #tpu.memory_space<vmem>>, vector<1x8x128xf32>
    %297 = vector.shape_cast %296 : vector<1x8x128xf32> to vector<8x128xf32>
    %298 = vector.shape_cast %295 : vector<8x128xf32> to vector<1x8x128xf32>
    tpu.vector_store %arg6[%c5_66, %c0_67, %c0_68], %298 {strides = array<i32>} : memref<16x8x128xf32, #tpu.memory_space<vmem>>, vector<1x8x128xf32>,
    %299 = vector.shape_cast %24 : vector<8x1xi1> to vector<8x1xi1>
    %300 = vector.broadcast %299 : vector<8x1xi1> to vector<8x128xi1>
    %301 = arith.select %300, %291, %260 : vector<8x128xi1>, vector<8x128xf32>
    %c6 = arith.constant 6 : index
    %c0_69 = arith.constant 0 : index
    %c0_70 = arith.constant 0 : index
    %302 = vector.load %arg3[%c6, %c0_69, %c0_70] : memref<16x8x384xf32, #tpu.memory_space<vmem>>, vector<1x8x384xf32>
    %303 = vector.shape_cast %302 : vector<1x8x384xf32> to vector<8x384xf32>
    %cst_71 = arith.constant dense<0.000000e+00> : vector<8x384xf32>
    %304 = tpu.matmul %301, %3, %cst_71 {dimension_numbers = #tpu.dot_dimension_numbers<[1], [0], [0], [1], [0, 0, 1, 1], [], []>} : vector<8x128xf32>, vector<128x384xf32>, vector<8x384xf32> -> vector<8x384xf32>
    %305 = vector.extract_strided_slice %303 {offsets = [0, 0], sizes = [8, 128], strides = [1, 1]} : vector<8x384xf32> to vector<8x128xf32>
    %306 = vector.extract_strided_slice %303 {offsets = [0, 128], sizes = [8, 128], strides = [1, 1]} : vector<8x384xf32> to vector<8x128xf32>
    %307 = vector.extract_strided_slice %303 {offsets = [0, 256], sizes = [8, 128], strides = [1, 1]} : vector<8x384xf32> to vector<8x128xf32>
    %308 = vector.extract_strided_slice %304 {offsets = [0, 0], sizes = [8, 128], strides = [1, 1]} : vector<8x384xf32> to vector<8x128xf32>
    %309 = vector.extract_strided_slice %304 {offsets = [0, 128], sizes = [8, 128], strides = [1, 1]} : vector<8x384xf32> to vector<8x128xf32>
    %310 = vector.extract_strided_slice %304 {offsets = [0, 256], sizes = [8, 128], strides = [1, 1]} : vector<8x384xf32> to vector<8x128xf32>
    %311 = arith.addf %305, %308 : vector<8x128xf32>
    %312 = arith.negf %311 : vector<8x128xf32>
    %313 = math.exp %312 : vector<8x128xf32>
    %cst_72 = arith.constant 1.000000e+00 : f32
    %314 = vector.broadcast %cst_72 : f32 to vector<8x128xf32>
    %315 = arith.addf %314, %313 : vector<8x128xf32>
    %316 = arith.divf %314, %315 : vector<8x128xf32>
    %317 = arith.addf %306, %309 : vector<8x128xf32>
    %318 = arith.negf %317 : vector<8x128xf32>
    %319 = math.exp %318 : vector<8x128xf32>
    %cst_73 = arith.constant 1.000000e+00 : f32
    %320 = vector.broadcast %cst_73 : f32 to vector<8x128xf32>
    %321 = arith.addf %320, %319 : vector<8x128xf32>
    %322 = arith.divf %320, %321 : vector<8x128xf32>
    %323 = vector.broadcast %4 : vector<1x128xf32> to vector<8x128xf32>
    %324 = arith.addf %310, %323 : vector<8x128xf32>
    %325 = arith.mulf %316, %324 : vector<8x128xf32>
    %326 = arith.addf %307, %325 : vector<8x128xf32>
    %327 = math.tanh %326 : vector<8x128xf32>
    %cst_74 = arith.constant 1.000000e+00 : f32
    %328 = vector.broadcast %cst_74 : f32 to vector<8x128xf32>
    %329 = arith.subf %328, %322 : vector<8x128xf32>
    %330 = arith.mulf %329, %327 : vector<8x128xf32>
    %331 = arith.mulf %322, %301 : vector<8x128xf32>
    %332 = arith.addf %330, %331 : vector<8x128xf32>
    %cst_75 = arith.constant 0.000000e+00 : f32
    %333 = vector.shape_cast %27 : vector<8x1xi1> to vector<8x1xi1>
    %334 = vector.broadcast %333 : vector<8x1xi1> to vector<8x128xi1>
    %335 = vector.broadcast %cst_75 : f32 to vector<8x128xf32>
    %336 = arith.select %334, %332, %335 : vector<8x128xi1>, vector<8x128xf32>
    %c6_76 = arith.constant 6 : index
    %c0_77 = arith.constant 0 : index
    %c0_78 = arith.constant 0 : index
    %337 = vector.load %arg6[%c6_76, %c0_77, %c0_78] : memref<16x8x128xf32, #tpu.memory_space<vmem>>, vector<1x8x128xf32>
    %338 = vector.shape_cast %337 : vector<1x8x128xf32> to vector<8x128xf32>
    %339 = vector.shape_cast %336 : vector<8x128xf32> to vector<1x8x128xf32>
    tpu.vector_store %arg6[%c6_76, %c0_77, %c0_78], %339 {strides = array<i32>} : memref<16x8x128xf32, #tpu.memory_space<vmem>>, vector<1x8x128xf32>,
    %340 = vector.shape_cast %27 : vector<8x1xi1> to vector<8x1xi1>
    %341 = vector.broadcast %340 : vector<8x1xi1> to vector<8x128xi1>
    %342 = arith.select %341, %332, %301 : vector<8x128xi1>, vector<8x128xf32>
    %c7 = arith.constant 7 : index
    %c0_79 = arith.constant 0 : index
    %c0_80 = arith.constant 0 : index
    %343 = vector.load %arg3[%c7, %c0_79, %c0_80] : memref<16x8x384xf32, #tpu.memory_space<vmem>>, vector<1x8x384xf32>
    %344 = vector.shape_cast %343 : vector<1x8x384xf32> to vector<8x384xf32>
    %cst_81 = arith.constant dense<0.000000e+00> : vector<8x384xf32>
    %345 = tpu.matmul %342, %3, %cst_81 {dimension_numbers = #tpu.dot_dimension_numbers<[1], [0], [0], [1], [0, 0, 1, 1], [], []>} : vector<8x128xf32>, vector<128x384xf32>, vector<8x384xf32> -> vector<8x384xf32>
    %346 = vector.extract_strided_slice %344 {offsets = [0, 0], sizes = [8, 128], strides = [1, 1]} : vector<8x384xf32> to vector<8x128xf32>
    %347 = vector.extract_strided_slice %344 {offsets = [0, 128], sizes = [8, 128], strides = [1, 1]} : vector<8x384xf32> to vector<8x128xf32>
    %348 = vector.extract_strided_slice %344 {offsets = [0, 256], sizes = [8, 128], strides = [1, 1]} : vector<8x384xf32> to vector<8x128xf32>
    %349 = vector.extract_strided_slice %345 {offsets = [0, 0], sizes = [8, 128], strides = [1, 1]} : vector<8x384xf32> to vector<8x128xf32>
    %350 = vector.extract_strided_slice %345 {offsets = [0, 128], sizes = [8, 128], strides = [1, 1]} : vector<8x384xf32> to vector<8x128xf32>
    %351 = vector.extract_strided_slice %345 {offsets = [0, 256], sizes = [8, 128], strides = [1, 1]} : vector<8x384xf32> to vector<8x128xf32>
    %352 = arith.addf %346, %349 : vector<8x128xf32>
    %353 = arith.negf %352 : vector<8x128xf32>
    %354 = math.exp %353 : vector<8x128xf32>
    %cst_82 = arith.constant 1.000000e+00 : f32
    %355 = vector.broadcast %cst_82 : f32 to vector<8x128xf32>
    %356 = arith.addf %355, %354 : vector<8x128xf32>
    %357 = arith.divf %355, %356 : vector<8x128xf32>
    %358 = arith.addf %347, %350 : vector<8x128xf32>
    %359 = arith.negf %358 : vector<8x128xf32>
    %360 = math.exp %359 : vector<8x128xf32>
    %cst_83 = arith.constant 1.000000e+00 : f32
    %361 = vector.broadcast %cst_83 : f32 to vector<8x128xf32>
    %362 = arith.addf %361, %360 : vector<8x128xf32>
    %363 = arith.divf %361, %362 : vector<8x128xf32>
    %364 = vector.broadcast %4 : vector<1x128xf32> to vector<8x128xf32>
    %365 = arith.addf %351, %364 : vector<8x128xf32>
    %366 = arith.mulf %357, %365 : vector<8x128xf32>
    %367 = arith.addf %348, %366 : vector<8x128xf32>
    %368 = math.tanh %367 : vector<8x128xf32>
    %cst_84 = arith.constant 1.000000e+00 : f32
    %369 = vector.broadcast %cst_84 : f32 to vector<8x128xf32>
    %370 = arith.subf %369, %363 : vector<8x128xf32>
    %371 = arith.mulf %370, %368 : vector<8x128xf32>
    %372 = arith.mulf %363, %342 : vector<8x128xf32>
    %373 = arith.addf %371, %372 : vector<8x128xf32>
    %cst_85 = arith.constant 0.000000e+00 : f32
    %374 = vector.shape_cast %30 : vector<8x1xi1> to vector<8x1xi1>
    %375 = vector.broadcast %374 : vector<8x1xi1> to vector<8x128xi1>
    %376 = vector.broadcast %cst_85 : f32 to vector<8x128xf32>
    %377 = arith.select %375, %373, %376 : vector<8x128xi1>, vector<8x128xf32>
    %c7_86 = arith.constant 7 : index
    %c0_87 = arith.constant 0 : index
    %c0_88 = arith.constant 0 : index
    %378 = vector.load %arg6[%c7_86, %c0_87, %c0_88] : memref<16x8x128xf32, #tpu.memory_space<vmem>>, vector<1x8x128xf32>
    %379 = vector.shape_cast %378 : vector<1x8x128xf32> to vector<8x128xf32>
    %380 = vector.shape_cast %377 : vector<8x128xf32> to vector<1x8x128xf32>
    tpu.vector_store %arg6[%c7_86, %c0_87, %c0_88], %380 {strides = array<i32>} : memref<16x8x128xf32, #tpu.memory_space<vmem>>, vector<1x8x128xf32>,
    %381 = vector.shape_cast %30 : vector<8x1xi1> to vector<8x1xi1>
    %382 = vector.broadcast %381 : vector<8x1xi1> to vector<8x128xi1>
    %383 = arith.select %382, %373, %342 : vector<8x128xi1>, vector<8x128xf32>
    %c8 = arith.constant 8 : index
    %c0_89 = arith.constant 0 : index
    %c0_90 = arith.constant 0 : index
    %384 = vector.load %arg3[%c8, %c0_89, %c0_90] : memref<16x8x384xf32, #tpu.memory_space<vmem>>, vector<1x8x384xf32>
    %385 = vector.shape_cast %384 : vector<1x8x384xf32> to vector<8x384xf32>
    %cst_91 = arith.constant dense<0.000000e+00> : vector<8x384xf32>
    %386 = tpu.matmul %383, %3, %cst_91 {dimension_numbers = #tpu.dot_dimension_numbers<[1], [0], [0], [1], [0, 0, 1, 1], [], []>} : vector<8x128xf32>, vector<128x384xf32>, vector<8x384xf32> -> vector<8x384xf32>
    %387 = vector.extract_strided_slice %385 {offsets = [0, 0], sizes = [8, 128], strides = [1, 1]} : vector<8x384xf32> to vector<8x128xf32>
    %388 = vector.extract_strided_slice %385 {offsets = [0, 128], sizes = [8, 128], strides = [1, 1]} : vector<8x384xf32> to vector<8x128xf32>
    %389 = vector.extract_strided_slice %385 {offsets = [0, 256], sizes = [8, 128], strides = [1, 1]} : vector<8x384xf32> to vector<8x128xf32>
    %390 = vector.extract_strided_slice %386 {offsets = [0, 0], sizes = [8, 128], strides = [1, 1]} : vector<8x384xf32> to vector<8x128xf32>
    %391 = vector.extract_strided_slice %386 {offsets = [0, 128], sizes = [8, 128], strides = [1, 1]} : vector<8x384xf32> to vector<8x128xf32>
    %392 = vector.extract_strided_slice %386 {offsets = [0, 256], sizes = [8, 128], strides = [1, 1]} : vector<8x384xf32> to vector<8x128xf32>
    %393 = arith.addf %387, %390 : vector<8x128xf32>
    %394 = arith.negf %393 : vector<8x128xf32>
    %395 = math.exp %394 : vector<8x128xf32>
    %cst_92 = arith.constant 1.000000e+00 : f32
    %396 = vector.broadcast %cst_92 : f32 to vector<8x128xf32>
    %397 = arith.addf %396, %395 : vector<8x128xf32>
    %398 = arith.divf %396, %397 : vector<8x128xf32>
    %399 = arith.addf %388, %391 : vector<8x128xf32>
    %400 = arith.negf %399 : vector<8x128xf32>
    %401 = math.exp %400 : vector<8x128xf32>
    %cst_93 = arith.constant 1.000000e+00 : f32
    %402 = vector.broadcast %cst_93 : f32 to vector<8x128xf32>
    %403 = arith.addf %402, %401 : vector<8x128xf32>
    %404 = arith.divf %402, %403 : vector<8x128xf32>
    %405 = vector.broadcast %4 : vector<1x128xf32> to vector<8x128xf32>
    %406 = arith.addf %392, %405 : vector<8x128xf32>
    %407 = arith.mulf %398, %406 : vector<8x128xf32>
    %408 = arith.addf %389, %407 : vector<8x128xf32>
    %409 = math.tanh %408 : vector<8x128xf32>
    %cst_94 = arith.constant 1.000000e+00 : f32
    %410 = vector.broadcast %cst_94 : f32 to vector<8x128xf32>
    %411 = arith.subf %410, %404 : vector<8x128xf32>
    %412 = arith.mulf %411, %409 : vector<8x128xf32>
    %413 = arith.mulf %404, %383 : vector<8x128xf32>
    %414 = arith.addf %412, %413 : vector<8x128xf32>
    %cst_95 = arith.constant 0.000000e+00 : f32
    %415 = vector.shape_cast %33 : vector<8x1xi1> to vector<8x1xi1>
    %416 = vector.broadcast %415 : vector<8x1xi1> to vector<8x128xi1>
    %417 = vector.broadcast %cst_95 : f32 to vector<8x128xf32>
    %418 = arith.select %416, %414, %417 : vector<8x128xi1>, vector<8x128xf32>
    %c8_96 = arith.constant 8 : index
    %c0_97 = arith.constant 0 : index
    %c0_98 = arith.constant 0 : index
    %419 = vector.load %arg6[%c8_96, %c0_97, %c0_98] : memref<16x8x128xf32, #tpu.memory_space<vmem>>, vector<1x8x128xf32>
    %420 = vector.shape_cast %419 : vector<1x8x128xf32> to vector<8x128xf32>
    %421 = vector.shape_cast %418 : vector<8x128xf32> to vector<1x8x128xf32>
    tpu.vector_store %arg6[%c8_96, %c0_97, %c0_98], %421 {strides = array<i32>} : memref<16x8x128xf32, #tpu.memory_space<vmem>>, vector<1x8x128xf32>,
    %422 = vector.shape_cast %33 : vector<8x1xi1> to vector<8x1xi1>
    %423 = vector.broadcast %422 : vector<8x1xi1> to vector<8x128xi1>
    %424 = arith.select %423, %414, %383 : vector<8x128xi1>, vector<8x128xf32>
    %c9 = arith.constant 9 : index
    %c0_99 = arith.constant 0 : index
    %c0_100 = arith.constant 0 : index
    %425 = vector.load %arg3[%c9, %c0_99, %c0_100] : memref<16x8x384xf32, #tpu.memory_space<vmem>>, vector<1x8x384xf32>
    %426 = vector.shape_cast %425 : vector<1x8x384xf32> to vector<8x384xf32>
    %cst_101 = arith.constant dense<0.000000e+00> : vector<8x384xf32>
    %427 = tpu.matmul %424, %3, %cst_101 {dimension_numbers = #tpu.dot_dimension_numbers<[1], [0], [0], [1], [0, 0, 1, 1], [], []>} : vector<8x128xf32>, vector<128x384xf32>, vector<8x384xf32> -> vector<8x384xf32>
    %428 = vector.extract_strided_slice %426 {offsets = [0, 0], sizes = [8, 128], strides = [1, 1]} : vector<8x384xf32> to vector<8x128xf32>
    %429 = vector.extract_strided_slice %426 {offsets = [0, 128], sizes = [8, 128], strides = [1, 1]} : vector<8x384xf32> to vector<8x128xf32>
    %430 = vector.extract_strided_slice %426 {offsets = [0, 256], sizes = [8, 128], strides = [1, 1]} : vector<8x384xf32> to vector<8x128xf32>
    %431 = vector.extract_strided_slice %427 {offsets = [0, 0], sizes = [8, 128], strides = [1, 1]} : vector<8x384xf32> to vector<8x128xf32>
    %432 = vector.extract_strided_slice %427 {offsets = [0, 128], sizes = [8, 128], strides = [1, 1]} : vector<8x384xf32> to vector<8x128xf32>
    %433 = vector.extract_strided_slice %427 {offsets = [0, 256], sizes = [8, 128], strides = [1, 1]} : vector<8x384xf32> to vector<8x128xf32>
    %434 = arith.addf %428, %431 : vector<8x128xf32>
    %435 = arith.negf %434 : vector<8x128xf32>
    %436 = math.exp %435 : vector<8x128xf32>
    %cst_102 = arith.constant 1.000000e+00 : f32
    %437 = vector.broadcast %cst_102 : f32 to vector<8x128xf32>
    %438 = arith.addf %437, %436 : vector<8x128xf32>
    %439 = arith.divf %437, %438 : vector<8x128xf32>
    %440 = arith.addf %429, %432 : vector<8x128xf32>
    %441 = arith.negf %440 : vector<8x128xf32>
    %442 = math.exp %441 : vector<8x128xf32>
    %cst_103 = arith.constant 1.000000e+00 : f32
    %443 = vector.broadcast %cst_103 : f32 to vector<8x128xf32>
    %444 = arith.addf %443, %442 : vector<8x128xf32>
    %445 = arith.divf %443, %444 : vector<8x128xf32>
    %446 = vector.broadcast %4 : vector<1x128xf32> to vector<8x128xf32>
    %447 = arith.addf %433, %446 : vector<8x128xf32>
    %448 = arith.mulf %439, %447 : vector<8x128xf32>
    %449 = arith.addf %430, %448 : vector<8x128xf32>
    %450 = math.tanh %449 : vector<8x128xf32>
    %cst_104 = arith.constant 1.000000e+00 : f32
    %451 = vector.broadcast %cst_104 : f32 to vector<8x128xf32>
    %452 = arith.subf %451, %445 : vector<8x128xf32>
    %453 = arith.mulf %452, %450 : vector<8x128xf32>
    %454 = arith.mulf %445, %424 : vector<8x128xf32>
    %455 = arith.addf %453, %454 : vector<8x128xf32>
    %cst_105 = arith.constant 0.000000e+00 : f32
    %456 = vector.shape_cast %36 : vector<8x1xi1> to vector<8x1xi1>
    %457 = vector.broadcast %456 : vector<8x1xi1> to vector<8x128xi1>
    %458 = vector.broadcast %cst_105 : f32 to vector<8x128xf32>
    %459 = arith.select %457, %455, %458 : vector<8x128xi1>, vector<8x128xf32>
    %c9_106 = arith.constant 9 : index
    %c0_107 = arith.constant 0 : index
    %c0_108 = arith.constant 0 : index
    %460 = vector.load %arg6[%c9_106, %c0_107, %c0_108] : memref<16x8x128xf32, #tpu.memory_space<vmem>>, vector<1x8x128xf32>
    %461 = vector.shape_cast %460 : vector<1x8x128xf32> to vector<8x128xf32>
    %462 = vector.shape_cast %459 : vector<8x128xf32> to vector<1x8x128xf32>
    tpu.vector_store %arg6[%c9_106, %c0_107, %c0_108], %462 {strides = array<i32>} : memref<16x8x128xf32, #tpu.memory_space<vmem>>, vector<1x8x128xf32>,
    %463 = vector.shape_cast %36 : vector<8x1xi1> to vector<8x1xi1>
    %464 = vector.broadcast %463 : vector<8x1xi1> to vector<8x128xi1>
    %465 = arith.select %464, %455, %424 : vector<8x128xi1>, vector<8x128xf32>
    %c10 = arith.constant 10 : index
    %c0_109 = arith.constant 0 : index
    %c0_110 = arith.constant 0 : index
    %466 = vector.load %arg3[%c10, %c0_109, %c0_110] : memref<16x8x384xf32, #tpu.memory_space<vmem>>, vector<1x8x384xf32>
    %467 = vector.shape_cast %466 : vector<1x8x384xf32> to vector<8x384xf32>
    %cst_111 = arith.constant dense<0.000000e+00> : vector<8x384xf32>
    %468 = tpu.matmul %465, %3, %cst_111 {dimension_numbers = #tpu.dot_dimension_numbers<[1], [0], [0], [1], [0, 0, 1, 1], [], []>} : vector<8x128xf32>, vector<128x384xf32>, vector<8x384xf32> -> vector<8x384xf32>
    %469 = vector.extract_strided_slice %467 {offsets = [0, 0], sizes = [8, 128], strides = [1, 1]} : vector<8x384xf32> to vector<8x128xf32>
    %470 = vector.extract_strided_slice %467 {offsets = [0, 128], sizes = [8, 128], strides = [1, 1]} : vector<8x384xf32> to vector<8x128xf32>
    %471 = vector.extract_strided_slice %467 {offsets = [0, 256], sizes = [8, 128], strides = [1, 1]} : vector<8x384xf32> to vector<8x128xf32>
    %472 = vector.extract_strided_slice %468 {offsets = [0, 0], sizes = [8, 128], strides = [1, 1]} : vector<8x384xf32> to vector<8x128xf32>
    %473 = vector.extract_strided_slice %468 {offsets = [0, 128], sizes = [8, 128], strides = [1, 1]} : vector<8x384xf32> to vector<8x128xf32>
    %474 = vector.extract_strided_slice %468 {offsets = [0, 256], sizes = [8, 128], strides = [1, 1]} : vector<8x384xf32> to vector<8x128xf32>
    %475 = arith.addf %469, %472 : vector<8x128xf32>
    %476 = arith.negf %475 : vector<8x128xf32>
    %477 = math.exp %476 : vector<8x128xf32>
    %cst_112 = arith.constant 1.000000e+00 : f32
    %478 = vector.broadcast %cst_112 : f32 to vector<8x128xf32>
    %479 = arith.addf %478, %477 : vector<8x128xf32>
    %480 = arith.divf %478, %479 : vector<8x128xf32>
    %481 = arith.addf %470, %473 : vector<8x128xf32>
    %482 = arith.negf %481 : vector<8x128xf32>
    %483 = math.exp %482 : vector<8x128xf32>
    %cst_113 = arith.constant 1.000000e+00 : f32
    %484 = vector.broadcast %cst_113 : f32 to vector<8x128xf32>
    %485 = arith.addf %484, %483 : vector<8x128xf32>
    %486 = arith.divf %484, %485 : vector<8x128xf32>
    %487 = vector.broadcast %4 : vector<1x128xf32> to vector<8x128xf32>
    %488 = arith.addf %474, %487 : vector<8x128xf32>
    %489 = arith.mulf %480, %488 : vector<8x128xf32>
    %490 = arith.addf %471, %489 : vector<8x128xf32>
    %491 = math.tanh %490 : vector<8x128xf32>
    %cst_114 = arith.constant 1.000000e+00 : f32
    %492 = vector.broadcast %cst_114 : f32 to vector<8x128xf32>
    %493 = arith.subf %492, %486 : vector<8x128xf32>
    %494 = arith.mulf %493, %491 : vector<8x128xf32>
    %495 = arith.mulf %486, %465 : vector<8x128xf32>
    %496 = arith.addf %494, %495 : vector<8x128xf32>
    %cst_115 = arith.constant 0.000000e+00 : f32
    %497 = vector.shape_cast %39 : vector<8x1xi1> to vector<8x1xi1>
    %498 = vector.broadcast %497 : vector<8x1xi1> to vector<8x128xi1>
    %499 = vector.broadcast %cst_115 : f32 to vector<8x128xf32>
    %500 = arith.select %498, %496, %499 : vector<8x128xi1>, vector<8x128xf32>
    %c10_116 = arith.constant 10 : index
    %c0_117 = arith.constant 0 : index
    %c0_118 = arith.constant 0 : index
    %501 = vector.load %arg6[%c10_116, %c0_117, %c0_118] : memref<16x8x128xf32, #tpu.memory_space<vmem>>, vector<1x8x128xf32>
    %502 = vector.shape_cast %501 : vector<1x8x128xf32> to vector<8x128xf32>
    %503 = vector.shape_cast %500 : vector<8x128xf32> to vector<1x8x128xf32>
    tpu.vector_store %arg6[%c10_116, %c0_117, %c0_118], %503 {strides = array<i32>} : memref<16x8x128xf32, #tpu.memory_space<vmem>>, vector<1x8x128xf32>,
    %504 = vector.shape_cast %39 : vector<8x1xi1> to vector<8x1xi1>
    %505 = vector.broadcast %504 : vector<8x1xi1> to vector<8x128xi1>
    %506 = arith.select %505, %496, %465 : vector<8x128xi1>, vector<8x128xf32>
    %c11 = arith.constant 11 : index
    %c0_119 = arith.constant 0 : index
    %c0_120 = arith.constant 0 : index
    %507 = vector.load %arg3[%c11, %c0_119, %c0_120] : memref<16x8x384xf32, #tpu.memory_space<vmem>>, vector<1x8x384xf32>
    %508 = vector.shape_cast %507 : vector<1x8x384xf32> to vector<8x384xf32>
    %cst_121 = arith.constant dense<0.000000e+00> : vector<8x384xf32>
    %509 = tpu.matmul %506, %3, %cst_121 {dimension_numbers = #tpu.dot_dimension_numbers<[1], [0], [0], [1], [0, 0, 1, 1], [], []>} : vector<8x128xf32>, vector<128x384xf32>, vector<8x384xf32> -> vector<8x384xf32>
    %510 = vector.extract_strided_slice %508 {offsets = [0, 0], sizes = [8, 128], strides = [1, 1]} : vector<8x384xf32> to vector<8x128xf32>
    %511 = vector.extract_strided_slice %508 {offsets = [0, 128], sizes = [8, 128], strides = [1, 1]} : vector<8x384xf32> to vector<8x128xf32>
    %512 = vector.extract_strided_slice %508 {offsets = [0, 256], sizes = [8, 128], strides = [1, 1]} : vector<8x384xf32> to vector<8x128xf32>
    %513 = vector.extract_strided_slice %509 {offsets = [0, 0], sizes = [8, 128], strides = [1, 1]} : vector<8x384xf32> to vector<8x128xf32>
    %514 = vector.extract_strided_slice %509 {offsets = [0, 128], sizes = [8, 128], strides = [1, 1]} : vector<8x384xf32> to vector<8x128xf32>
    %515 = vector.extract_strided_slice %509 {offsets = [0, 256], sizes = [8, 128], strides = [1, 1]} : vector<8x384xf32> to vector<8x128xf32>
    %516 = arith.addf %510, %513 : vector<8x128xf32>
    %517 = arith.negf %516 : vector<8x128xf32>
    %518 = math.exp %517 : vector<8x128xf32>
    %cst_122 = arith.constant 1.000000e+00 : f32
    %519 = vector.broadcast %cst_122 : f32 to vector<8x128xf32>
    %520 = arith.addf %519, %518 : vector<8x128xf32>
    %521 = arith.divf %519, %520 : vector<8x128xf32>
    %522 = arith.addf %511, %514 : vector<8x128xf32>
    %523 = arith.negf %522 : vector<8x128xf32>
    %524 = math.exp %523 : vector<8x128xf32>
    %cst_123 = arith.constant 1.000000e+00 : f32
    %525 = vector.broadcast %cst_123 : f32 to vector<8x128xf32>
    %526 = arith.addf %525, %524 : vector<8x128xf32>
    %527 = arith.divf %525, %526 : vector<8x128xf32>
    %528 = vector.broadcast %4 : vector<1x128xf32> to vector<8x128xf32>
    %529 = arith.addf %515, %528 : vector<8x128xf32>
    %530 = arith.mulf %521, %529 : vector<8x128xf32>
    %531 = arith.addf %512, %530 : vector<8x128xf32>
    %532 = math.tanh %531 : vector<8x128xf32>
    %cst_124 = arith.constant 1.000000e+00 : f32
    %533 = vector.broadcast %cst_124 : f32 to vector<8x128xf32>
    %534 = arith.subf %533, %527 : vector<8x128xf32>
    %535 = arith.mulf %534, %532 : vector<8x128xf32>
    %536 = arith.mulf %527, %506 : vector<8x128xf32>
    %537 = arith.addf %535, %536 : vector<8x128xf32>
    %cst_125 = arith.constant 0.000000e+00 : f32
    %538 = vector.shape_cast %42 : vector<8x1xi1> to vector<8x1xi1>
    %539 = vector.broadcast %538 : vector<8x1xi1> to vector<8x128xi1>
    %540 = vector.broadcast %cst_125 : f32 to vector<8x128xf32>
    %541 = arith.select %539, %537, %540 : vector<8x128xi1>, vector<8x128xf32>
    %c11_126 = arith.constant 11 : index
    %c0_127 = arith.constant 0 : index
    %c0_128 = arith.constant 0 : index
    %542 = vector.load %arg6[%c11_126, %c0_127, %c0_128] : memref<16x8x128xf32, #tpu.memory_space<vmem>>, vector<1x8x128xf32>
    %543 = vector.shape_cast %542 : vector<1x8x128xf32> to vector<8x128xf32>
    %544 = vector.shape_cast %541 : vector<8x128xf32> to vector<1x8x128xf32>
    tpu.vector_store %arg6[%c11_126, %c0_127, %c0_128], %544 {strides = array<i32>} : memref<16x8x128xf32, #tpu.memory_space<vmem>>, vector<1x8x128xf32>,
    %545 = vector.shape_cast %42 : vector<8x1xi1> to vector<8x1xi1>
    %546 = vector.broadcast %545 : vector<8x1xi1> to vector<8x128xi1>
    %547 = arith.select %546, %537, %506 : vector<8x128xi1>, vector<8x128xf32>
    %c12 = arith.constant 12 : index
    %c0_129 = arith.constant 0 : index
    %c0_130 = arith.constant 0 : index
    %548 = vector.load %arg3[%c12, %c0_129, %c0_130] : memref<16x8x384xf32, #tpu.memory_space<vmem>>, vector<1x8x384xf32>
    %549 = vector.shape_cast %548 : vector<1x8x384xf32> to vector<8x384xf32>
    %cst_131 = arith.constant dense<0.000000e+00> : vector<8x384xf32>
    %550 = tpu.matmul %547, %3, %cst_131 {dimension_numbers = #tpu.dot_dimension_numbers<[1], [0], [0], [1], [0, 0, 1, 1], [], []>} : vector<8x128xf32>, vector<128x384xf32>, vector<8x384xf32> -> vector<8x384xf32>
    %551 = vector.extract_strided_slice %549 {offsets = [0, 0], sizes = [8, 128], strides = [1, 1]} : vector<8x384xf32> to vector<8x128xf32>
    %552 = vector.extract_strided_slice %549 {offsets = [0, 128], sizes = [8, 128], strides = [1, 1]} : vector<8x384xf32> to vector<8x128xf32>
    %553 = vector.extract_strided_slice %549 {offsets = [0, 256], sizes = [8, 128], strides = [1, 1]} : vector<8x384xf32> to vector<8x128xf32>
    %554 = vector.extract_strided_slice %550 {offsets = [0, 0], sizes = [8, 128], strides = [1, 1]} : vector<8x384xf32> to vector<8x128xf32>
    %555 = vector.extract_strided_slice %550 {offsets = [0, 128], sizes = [8, 128], strides = [1, 1]} : vector<8x384xf32> to vector<8x128xf32>
    %556 = vector.extract_strided_slice %550 {offsets = [0, 256], sizes = [8, 128], strides = [1, 1]} : vector<8x384xf32> to vector<8x128xf32>
    %557 = arith.addf %551, %554 : vector<8x128xf32>
    %558 = arith.negf %557 : vector<8x128xf32>
    %559 = math.exp %558 : vector<8x128xf32>
    %cst_132 = arith.constant 1.000000e+00 : f32
    %560 = vector.broadcast %cst_132 : f32 to vector<8x128xf32>
    %561 = arith.addf %560, %559 : vector<8x128xf32>
    %562 = arith.divf %560, %561 : vector<8x128xf32>
    %563 = arith.addf %552, %555 : vector<8x128xf32>
    %564 = arith.negf %563 : vector<8x128xf32>
    %565 = math.exp %564 : vector<8x128xf32>
    %cst_133 = arith.constant 1.000000e+00 : f32
    %566 = vector.broadcast %cst_133 : f32 to vector<8x128xf32>
    %567 = arith.addf %566, %565 : vector<8x128xf32>
    %568 = arith.divf %566, %567 : vector<8x128xf32>
    %569 = vector.broadcast %4 : vector<1x128xf32> to vector<8x128xf32>
    %570 = arith.addf %556, %569 : vector<8x128xf32>
    %571 = arith.mulf %562, %570 : vector<8x128xf32>
    %572 = arith.addf %553, %571 : vector<8x128xf32>
    %573 = math.tanh %572 : vector<8x128xf32>
    %cst_134 = arith.constant 1.000000e+00 : f32
    %574 = vector.broadcast %cst_134 : f32 to vector<8x128xf32>
    %575 = arith.subf %574, %568 : vector<8x128xf32>
    %576 = arith.mulf %575, %573 : vector<8x128xf32>
    %577 = arith.mulf %568, %547 : vector<8x128xf32>
    %578 = arith.addf %576, %577 : vector<8x128xf32>
    %cst_135 = arith.constant 0.000000e+00 : f32
    %579 = vector.shape_cast %45 : vector<8x1xi1> to vector<8x1xi1>
    %580 = vector.broadcast %579 : vector<8x1xi1> to vector<8x128xi1>
    %581 = vector.broadcast %cst_135 : f32 to vector<8x128xf32>
    %582 = arith.select %580, %578, %581 : vector<8x128xi1>, vector<8x128xf32>
    %c12_136 = arith.constant 12 : index
    %c0_137 = arith.constant 0 : index
    %c0_138 = arith.constant 0 : index
    %583 = vector.load %arg6[%c12_136, %c0_137, %c0_138] : memref<16x8x128xf32, #tpu.memory_space<vmem>>, vector<1x8x128xf32>
    %584 = vector.shape_cast %583 : vector<1x8x128xf32> to vector<8x128xf32>
    %585 = vector.shape_cast %582 : vector<8x128xf32> to vector<1x8x128xf32>
    tpu.vector_store %arg6[%c12_136, %c0_137, %c0_138], %585 {strides = array<i32>} : memref<16x8x128xf32, #tpu.memory_space<vmem>>, vector<1x8x128xf32>,
    %586 = vector.shape_cast %45 : vector<8x1xi1> to vector<8x1xi1>
    %587 = vector.broadcast %586 : vector<8x1xi1> to vector<8x128xi1>
    %588 = arith.select %587, %578, %547 : vector<8x128xi1>, vector<8x128xf32>
    %c13 = arith.constant 13 : index
    %c0_139 = arith.constant 0 : index
    %c0_140 = arith.constant 0 : index
    %589 = vector.load %arg3[%c13, %c0_139, %c0_140] : memref<16x8x384xf32, #tpu.memory_space<vmem>>, vector<1x8x384xf32>
    %590 = vector.shape_cast %589 : vector<1x8x384xf32> to vector<8x384xf32>
    %cst_141 = arith.constant dense<0.000000e+00> : vector<8x384xf32>
    %591 = tpu.matmul %588, %3, %cst_141 {dimension_numbers = #tpu.dot_dimension_numbers<[1], [0], [0], [1], [0, 0, 1, 1], [], []>} : vector<8x128xf32>, vector<128x384xf32>, vector<8x384xf32> -> vector<8x384xf32>
    %592 = vector.extract_strided_slice %590 {offsets = [0, 0], sizes = [8, 128], strides = [1, 1]} : vector<8x384xf32> to vector<8x128xf32>
    %593 = vector.extract_strided_slice %590 {offsets = [0, 128], sizes = [8, 128], strides = [1, 1]} : vector<8x384xf32> to vector<8x128xf32>
    %594 = vector.extract_strided_slice %590 {offsets = [0, 256], sizes = [8, 128], strides = [1, 1]} : vector<8x384xf32> to vector<8x128xf32>
    %595 = vector.extract_strided_slice %591 {offsets = [0, 0], sizes = [8, 128], strides = [1, 1]} : vector<8x384xf32> to vector<8x128xf32>
    %596 = vector.extract_strided_slice %591 {offsets = [0, 128], sizes = [8, 128], strides = [1, 1]} : vector<8x384xf32> to vector<8x128xf32>
    %597 = vector.extract_strided_slice %591 {offsets = [0, 256], sizes = [8, 128], strides = [1, 1]} : vector<8x384xf32> to vector<8x128xf32>
    %598 = arith.addf %592, %595 : vector<8x128xf32>
    %599 = arith.negf %598 : vector<8x128xf32>
    %600 = math.exp %599 : vector<8x128xf32>
    %cst_142 = arith.constant 1.000000e+00 : f32
    %601 = vector.broadcast %cst_142 : f32 to vector<8x128xf32>
    %602 = arith.addf %601, %600 : vector<8x128xf32>
    %603 = arith.divf %601, %602 : vector<8x128xf32>
    %604 = arith.addf %593, %596 : vector<8x128xf32>
    %605 = arith.negf %604 : vector<8x128xf32>
    %606 = math.exp %605 : vector<8x128xf32>
    %cst_143 = arith.constant 1.000000e+00 : f32
    %607 = vector.broadcast %cst_143 : f32 to vector<8x128xf32>
    %608 = arith.addf %607, %606 : vector<8x128xf32>
    %609 = arith.divf %607, %608 : vector<8x128xf32>
    %610 = vector.broadcast %4 : vector<1x128xf32> to vector<8x128xf32>
    %611 = arith.addf %597, %610 : vector<8x128xf32>
    %612 = arith.mulf %603, %611 : vector<8x128xf32>
    %613 = arith.addf %594, %612 : vector<8x128xf32>
    %614 = math.tanh %613 : vector<8x128xf32>
    %cst_144 = arith.constant 1.000000e+00 : f32
    %615 = vector.broadcast %cst_144 : f32 to vector<8x128xf32>
    %616 = arith.subf %615, %609 : vector<8x128xf32>
    %617 = arith.mulf %616, %614 : vector<8x128xf32>
    %618 = arith.mulf %609, %588 : vector<8x128xf32>
    %619 = arith.addf %617, %618 : vector<8x128xf32>
    %cst_145 = arith.constant 0.000000e+00 : f32
    %620 = vector.shape_cast %48 : vector<8x1xi1> to vector<8x1xi1>
    %621 = vector.broadcast %620 : vector<8x1xi1> to vector<8x128xi1>
    %622 = vector.broadcast %cst_145 : f32 to vector<8x128xf32>
    %623 = arith.select %621, %619, %622 : vector<8x128xi1>, vector<8x128xf32>
    %c13_146 = arith.constant 13 : index
    %c0_147 = arith.constant 0 : index
    %c0_148 = arith.constant 0 : index
    %624 = vector.load %arg6[%c13_146, %c0_147, %c0_148] : memref<16x8x128xf32, #tpu.memory_space<vmem>>, vector<1x8x128xf32>
    %625 = vector.shape_cast %624 : vector<1x8x128xf32> to vector<8x128xf32>
    %626 = vector.shape_cast %623 : vector<8x128xf32> to vector<1x8x128xf32>
    tpu.vector_store %arg6[%c13_146, %c0_147, %c0_148], %626 {strides = array<i32>} : memref<16x8x128xf32, #tpu.memory_space<vmem>>, vector<1x8x128xf32>,
    %627 = vector.shape_cast %48 : vector<8x1xi1> to vector<8x1xi1>
    %628 = vector.broadcast %627 : vector<8x1xi1> to vector<8x128xi1>
    %629 = arith.select %628, %619, %588 : vector<8x128xi1>, vector<8x128xf32>
    %c14 = arith.constant 14 : index
    %c0_149 = arith.constant 0 : index
    %c0_150 = arith.constant 0 : index
    %630 = vector.load %arg3[%c14, %c0_149, %c0_150] : memref<16x8x384xf32, #tpu.memory_space<vmem>>, vector<1x8x384xf32>
    %631 = vector.shape_cast %630 : vector<1x8x384xf32> to vector<8x384xf32>
    %cst_151 = arith.constant dense<0.000000e+00> : vector<8x384xf32>
    %632 = tpu.matmul %629, %3, %cst_151 {dimension_numbers = #tpu.dot_dimension_numbers<[1], [0], [0], [1], [0, 0, 1, 1], [], []>} : vector<8x128xf32>, vector<128x384xf32>, vector<8x384xf32> -> vector<8x384xf32>
    %633 = vector.extract_strided_slice %631 {offsets = [0, 0], sizes = [8, 128], strides = [1, 1]} : vector<8x384xf32> to vector<8x128xf32>
    %634 = vector.extract_strided_slice %631 {offsets = [0, 128], sizes = [8, 128], strides = [1, 1]} : vector<8x384xf32> to vector<8x128xf32>
    %635 = vector.extract_strided_slice %631 {offsets = [0, 256], sizes = [8, 128], strides = [1, 1]} : vector<8x384xf32> to vector<8x128xf32>
    %636 = vector.extract_strided_slice %632 {offsets = [0, 0], sizes = [8, 128], strides = [1, 1]} : vector<8x384xf32> to vector<8x128xf32>
    %637 = vector.extract_strided_slice %632 {offsets = [0, 128], sizes = [8, 128], strides = [1, 1]} : vector<8x384xf32> to vector<8x128xf32>
    %638 = vector.extract_strided_slice %632 {offsets = [0, 256], sizes = [8, 128], strides = [1, 1]} : vector<8x384xf32> to vector<8x128xf32>
    %639 = arith.addf %633, %636 : vector<8x128xf32>
    %640 = arith.negf %639 : vector<8x128xf32>
    %641 = math.exp %640 : vector<8x128xf32>
    %cst_152 = arith.constant 1.000000e+00 : f32
    %642 = vector.broadcast %cst_152 : f32 to vector<8x128xf32>
    %643 = arith.addf %642, %641 : vector<8x128xf32>
    %644 = arith.divf %642, %643 : vector<8x128xf32>
    %645 = arith.addf %634, %637 : vector<8x128xf32>
    %646 = arith.negf %645 : vector<8x128xf32>
    %647 = math.exp %646 : vector<8x128xf32>
    %cst_153 = arith.constant 1.000000e+00 : f32
    %648 = vector.broadcast %cst_153 : f32 to vector<8x128xf32>
    %649 = arith.addf %648, %647 : vector<8x128xf32>
    %650 = arith.divf %648, %649 : vector<8x128xf32>
    %651 = vector.broadcast %4 : vector<1x128xf32> to vector<8x128xf32>
    %652 = arith.addf %638, %651 : vector<8x128xf32>
    %653 = arith.mulf %644, %652 : vector<8x128xf32>
    %654 = arith.addf %635, %653 : vector<8x128xf32>
    %655 = math.tanh %654 : vector<8x128xf32>
    %cst_154 = arith.constant 1.000000e+00 : f32
    %656 = vector.broadcast %cst_154 : f32 to vector<8x128xf32>
    %657 = arith.subf %656, %650 : vector<8x128xf32>
    %658 = arith.mulf %657, %655 : vector<8x128xf32>
    %659 = arith.mulf %650, %629 : vector<8x128xf32>
    %660 = arith.addf %658, %659 : vector<8x128xf32>
    %cst_155 = arith.constant 0.000000e+00 : f32
    %661 = vector.shape_cast %51 : vector<8x1xi1> to vector<8x1xi1>
    %662 = vector.broadcast %661 : vector<8x1xi1> to vector<8x128xi1>
    %663 = vector.broadcast %cst_155 : f32 to vector<8x128xf32>
    %664 = arith.select %662, %660, %663 : vector<8x128xi1>, vector<8x128xf32>
    %c14_156 = arith.constant 14 : index
    %c0_157 = arith.constant 0 : index
    %c0_158 = arith.constant 0 : index
    %665 = vector.load %arg6[%c14_156, %c0_157, %c0_158] : memref<16x8x128xf32, #tpu.memory_space<vmem>>, vector<1x8x128xf32>
    %666 = vector.shape_cast %665 : vector<1x8x128xf32> to vector<8x128xf32>
    %667 = vector.shape_cast %664 : vector<8x128xf32> to vector<1x8x128xf32>
    tpu.vector_store %arg6[%c14_156, %c0_157, %c0_158], %667 {strides = array<i32>} : memref<16x8x128xf32, #tpu.memory_space<vmem>>, vector<1x8x128xf32>,
    %668 = vector.shape_cast %51 : vector<8x1xi1> to vector<8x1xi1>
    %669 = vector.broadcast %668 : vector<8x1xi1> to vector<8x128xi1>
    %670 = arith.select %669, %660, %629 : vector<8x128xi1>, vector<8x128xf32>
    %c15 = arith.constant 15 : index
    %c0_159 = arith.constant 0 : index
    %c0_160 = arith.constant 0 : index
    %671 = vector.load %arg3[%c15, %c0_159, %c0_160] : memref<16x8x384xf32, #tpu.memory_space<vmem>>, vector<1x8x384xf32>
    %672 = vector.shape_cast %671 : vector<1x8x384xf32> to vector<8x384xf32>
    %cst_161 = arith.constant dense<0.000000e+00> : vector<8x384xf32>
    %673 = tpu.matmul %670, %3, %cst_161 {dimension_numbers = #tpu.dot_dimension_numbers<[1], [0], [0], [1], [0, 0, 1, 1], [], []>} : vector<8x128xf32>, vector<128x384xf32>, vector<8x384xf32> -> vector<8x384xf32>
    %674 = vector.extract_strided_slice %672 {offsets = [0, 0], sizes = [8, 128], strides = [1, 1]} : vector<8x384xf32> to vector<8x128xf32>
    %675 = vector.extract_strided_slice %672 {offsets = [0, 128], sizes = [8, 128], strides = [1, 1]} : vector<8x384xf32> to vector<8x128xf32>
    %676 = vector.extract_strided_slice %672 {offsets = [0, 256], sizes = [8, 128], strides = [1, 1]} : vector<8x384xf32> to vector<8x128xf32>
    %677 = vector.extract_strided_slice %673 {offsets = [0, 0], sizes = [8, 128], strides = [1, 1]} : vector<8x384xf32> to vector<8x128xf32>
    %678 = vector.extract_strided_slice %673 {offsets = [0, 128], sizes = [8, 128], strides = [1, 1]} : vector<8x384xf32> to vector<8x128xf32>
    %679 = vector.extract_strided_slice %673 {offsets = [0, 256], sizes = [8, 128], strides = [1, 1]} : vector<8x384xf32> to vector<8x128xf32>
    %680 = arith.addf %674, %677 : vector<8x128xf32>
    %681 = arith.negf %680 : vector<8x128xf32>
    %682 = math.exp %681 : vector<8x128xf32>
    %cst_162 = arith.constant 1.000000e+00 : f32
    %683 = vector.broadcast %cst_162 : f32 to vector<8x128xf32>
    %684 = arith.addf %683, %682 : vector<8x128xf32>
    %685 = arith.divf %683, %684 : vector<8x128xf32>
    %686 = arith.addf %675, %678 : vector<8x128xf32>
    %687 = arith.negf %686 : vector<8x128xf32>
    %688 = math.exp %687 : vector<8x128xf32>
    %cst_163 = arith.constant 1.000000e+00 : f32
    %689 = vector.broadcast %cst_163 : f32 to vector<8x128xf32>
    %690 = arith.addf %689, %688 : vector<8x128xf32>
    %691 = arith.divf %689, %690 : vector<8x128xf32>
    %692 = vector.broadcast %4 : vector<1x128xf32> to vector<8x128xf32>
    %693 = arith.addf %679, %692 : vector<8x128xf32>
    %694 = arith.mulf %685, %693 : vector<8x128xf32>
    %695 = arith.addf %676, %694 : vector<8x128xf32>
    %696 = math.tanh %695 : vector<8x128xf32>
    %cst_164 = arith.constant 1.000000e+00 : f32
    %697 = vector.broadcast %cst_164 : f32 to vector<8x128xf32>
    %698 = arith.subf %697, %691 : vector<8x128xf32>
    %699 = arith.mulf %698, %696 : vector<8x128xf32>
    %700 = arith.mulf %691, %670 : vector<8x128xf32>
    %701 = arith.addf %699, %700 : vector<8x128xf32>
    %cst_165 = arith.constant 0.000000e+00 : f32
    %702 = vector.shape_cast %54 : vector<8x1xi1> to vector<8x1xi1>
    %703 = vector.broadcast %702 : vector<8x1xi1> to vector<8x128xi1>
    %704 = vector.broadcast %cst_165 : f32 to vector<8x128xf32>
    %705 = arith.select %703, %701, %704 : vector<8x128xi1>, vector<8x128xf32>
    %c15_166 = arith.constant 15 : index
    %c0_167 = arith.constant 0 : index
    %c0_168 = arith.constant 0 : index
    %706 = vector.load %arg6[%c15_166, %c0_167, %c0_168] : memref<16x8x128xf32, #tpu.memory_space<vmem>>, vector<1x8x128xf32>
    %707 = vector.shape_cast %706 : vector<1x8x128xf32> to vector<8x128xf32>
    %708 = vector.shape_cast %705 : vector<8x128xf32> to vector<1x8x128xf32>
    tpu.vector_store %arg6[%c15_166, %c0_167, %c0_168], %708 {strides = array<i32>} : memref<16x8x128xf32, #tpu.memory_space<vmem>>, vector<1x8x128xf32>,
    %709 = vector.shape_cast %54 : vector<8x1xi1> to vector<8x1xi1>
    %710 = vector.broadcast %709 : vector<8x1xi1> to vector<8x128xi1>
    %711 = arith.select %710, %701, %670 : vector<8x128xi1>, vector<8x128xf32>
    %c0_169 = arith.constant 0 : index
    %c0_170 = arith.constant 0 : index
    %712 = vector.load %arg8[%c0_169, %c0_170] : memref<8x128xf32, #tpu.memory_space<vmem>>, vector<8x128xf32>
    tpu.vector_store %arg8[%c0_169, %c0_170], %711 {strides = array<i32>} : memref<8x128xf32, #tpu.memory_space<vmem>>, vector<8x128xf32>,
    %c1_i32_171 = arith.constant 1 : i32
    %713 = arith.cmpi eq, %arg1, %c1_i32_171 : i32
    %714 = arith.extui %713 : i1 to i32
    %c0_i32_172 = arith.constant 0 : i32
    %715 = arith.cmpi ne, %714, %c0_i32_172 : i32
    scf.if %715 {
      %c0_173 = arith.constant 0 : index
      %c0_174 = arith.constant 0 : index
      %716 = vector.load %arg7[%c0_173, %c0_174] : memref<8x128xf32, #tpu.memory_space<vmem>>, vector<8x128xf32>
      tpu.vector_store %arg7[%c0_173, %c0_174], %711 {strides = array<i32>} : memref<8x128xf32, #tpu.memory_space<vmem>>, vector<8x128xf32>,
    } else {
    }
    return
  }
  func.func @transform_0(%arg0: i32, %arg1: i32) -> (i32, i32) {
    %c0_i32 = arith.constant 0 : i32
    %c0_i32_0 = arith.constant 0 : i32
    return %arg0, %c0_i32 : i32, i32
  }
  func.func @transform_1(%arg0: i32, %arg1: i32) -> (i32, i32, i32) {
    %c0_i32 = arith.constant 0 : i32
    %c0_i32_0 = arith.constant 0 : i32
    return %arg1, %arg0, %c0_i32 : i32, i32, i32
  }
  func.func @transform_2(%arg0: i32, %arg1: i32) -> (i32, i32) {
    %c0_i32 = arith.constant 0 : i32
    %c0_i32_0 = arith.constant 0 : i32
    %c0_i32_1 = arith.constant 0 : i32
    return %c0_i32, %c0_i32_0 : i32, i32
  }
  func.func @transform_3(%arg0: i32, %arg1: i32) -> (i32, i32) {
    %c0_i32 = arith.constant 0 : i32
    %c0_i32_0 = arith.constant 0 : i32
    %c0_i32_1 = arith.constant 0 : i32
    return %c0_i32, %c0_i32_0 : i32, i32
  }
  func.func @transform_4(%arg0: i32, %arg1: i32) -> (i32, i32, i32) {
    %c0_i32 = arith.constant 0 : i32
    %c0_i32_0 = arith.constant 0 : i32
    return %arg1, %arg0, %c0_i32 : i32, i32, i32
  }
  func.func @transform_5(%arg0: i32, %arg1: i32) -> (i32, i32) {
    %c0_i32 = arith.constant 0 : i32
    %c0_i32_0 = arith.constant 0 : i32
    return %arg0, %c0_i32 : i32, i32
  }
}

</mosaic_0001>

<llo_original>
// kernel: tpu_custom_call.1
$region0: #{tpu_custom_call.1}
  #allocation0 [shape = 'u32[]', space=smem, size = 0x4, offset = 0x4, fixed_abs, tag = 'smem constant byte address 0x4 - core index']
  #allocation1 [shape = 'u32[144,128]{1,0:T(1,128)}', space=vmem, size = 0x12000, scoped, tag = 'internal scratch']
  #allocation2 [shape = 'f32[8,128]{1,0:T(8,128)}', space=vmem, size = 0x1000, scoped, tag = 'scratch operand']
  %s0 = inlined_call_operand.vmem [shape: s32[8,1], index: 0, kind: input, shape index: {}]
  %s1 = inlined_call_operand.hbm [shape: f32[32,8,384], index: 1, kind: input, shape index: {}]
  %s2 = inlined_call_operand.hbm [shape: f32[128,384], index: 2, kind: input, shape index: {}]
  %s3 = inlined_call_operand.vmem [shape: f32[1,128], index: 3, kind: input, shape index: {}]
  %s4 = inlined_call_operand.hbm [shape: f32[32,8,128], index: 4, kind: output, shape index: {0}]
  %s5 = inlined_call_operand.hbm [shape: f32[8,128], index: 5, kind: output, shape index: {1}]
  %6 = xla_tuple %s4, %s5
  %s7 = sld [smem:[#allocation0]]
  $region73: #{tpu_custom_call.1} parent=0
    _
  %s9 = ssub.s32 1, %s7
  %s10 = scalar_select 0, %s9, %s7
  $region1: #{tpu_custom_call.1} parent=0
    #allocation3 [shape = 'u8[393216]{0}', space=vmem, size = 0x60000, scoped, tag = 'input window, operand 1']
    #allocation4 [shape = 's32[2]{0}', space=sflag, size = 0x8, scoped, tag = 'scoped memory for tpu_custom_call.1']
    #allocation5 [shape = 's32[2]{0}', space=sflag, size = 0x8, scoped, tag = 'scoped memory for tpu_custom_call.1']
    #allocation6 [shape = 'u8[196608]{0}', space=vmem, size = 0x30000, scoped, tag = 'input window, operand 2, single buffered']
    #allocation7 [shape = 's32[1]{0}', space=sflag, size = 0x4, scoped, tag = 'scoped memory for tpu_custom_call.1']
    #allocation8 [shape = 'u8[131072]{0}', space=vmem, size = 0x20000, scoped, tag = 'output window, operand 0']
    #allocation9 [shape = 'u8[4096]{0}', space=vmem, size = 0x1000, scoped, tag = 'output window, operand 1, single buffered']
    #allocation10 [shape = 's32[1]{0}', space=sflag, size = 0x4, scoped, tag = 'scoped memory for tpu_custom_call.1']
    %11 = vsyncpa [#allocation4], 0
    %s12 = scalar_lea.sflag [#allocation4], 1
    %13 = vsyncpa %s12, 0
    %14 = vsyncpa [#allocation7], 0
    %15 = vsyncpa [#allocation5], 0
    %s16 = scalar_lea.sflag [#allocation5], 1
    %17 = vsyncpa %s16, 0
    %18 = vsyncpa [#allocation10], 0
    loop: start=0, step=1, limit=4
    $region2: #{tpu_custom_call.1} parent=1 // loop_pre_header
      _
    $region3: #{tpu_custom_call.1} parent=1 // loop_header
      %s20 = sphi 0, %s24
      %p21 = scmp.ge.s32.totalorder %s20, 4
      %s27 = sphi 0, %s39
      %s28 = sphi 0, %s35
      %s29 = sphi 0, %s27
      %s30 = sphi 0, %s28
      %s31 = sphi 0, %s29
      %s32 = sphi 0, %s30
      %s42 = sphi 0, %s44
      %s45 = sphi 0, %s42
      %s46 = sphi 0, %s45
      %s62 = sphi 0, %s46
      %s70 = sphi 0, %s72
      %s73 = sphi 0, %s70
      %s74 = sphi 0, %s73
      %s90 = sphi 0, %s74
      %s94 = sphi 0, %s94
      %s96 = sphi 0, %s94
      %s97 = sphi 0, %s96
      %s111 = sphi 0, %s97
      %s115 = sphi 0, %s115
      %s117 = sphi 0, %s115
      %s118 = sphi 0, %s117
      %s132 = sphi 0, %s118
      %s140 = sphi 0, %s142
      %s143 = sphi 0, %s140
      %s144 = sphi 0, %s143
      %s160 = sphi 0, %s144
      %s166 = sphi 0, %s168
      %s169 = sphi 0, %s166
      %s170 = sphi 0, %s169
      %s186 = sphi 0, %s170
    $region4: #{tpu_custom_call.1} parent=1 // loop_header_branch
      %23 = sbr.rel (%p21) target = $region8
    $region5: #{tpu_custom_call.1} parent=1 // loop_body
      %s25 = ssub.s32 %s20, 1
      %s26 = ssub.s32 %s20, 2
      %s33 = sadd.s32 1, %s28
      %p34 = scmp.ge.s32.totalorder %s33, 2
      %s35 = scalar_select %p34, 0, %s33
      %s36 = sadd.s32 1, %s27
      %s37 = scalar_select %p34, %s36, %s27
      %p38 = scmp.ge.s32.totalorder %s37, 1
      %s39 = scalar_select %p38, 0, %s37
      %s40 = ssub.s32 %s27, %s39
      %p41 = scmp.eq.s32.totalorder %s40, 0
      %s43 = sadd.s32 %s42, 1
      %s44 = scalar_select %p41, %s42, %s43
      %p47 = pneg %p41
      %p48 = scmp.eq.s32.totalorder %s20, 1
      %p49 = por %p47, %p48
      %p50 = scmp.ne.s32.totalorder %s42, %s45
      %p51 = scmp.eq.s32.totalorder %s20, 0
      %p52 = por %p50, %p51
      %p53 = scmp.ne.s32.totalorder %s42, %s45
      %p54 = scmp.eq.s32.totalorder %s25, 1
      %p55 = por %p53, %p54
      %p56 = scmp.ne.s32.totalorder %s45, %s46
      %p57 = scmp.eq.s32.totalorder %s25, 0
      %p58 = por %p56, %p57
      %p59 = scmp.ne.s32.totalorder %s45, %s46
      %p60 = scmp.eq.s32.totalorder %s26, 1
      %p61 = por %p59, %p60
      %p63 = scmp.ne.s32.totalorder %s46, %s62
      %p64 = scmp.eq.s32.totalorder %s26, 0
      %p65 = por %p63, %p64
      %s66 = ssub.s32 %s28, %s35
      %s67 = ssub.s32 %s27, %s39
      %s68 = sor.u32 %s66, %s67
      %p69 = scmp.eq.s32.totalorder %s68, 0
      %s71 = sadd.s32 %s70, 1
      %s72 = scalar_select %p69, %s70, %s71
      %p75 = pneg %p69
      %p76 = scmp.eq.s32.totalorder %s20, 1
      %p77 = por %p75, %p76
      %p78 = scmp.ne.s32.totalorder %s70, %s73
      %p79 = scmp.eq.s32.totalorder %s20, 0
      %p80 = por %p78, %p79
      %p81 = scmp.ne.s32.totalorder %s70, %s73
      %p82 = scmp.eq.s32.totalorder %s25, 1
      %p83 = por %p81, %p82
      %p84 = scmp.ne.s32.totalorder %s73, %s74
      %p85 = scmp.eq.s32.totalorder %s25, 0
      %p86 = por %p84, %p85
      %p87 = scmp.ne.s32.totalorder %s73, %s74
      %p88 = scmp.eq.s32.totalorder %s26, 1
      %p89 = por %p87, %p88
      %p91 = scmp.ne.s32.totalorder %s74, %s90
      %p92 = scmp.eq.s32.totalorder %s26, 0
      %p93 = por %p91, %p92
      %s95 = sadd.s32 %s94, 1
      %p98 = scmp.eq.s32.totalorder %s20, 1
      %p99 = scmp.ne.s32.totalorder %s94, %s96
      %p100 = scmp.eq.s32.totalorder %s20, 0
      %p101 = por %p99, %p100
      %p102 = scmp.ne.s32.totalorder %s94, %s96
      %p103 = scmp.eq.s32.totalorder %s25, 1
      %p104 = por %p102, %p103
      %p105 = scmp.ne.s32.totalorder %s96, %s97
      %p106 = scmp.eq.s32.totalorder %s25, 0
      %p107 = por %p105, %p106
      %p108 = scmp.ne.s32.totalorder %s96, %s97
      %p109 = scmp.eq.s32.totalorder %s26, 1
      %p110 = por %p108, %p109
      %p112 = scmp.ne.s32.totalorder %s97, %s111
      %p113 = scmp.eq.s32.totalorder %s26, 0
      %p114 = por %p112, %p113
      %s116 = sadd.s32 %s115, 1
      %p119 = scmp.eq.s32.totalorder %s20, 1
      %p120 = scmp.ne.s32.totalorder %s115, %s117
      %p121 = scmp.eq.s32.totalorder %s20, 0
      %p122 = por %p120, %p121
      %p123 = scmp.ne.s32.totalorder %s115, %s117
      %p124 = scmp.eq.s32.totalorder %s25, 1
      %p125 = por %p123, %p124
      %p126 = scmp.ne.s32.totalorder %s117, %s118
      %p127 = scmp.eq.s32.totalorder %s25, 0
      %p128 = por %p126, %p127
      %p129 = scmp.ne.s32.totalorder %s117, %s118
      %p130 = scmp.eq.s32.totalorder %s26, 1
      %p131 = por %p129, %p130
      %p133 = scmp.ne.s32.totalorder %s118, %s132
      %p134 = scmp.eq.s32.totalorder %s26, 0
      %p135 = por %p133, %p134
      %s136 = ssub.s32 %s28, %s35
      %s137 = ssub.s32 %s27, %s39
      %s138 = sor.u32 %s136, %s137
      %p139 = scmp.eq.s32.totalorder %s138, 0
      %s141 = sadd.s32 %s140, 1
      %s142 = scalar_select %p139, %s140, %s141
      %p145 = pneg %p139
      %p146 = scmp.eq.s32.totalorder %s20, 1
      %p147 = por %p145, %p146
      %p148 = scmp.ne.s32.totalorder %s140, %s143
      %p149 = scmp.eq.s32.totalorder %s20, 0
      %p150 = por %p148, %p149
      %p151 = scmp.ne.s32.totalorder %s140, %s143
      %p152 = scmp.eq.s32.totalorder %s25, 1
      %p153 = por %p151, %p152
      %p154 = scmp.ne.s32.totalorder %s143, %s144
      %p155 = scmp.eq.s32.totalorder %s25, 0
      %p156 = por %p154, %p155
      %p157 = scmp.ne.s32.totalorder %s143, %s144
      %p158 = scmp.eq.s32.totalorder %s26, 1
      %p159 = por %p157, %p158
      %p161 = scmp.ne.s32.totalorder %s144, %s160
      %p162 = scmp.eq.s32.totalorder %s26, 0
      %p163 = por %p161, %p162
      %s164 = ssub.s32 %s27, %s39
      %p165 = scmp.eq.s32.totalorder %s164, 0
      %s167 = sadd.s32 %s166, 1
      %s168 = scalar_select %p165, %s166, %s167
      %p171 = pneg %p165
      %p172 = scmp.eq.s32.totalorder %s20, 1
      %p173 = por %p171, %p172
      %p174 = scmp.ne.s32.totalorder %s166, %s169
      %p175 = scmp.eq.s32.totalorder %s20, 0
      %p176 = por %p174, %p175
      %p177 = scmp.ne.s32.totalorder %s166, %s169
      %p178 = scmp.eq.s32.totalorder %s25, 1
      %p179 = por %p177, %p178
      %p180 = scmp.ne.s32.totalorder %s169, %s170
      %p181 = scmp.eq.s32.totalorder %s25, 0
      %p182 = por %p180, %p181
      %p183 = scmp.ne.s32.totalorder %s169, %s170
      %p184 = scmp.eq.s32.totalorder %s26, 1
      %p185 = por %p183, %p184
      %p187 = scmp.ne.s32.totalorder %s170, %s186
      %p188 = scmp.eq.s32.totalorder %s26, 0
      %p189 = por %p187, %p188
      %p190 = scmp.le.s32.totalorder 1, %s20
      %p191 = scmp.lt.s32.totalorder %s20, 3
      %p192 = pnand %p190, %p191
      %p193 = pneg %p192
      // Predicated region
      $region9: #{tpu_custom_call.1} parent=5 // pred_check
        _
      $region10: #{tpu_custom_call.1} parent=5 // pred_check_branch
        %195 = sbr.rel (%p192) target = $region12
      $region11: #{tpu_custom_call.1} parent=5 // pred_region
        %s196 = ssub.s32 %s20, 1
        // Predicated region
        $region13: #{tpu_custom_call.1} parent=11 // pred_check
          %p197 = pneg %p58
        $region14: #{tpu_custom_call.1} parent=11 // pred_check_branch
          %199 = sbr.rel (%p197) target = $region16
        $region15: #{tpu_custom_call.1} parent=11 // pred_region
          %p200 = scmp.lt.s32.totalorder %s29, 0
          %s201 = scalar_select %p200, %s29, 0
          %s202 = smul.addr %s201, 8
          %s203 = scalar_lea.vmem %s0, %s202
        $region16: #{tpu_custom_call.1} parent=11 // pred_fallthru
          _
        // Predicated region
        $region17: #{tpu_custom_call.1} parent=11 // pred_check
          %p204 = pneg %p107
        $region18: #{tpu_custom_call.1} parent=11 // pred_check_branch
          %206 = sbr.rel (%p204) target = $region20
        $region19: #{tpu_custom_call.1} parent=11 // pred_region
          %s208 = ssub.s32 6144, 6144
          %209 = vsyncadd [#allocation7], %s208
          %s210 = sshll.u32 [#allocation6], 4
          %s211 = int_to_ptr.vmem [resolvable:$true] %s210
          %216 = dma.hbm_to_vmem [thread:$0]  %s2, 6144, %s211, [#allocation7], 384, 384, 24
        $region20: #{tpu_custom_call.1} parent=11 // pred_fallthru
          _
        // Predicated region
        $region21: #{tpu_custom_call.1} parent=11 // pred_check
          %p217 = pneg %p128
        $region22: #{tpu_custom_call.1} parent=11 // pred_check_branch
          %219 = sbr.rel (%p217) target = $region24
        $region23: #{tpu_custom_call.1} parent=11 // pred_region
          _
        $region24: #{tpu_custom_call.1} parent=11 // pred_fallthru
          _
      $region12: #{tpu_custom_call.1} parent=5 // pred_fallthru
        _
      %p220 = scmp.lt.s32.totalorder %s20, 2
      // Predicated region
      $region25: #{tpu_custom_call.1} parent=5 // pred_check
        %p221 = pneg %p220
      $region26: #{tpu_custom_call.1} parent=5 // pred_check_branch
        %223 = sbr.rel (%p221) target = $region28
      $region27: #{tpu_custom_call.1} parent=5 // pred_region
        // Predicated region
        $region29: #{tpu_custom_call.1} parent=27 // pred_check
          %p224 = pneg %p80
        $region30: #{tpu_custom_call.1} parent=27 // pred_check_branch
          %226 = sbr.rel (%p224) target = $region32
        $region31: #{tpu_custom_call.1} parent=27 // pred_region
          %s227 = sand.u32 %s70, 1
          %s228 = scalar_lea.sflag [#allocation4], %s227
          %s229 = sand.u32 %s70, 1
          %s230 = smul.addr %s229, 384
          %s231 = scalar_lea.vmem [#allocation3], %s230
          %s232 = smul.u32 16, %s28
          %s234 = ssub.s32 6144, 6144
          %235 = vsyncadd %s228, %s234
          %s236 = smul.addr %s27, 3
          %s237 = smul.addr %s232, 3
          %s238 = sadd.s32 %s236, %s237
          %s239 = smul.addr %s238, 128
          %s240 = scalar_lea.hbm %s1, %s239
          %s241 = sshll.u32 %s231, 4
          %s242 = int_to_ptr.vmem [resolvable:$true] %s241
          %247 = dma.hbm_to_vmem [thread:$0]  %s240, 6144, %s242, %s228, 384, 384, 24
        $region32: #{tpu_custom_call.1} parent=27 // pred_fallthru
          _
      $region28: #{tpu_custom_call.1} parent=5 // pred_fallthru
        _
      %p248 = scmp.le.s32.totalorder 1, %s20
      %p249 = scmp.lt.s32.totalorder %s20, 3
      %p250 = pnand %p248, %p249
      %p251 = pneg %p250
      // Predicated region
      $region33: #{tpu_custom_call.1} parent=5 // pred_check
        _
      $region34: #{tpu_custom_call.1} parent=5 // pred_check_branch
        %253 = sbr.rel (%p250) target = $region36
      $region35: #{tpu_custom_call.1} parent=5 // pred_region
        %s254 = ssub.s32 %s20, 1
        %s255 = sand.u32 %s73, 1
        %s256 = scalar_lea.sflag [#allocation4], %s255
        %s257 = sand.u32 %s73, 1
        %s258 = smul.addr %s257, 384
        %s259 = scalar_lea.vmem [#allocation3], %s258
        // Predicated region
        $region37: #{tpu_custom_call.1} parent=35 // pred_check
          %p260 = pneg %p86
        $region38: #{tpu_custom_call.1} parent=35 // pred_check_branch
          %262 = sbr.rel (%p260) target = $region40
        $region39: #{tpu_custom_call.1} parent=35 // pred_region
          %263 = dma.done %s256, 6144
        $region40: #{tpu_custom_call.1} parent=35 // pred_fallthru
          _
        // Predicated region
        $region41: #{tpu_custom_call.1} parent=35 // pred_check
          %p264 = pneg %p107
        $region42: #{tpu_custom_call.1} parent=35 // pred_check_branch
          %266 = sbr.rel (%p264) target = $region44
        $region43: #{tpu_custom_call.1} parent=35 // pred_region
          %267 = dma.done [#allocation7], 6144
        $region44: #{tpu_custom_call.1} parent=35 // pred_fallthru
          _
        %p268 = scmp.lt.s32.totalorder %s29, 0
        %s269 = scalar_select %p268, %s29, 0
        %s270 = smul.addr %s269, 8
        %s271 = scalar_lea.vmem %s0, %s270
        %p272 = pneg %p58
        %p273 = pneg %p55
        %s274 = sand.u32 %s73, 1
        %s275 = scalar_lea.sflag [#allocation4], %s274
        %s276 = sand.u32 %s73, 1
        %s277 = smul.addr %s276, 384
        %s278 = scalar_lea.vmem [#allocation3], %s277
        %p279 = pneg %p86
        %p280 = pneg %p83
        %p281 = pneg %p107
        %p282 = pneg %p104
        %p283 = pneg %p128
        %p284 = pneg %p125
        %p285 = pneg %p156
        %p286 = pneg %p153
        %s287 = sand.u32 %s143, 1
        %s288 = scalar_lea.sflag [#allocation5], %s287
        %s289 = sand.u32 %s143, 1
        %s290 = smul.addr %s289, 128
        %s291 = scalar_lea.vmem [#allocation8], %s290
        %p292 = pneg %p182
        %p293 = pneg %p179
        %p294 = scmp.lt.s32.totalorder %s29, 0
        %s295 = scalar_select %p294, %s29, 0
        %s296 = smul.addr %s295, 8
        %s297 = scalar_lea.vmem %s0, %s296
        %s298 = smul.u32 16, %s30
        %s299 = smul.u32 16, %s30
        %p300 = scmp.eq.s32.totalorder %s30, 0
        // Predicated region
        $region45: #{tpu_custom_call.1} parent=35 // pred_check
          %p301 = pneg %p300
        $region46: #{tpu_custom_call.1} parent=35 // pred_check_branch
          %303 = sbr.rel (%p301) target = $region48
        $region47: #{tpu_custom_call.1} parent=35 // pred_region
          %304 = vst [vmem:[#allocation2] sm:$0xff] 0.0
        $region48: #{tpu_custom_call.1} parent=35 // pred_fallthru
          _
        %v305 = vld [vmem:[#allocation6] sm:$0xff]
        %v306 = vld [vmem:[#allocation6 + $0x8] sm:$0xff]
        %v307 = vld [vmem:[#allocation6 + $0x10] sm:$0xff]
        %v308 = vld [vmem:[#allocation6 + $0x18] sm:$0xff]
        %v309 = vld [vmem:[#allocation6 + $0x20] sm:$0xff]
        %v310 = vld [vmem:[#allocation6 + $0x28] sm:$0xff]
        %v311 = vld [vmem:[#allocation6 + $0x30] sm:$0xff]
        %v312 = vld [vmem:[#allocation6 + $0x38] sm:$0xff]
        %v313 = vld [vmem:[#allocation6 + $0x40] sm:$0xff]
        %v314 = vld [vmem:[#allocation6 + $0x48] sm:$0xff]
        %v315 = vld [vmem:[#allocation6 + $0x50] sm:$0xff]
        %v316 = vld [vmem:[#allocation6 + $0x58] sm:$0xff]
        %v317 = vld [vmem:[#allocation6 + $0x60] sm:$0xff]
        %v318 = vld [vmem:[#allocation6 + $0x68] sm:$0xff]
        %v319 = vld [vmem:[#allocation6 + $0x70] sm:$0xff]
        %v320 = vld [vmem:[#allocation6 + $0x78] sm:$0xff]
        %v321 = vld [vmem:[#allocation6 + $0x80] sm:$0xff]
        %v322 = vld [vmem:[#allocation6 + $0x88] sm:$0xff]
        %v323 = vld [vmem:[#allocation6 + $0x90] sm:$0xff]
        %v324 = vld [vmem:[#allocation6 + $0x98] sm:$0xff]
        %v325 = vld [vmem:[#allocation6 + $0xa0] sm:$0xff]
        %v326 = vld [vmem:[#allocation6 + $0xa8] sm:$0xff]
        %v327 = vld [vmem:[#allocation6 + $0xb0] sm:$0xff]
        %v328 = vld [vmem:[#allocation6 + $0xb8] sm:$0xff]
        %v329 = vld [vmem:[#allocation6 + $0xc0] sm:$0xff]
        %v330 = vld [vmem:[#allocation6 + $0xc8] sm:$0xff]
        %v331 = vld [vmem:[#allocation6 + $0xd0] sm:$0xff]
        %v332 = vld [vmem:[#allocation6 + $0xd8] sm:$0xff]
        %v333 = vld [vmem:[#allocation6 + $0xe0] sm:$0xff]
        %v334 = vld [vmem:[#allocation6 + $0xe8] sm:$0xff]
        %v335 = vld [vmem:[#allocation6 + $0xf0] sm:$0xff]
        %v336 = vld [vmem:[#allocation6 + $0xf8] sm:$0xff]
        %v337 = vld [vmem:[#allocation6 + $0x100] sm:$0xff]
        %v338 = vld [vmem:[#allocation6 + $0x108] sm:$0xff]
        %v339 = vld [vmem:[#allocation6 + $0x110] sm:$0xff]
        %v340 = vld [vmem:[#allocation6 + $0x118] sm:$0xff]
        %v341 = vld [vmem:[#allocation6 + $0x120] sm:$0xff]
        %v342 = vld [vmem:[#allocation6 + $0x128] sm:$0xff]
        %v343 = vld [vmem:[#allocation6 + $0x130] sm:$0xff]
        %v344 = vld [vmem:[#allocation6 + $0x138] sm:$0xff]
        %v345 = vld [vmem:[#allocation6 + $0x140] sm:$0xff]
        %v346 = vld [vmem:[#allocation6 + $0x148] sm:$0xff]
        %v347 = vld [vmem:[#allocation6 + $0x150] sm:$0xff]
        %v348 = vld [vmem:[#allocation6 + $0x158] sm:$0xff]
        %v349 = vld [vmem:[#allocation6 + $0x160] sm:$0xff]
        %v350 = vld [vmem:[#allocation6 + $0x168] sm:$0xff]
        %v351 = vld [vmem:[#allocation6 + $0x170] sm:$0xff]
        %v352 = vld [vmem:[#allocation6 + $0x178] sm:$0xff]
        %v353 = vld [vmem:[%s3] sm:$0x1]
        %v354 = vld [vmem:[%s297] sm:$0xff]
        %s355 = smul.u32 %s30, 16
        %v356 = vstv %s355
        %vm357 = vcmp.gt.s32.totalorder %v354, %v356
        %s358 = sadd.s32 %s355, 1
        %v359 = vstv %s358
        %vm360 = vcmp.gt.s32.totalorder %v354, %v359
        %s361 = sadd.s32 %s355, 2
        %v362 = vstv %s361
        %vm363 = vcmp.gt.s32.totalorder %v354, %v362
        %s364 = sadd.s32 %s355, 3
        %v365 = vstv %s364
        %vm366 = vcmp.gt.s32.totalorder %v354, %v365
        %s367 = sadd.s32 %s355, 4
        %v368 = vstv %s367
        %vm369 = vcmp.gt.s32.totalorder %v354, %v368
        %s370 = sadd.s32 %s355, 5
        %v371 = vstv %s370
        %vm372 = vcmp.gt.s32.totalorder %v354, %v371
        %s373 = sadd.s32 %s355, 6
        %v374 = vstv %s373
        %vm375 = vcmp.gt.s32.totalorder %v354, %v374
        %s376 = sadd.s32 %s355, 7
        %v377 = vstv %s376
        %vm378 = vcmp.gt.s32.totalorder %v354, %v377
        %s379 = sadd.s32 %s355, 8
        %v380 = vstv %s379
        %vm381 = vcmp.gt.s32.totalorder %v354, %v380
        %s382 = sadd.s32 %s355, 9
        %v383 = vstv %s382
        %vm384 = vcmp.gt.s32.totalorder %v354, %v383
        %s385 = sadd.s32 %s355, 10
        %v386 = vstv %s385
        %vm387 = vcmp.gt.s32.totalorder %v354, %v386
        %s388 = sadd.s32 %s355, 11
        %v389 = vstv %s388
        %vm390 = vcmp.gt.s32.totalorder %v354, %v389
        %s391 = sadd.s32 %s355, 12
        %v392 = vstv %s391
        %vm393 = vcmp.gt.s32.totalorder %v354, %v392
        %s394 = sadd.s32 %s355, 13
        %v395 = vstv %s394
        %vm396 = vcmp.gt.s32.totalorder %v354, %v395
        %s397 = sadd.s32 %s355, 14
        %v398 = vstv %s397
        %vm399 = vcmp.gt.s32.totalorder %v354, %v398
        %s400 = sadd.s32 %s355, 15
        %v401 = vstv %s400
        %vm402 = vcmp.gt.s32.totalorder %v354, %v401
        %v403 = vld [vmem:[#allocation2] sm:$0xff]
        %v404 = vld [vmem:[%s259] sm:$0xff]
        %v405 = vld [vmem:[%s259 + $0x8] sm:$0xff]
        %v406 = vld [vmem:[%s259 + $0x10] sm:$0xff]
        %407 = vmatprep.subr.mxu0 %v306
        %408 = vmatpush1.msra.mxu0 %v305
        %409 = vmatprep.subr.mxu0 %v309
        %410 = vmatpush1.msra.mxu0 %v308
        %411 = vmatprep.subr.mxu0 %v312
        %412 = vmatpush1.msra.mxu0 %v311
        %413 = vmatprep.subr.mxu0 %v315
        %414 = vmatpush1.msra.mxu0 %v314
        %415 = vmatprep.subr.mxu0 %v318
        %416 = vmatpush1.msra.mxu0 %v317
        %417 = vmatprep.subr.mxu0 %v321
        %418 = vmatpush1.msra.mxu0 %v320
        %419 = vmatprep.subr.mxu0 %v324
        %420 = vmatpush1.msra.mxu0 %v323
        %421 = vmatprep.subr.mxu0 %v327
        %422 = vmatpush1.msra.mxu0 %v326
        %423 = vmatprep.subr.mxu0 %v330
        %424 = vmatpush1.msra.mxu0 %v329
        %425 = vmatprep.subr.mxu0 %v333
        %426 = vmatpush1.msra.mxu0 %v332
        %427 = vmatprep.subr.mxu0 %v336
        %428 = vmatpush1.msra.mxu0 %v335
        %429 = vmatprep.subr.mxu0 %v339
        %430 = vmatpush1.msra.mxu0 %v338
        %431 = vmatprep.subr.mxu0 %v342
        %432 = vmatpush1.msra.mxu0 %v341
        %433 = vmatprep.subr.mxu0 %v345
        %434 = vmatpush1.msra.mxu0 %v344
        %435 = vmatprep.subr.mxu0 %v348
        %436 = vmatpush1.msra.mxu0 %v347
        %437 = vmatprep.subr.mxu0 %v351
        %438 = vmatpush1.msra.mxu0 %v350
        %439 = vmatprep.subr.mxu0 0.0
        %440 = vmatpush1.msra.mxu0 0.0
        %441 = vmatprep.subr.mxu0 0.0
        %442 = vmatpush1.msra.mxu0 0.0
        %443 = vmatprep.subr.mxu0 0.0
        %444 = vmatpush1.msra.mxu0 0.0
        %445 = vmatprep.subr.mxu0 0.0
        %446 = vmatpush1.msra.mxu0 0.0
        %447 = vmatprep.subr.mxu0 0.0
        %448 = vmatpush1.msra.mxu0 0.0
        %449 = vmatprep.subr.mxu0 0.0
        %450 = vmatpush1.msra.mxu0 0.0
        %451 = vmatprep.subr.mxu0 0.0
        %452 = vmatpush1.msra.mxu0 0.0
        %453 = vmatprep.subr.mxu0 0.0
        %454 = vmatpush1.msra.mxu0 0.0
        %455 = vmatprep.subr.mxu0 0.0
        %456 = vmatpush1.msra.mxu0 0.0
        %457 = vmatprep.subr.mxu0 0.0
        %458 = vmatpush1.msra.mxu0 0.0
        %459 = vmatprep.subr.mxu0 0.0
        %460 = vmatpush1.msra.mxu0 0.0
        %461 = vmatprep.subr.mxu0 0.0
        %462 = vmatpush1.msra.mxu0 0.0
        %463 = vmatprep.subr.mxu0 0.0
        %464 = vmatpush1.msra.mxu0 0.0
        %465 = vmatprep.subr.mxu0 0.0
        %466 = vmatpush1.msra.mxu0 0.0
        %467 = vmatprep.subr.mxu0 0.0
        %468 = vmatpush1.msra.mxu0 0.0
        %469 = vmatprep.subr.mxu0 0.0
        %470 = vmatpush1.msra.mxu0 0.0
        %471 = vmatprep.mubr.f32.mxu0 0.0
        %472 = vmatmul.mubr.f32.gmra.mrb[0].mxu0 %v403
        %v473 = vpop.f32.mrb[0].mxu0
        %v474 = vadd.f32 0.0, %v473
        %v475 = vpop.f32.mrb[0].mxu0
        %v476 = vadd.f32 0.0, %v475
        %477 = vdwg.mxu0
        %478 = vmatprep.subr.mxu0 0.0
        %479 = vmatpush1.msra.mxu0 %v307
        %480 = vmatprep.subr.mxu0 0.0
        %481 = vmatpush1.msra.mxu0 %v310
        %482 = vmatprep.subr.mxu0 0.0
        %483 = vmatpush1.msra.mxu0 %v313
        %484 = vmatprep.subr.mxu0 0.0
        %485 = vmatpush1.msra.mxu0 %v316
        %486 = vmatprep.subr.mxu0 0.0
        %487 = vmatpush1.msra.mxu0 %v319
        %488 = vmatprep.subr.mxu0 0.0
        %489 = vmatpush1.msra.mxu0 %v322
        %490 = vmatprep.subr.mxu0 0.0
        %491 = vmatpush1.msra.mxu0 %v325
        %492 = vmatprep.subr.mxu0 0.0
        %493 = vmatpush1.msra.mxu0 %v328
        %494 = vmatprep.subr.mxu0 0.0
        %495 = vmatpush1.msra.mxu0 %v331
        %496 = vmatprep.subr.mxu0 0.0
        %497 = vmatpush1.msra.mxu0 %v334
        %498 = vmatprep.subr.mxu0 0.0
        %499 = vmatpush1.msra.mxu0 %v337
        %500 = vmatprep.subr.mxu0 0.0
        %501 = vmatpush1.msra.mxu0 %v340
        %502 = vmatprep.subr.mxu0 0.0
        %503 = vmatpush1.msra.mxu0 %v343
        %504 = vmatprep.subr.mxu0 0.0
        %505 = vmatpush1.msra.mxu0 %v346
        %506 = vmatprep.subr.mxu0 0.0
        %507 = vmatpush1.msra.mxu0 %v349
        %508 = vmatprep.subr.mxu0 0.0
        %509 = vmatpush1.msra.mxu0 %v352
        %510 = vmatprep.subr.mxu0 0.0
        %511 = vmatpush1.msra.mxu0 0.0
        %512 = vmatprep.subr.mxu0 0.0
        %513 = vmatpush1.msra.mxu0 0.0
        %514 = vmatprep.subr.mxu0 0.0
        %515 = vmatpush1.msra.mxu0 0.0
        %516 = vmatprep.subr.mxu0 0.0
        %517 = vmatpush1.msra.mxu0 0.0
        %518 = vmatprep.subr.mxu0 0.0
        %519 = vmatpush1.msra.mxu0 0.0
        %520 = vmatprep.subr.mxu0 0.0
        %521 = vmatpush1.msra.mxu0 0.0
        %522 = vmatprep.subr.mxu0 0.0
        %523 = vmatpush1.msra.mxu0 0.0
        %524 = vmatprep.subr.mxu0 0.0
        %525 = vmatpush1.msra.mxu0 0.0
        %526 = vmatprep.subr.mxu0 0.0
        %527 = vmatpush1.msra.mxu0 0.0
        %528 = vmatprep.subr.mxu0 0.0
        %529 = vmatpush1.msra.mxu0 0.0
        %530 = vmatprep.subr.mxu0 0.0
        %531 = vmatpush1.msra.mxu0 0.0
        %532 = vmatprep.subr.mxu0 0.0
        %533 = vmatpush1.msra.mxu0 0.0
        %534 = vmatprep.subr.mxu0 0.0
        %535 = vmatpush1.msra.mxu0 0.0
        %536 = vmatprep.subr.mxu0 0.0
        %537 = vmatpush1.msra.mxu0 0.0
        %538 = vmatprep.subr.mxu0 0.0
        %539 = vmatpush1.msra.mxu0 0.0
        %540 = vmatprep.subr.mxu0 0.0
        %541 = vmatpush1.msra.mxu0 0.0
        %542 = vmatprep.mubr.f32.mxu0 0.0
        %543 = vmatmul.mubr.f32.gmra.mrb[0].mxu0 %v403
        %v544 = vpop.f32.mrb[0].mxu0
        %v545 = vadd.f32 0.0, %v544
        %v546 = vpop.f32.mrb[0].mxu0
        %547 = vdwg.mxu0
        %v548 = vadd.f32 %v404, %v474
        %v549 = vxor.u32 %v548, 2147483648
        %v550 = vmul.f32 %v549, 1.442695
        %v551 = vpow.pop %v550
        %v552 = vadd.f32 %v551, 1.0
        %v553 = vrcp.pop %v552
        %v554 = vmul.f32 1.0, %v553
        %v555 = vadd.f32 %v405, %v476
        %v556 = vxor.u32 %v555, 2147483648
        %v557 = vmul.f32 %v556, 1.442695
        %v558 = vpow.pop %v557
        %v559 = vadd.f32 %v558, 1.0
        %v560 = vrcp.pop %v559
        %v561 = vmul.f32 1.0, %v560
        %v563 = vlaneseq
        %v564 = vshrl.u32 %v563, 7
        %v565 = vsub.s32 0, %v564
        %v566 = vrot.slane %v353, %v565
        %v568 = vadd.f32 %v545, %v566
        %v569 = vmul.f32 %v554, %v568
        %v570 = vadd.f32 %v406, %v569
        %v571 = vtanh.pop %v570
        %v572 = vsub.f32 1.0, %v561
        %v573 = vmul.f32 %v572, %v571
        %v574 = vmul.f32 %v561, %v403
        %v575 = vadd.f32 %v573, %v574
        %v576 = vsel %vm357, 1, 0
        %577 = vset.pattern.permute.xlu0 0
        %578 = vperm.xlu0 %577, %v576
        %v579 = vpop.permute.xlu0 %578
        %vm580 = vcmp.eq.s32.totalorder %v579, 1
        %v581 = vsel %vm580, %v575, 0.0
        %582 = vst [vmem:[%s291] sm:$0xff] %v581
        %v583 = vsel %vm580, %v575, %v403
        %s584 = scalar_lea.vmem %s259, 24 [#allocation3]
        %v585 = vld [vmem:[%s584] sm:$0xff]
        %v586 = vld [vmem:[%s584 + $0x8] sm:$0xff]
        %v587 = vld [vmem:[%s584 + $0x10] sm:$0xff]
        %588 = vmatprep.subr.mxu0 %v306
        %589 = vmatpush1.msra.mxu0 %v305
        %590 = vmatprep.subr.mxu0 %v309
        %591 = vmatpush1.msra.mxu0 %v308
        %592 = vmatprep.subr.mxu0 %v312
        %593 = vmatpush1.msra.mxu0 %v311
        %594 = vmatprep.subr.mxu0 %v315
        %595 = vmatpush1.msra.mxu0 %v314
        %596 = vmatprep.subr.mxu0 %v318
        %597 = vmatpush1.msra.mxu0 %v317
        %598 = vmatprep.subr.mxu0 %v321
        %599 = vmatpush1.msra.mxu0 %v320
        %600 = vmatprep.subr.mxu0 %v324
        %601 = vmatpush1.msra.mxu0 %v323
        %602 = vmatprep.subr.mxu0 %v327
        %603 = vmatpush1.msra.mxu0 %v326
        %604 = vmatprep.subr.mxu0 %v330
        %605 = vmatpush1.msra.mxu0 %v329
        %606 = vmatprep.subr.mxu0 %v333
        %607 = vmatpush1.msra.mxu0 %v332
        %608 = vmatprep.subr.mxu0 %v336
        %609 = vmatpush1.msra.mxu0 %v335
        %610 = vmatprep.subr.mxu0 %v339
        %611 = vmatpush1.msra.mxu0 %v338
        %612 = vmatprep.subr.mxu0 %v342
        %613 = vmatpush1.msra.mxu0 %v341
        %614 = vmatprep.subr.mxu0 %v345
        %615 = vmatpush1.msra.mxu0 %v344
        %616 = vmatprep.subr.mxu0 %v348
        %617 = vmatpush1.msra.mxu0 %v347
        %618 = vmatprep.subr.mxu0 %v351
        %619 = vmatpush1.msra.mxu0 %v350
        %620 = vmatprep.subr.mxu0 0.0
        %621 = vmatpush1.msra.mxu0 0.0
        %622 = vmatprep.subr.mxu0 0.0
        %623 = vmatpush1.msra.mxu0 0.0
        %624 = vmatprep.subr.mxu0 0.0
        %625 = vmatpush1.msra.mxu0 0.0
        %626 = vmatprep.subr.mxu0 0.0
        %627 = vmatpush1.msra.mxu0 0.0
        %628 = vmatprep.subr.mxu0 0.0
        %629 = vmatpush1.msra.mxu0 0.0
        %630 = vmatprep.subr.mxu0 0.0
        %631 = vmatpush1.msra.mxu0 0.0
        %632 = vmatprep.subr.mxu0 0.0
        %633 = vmatpush1.msra.mxu0 0.0
        %634 = vmatprep.subr.mxu0 0.0
        %635 = vmatpush1.msra.mxu0 0.0
        %636 = vmatprep.subr.mxu0 0.0
        %637 = vmatpush1.msra.mxu0 0.0
        %638 = vmatprep.subr.mxu0 0.0
        %639 = vmatpush1.msra.mxu0 0.0
        %640 = vmatprep.subr.mxu0 0.0
        %641 = vmatpush1.msra.mxu0 0.0
        %642 = vmatprep.subr.mxu0 0.0
        %643 = vmatpush1.msra.mxu0 0.0
        %644 = vmatprep.subr.mxu0 0.0
        %645 = vmatpush1.msra.mxu0 0.0
        %646 = vmatprep.subr.mxu0 0.0
        %647 = vmatpush1.msra.mxu0 0.0
        %648 = vmatprep.subr.mxu0 0.0
        %649 = vmatpush1.msra.mxu0 0.0
        %650 = vmatprep.subr.mxu0 0.0
        %651 = vmatpush1.msra.mxu0 0.0
        %652 = vmatprep.mubr.f32.mxu0 0.0
        %653 = vmatmul.mubr.f32.gmra.mrb[0].mxu0 %v583
        %v654 = vpop.f32.mrb[0].mxu0
        %v655 = vadd.f32 0.0, %v654
        %v656 = vpop.f32.mrb[0].mxu0
        %v657 = vadd.f32 0.0, %v656
        %658 = vdwg.mxu0
        %659 = vmatprep.subr.mxu0 0.0
        %660 = vmatpush1.msra.mxu0 %v307
        %661 = vmatprep.subr.mxu0 0.0
        %662 = vmatpush1.msra.mxu0 %v310
        %663 = vmatprep.subr.mxu0 0.0
        %664 = vmatpush1.msra.mxu0 %v313
        %665 = vmatprep.subr.mxu0 0.0
        %666 = vmatpush1.msra.mxu0 %v316
        %667 = vmatprep.subr.mxu0 0.0
        %668 = vmatpush1.msra.mxu0 %v319
        %669 = vmatprep.subr.mxu0 0.0
        %670 = vmatpush1.msra.mxu0 %v322
        %671 = vmatprep.subr.mxu0 0.0
        %672 = vmatpush1.msra.mxu0 %v325
        %673 = vmatprep.subr.mxu0 0.0
        %674 = vmatpush1.msra.mxu0 %v328
        %675 = vmatprep.subr.mxu0 0.0
        %676 = vmatpush1.msra.mxu0 %v331
        %677 = vmatprep.subr.mxu0 0.0
        %678 = vmatpush1.msra.mxu0 %v334
        %679 = vmatprep.subr.mxu0 0.0
        %680 = vmatpush1.msra.mxu0 %v337
        %681 = vmatprep.subr.mxu0 0.0
        %682 = vmatpush1.msra.mxu0 %v340
        %683 = vmatprep.subr.mxu0 0.0
        %684 = vmatpush1.msra.mxu0 %v343
        %685 = vmatprep.subr.mxu0 0.0
        %686 = vmatpush1.msra.mxu0 %v346
        %687 = vmatprep.subr.mxu0 0.0
        %688 = vmatpush1.msra.mxu0 %v349
        %689 = vmatprep.subr.mxu0 0.0
        %690 = vmatpush1.msra.mxu0 %v352
        %691 = vmatprep.subr.mxu0 0.0
        %692 = vmatpush1.msra.mxu0 0.0
        %693 = vmatprep.subr.mxu0 0.0
        %694 = vmatpush1.msra.mxu0 0.0
        %695 = vmatprep.subr.mxu0 0.0
        %696 = vmatpush1.msra.mxu0 0.0
        %697 = vmatprep.subr.mxu0 0.0
        %698 = vmatpush1.msra.mxu0 0.0
        %699 = vmatprep.subr.mxu0 0.0
        %700 = vmatpush1.msra.mxu0 0.0
        %701 = vmatprep.subr.mxu0 0.0
        %702 = vmatpush1.msra.mxu0 0.0
        %703 = vmatprep.subr.mxu0 0.0
        %704 = vmatpush1.msra.mxu0 0.0
        %705 = vmatprep.subr.mxu0 0.0
        %706 = vmatpush1.msra.mxu0 0.0
        %707 = vmatprep.subr.mxu0 0.0
        %708 = vmatpush1.msra.mxu0 0.0
        %709 = vmatprep.subr.mxu0 0.0
        %710 = vmatpush1.msra.mxu0 0.0
        %711 = vmatprep.subr.mxu0 0.0
        %712 = vmatpush1.msra.mxu0 0.0
        %713 = vmatprep.subr.mxu0 0.0
        %714 = vmatpush1.msra.mxu0 0.0
        %715 = vmatprep.subr.mxu0 0.0
        %716 = vmatpush1.msra.mxu0 0.0
        %717 = vmatprep.subr.mxu0 0.0
        %718 = vmatpush1.msra.mxu0 0.0
        %719 = vmatprep.subr.mxu0 0.0
        %720 = vmatpush1.msra.mxu0 0.0
        %721 = vmatprep.subr.mxu0 0.0
        %722 = vmatpush1.msra.mxu0 0.0
        %723 = vmatprep.mubr.f32.mxu0 0.0
        %724 = vmatmul.mubr.f32.gmra.mrb[0].mxu0 %v583
        %v725 = vpop.f32.mrb[0].mxu0
        %v726 = vadd.f32 0.0, %v725
        %v727 = vpop.f32.mrb[0].mxu0
        %728 = vdwg.mxu0
        %v729 = vadd.f32 %v585, %v655
        %v730 = vxor.u32 %v729, 2147483648
        %v731 = vmul.f32 %v730, 1.442695
        %v732 = vpow.pop %v731
        %v733 = vadd.f32 %v732, 1.0
        %v734 = vrcp.pop %v733
        %v735 = vmul.f32 1.0, %v734
        %v736 = vadd.f32 %v586, %v657
        %v737 = vxor.u32 %v736, 2147483648
        %v738 = vmul.f32 %v737, 1.442695
        %v739 = vpow.pop %v738
        %v740 = vadd.f32 %v739, 1.0
        %v741 = vrcp.pop %v740
        %v742 = vmul.f32 1.0, %v741
        %v743 = vadd.f32 %v726, %v566
        %v744 = vmul.f32 %v735, %v743
        %v745 = vadd.f32 %v587, %v744
        %v746 = vtanh.pop %v745
        %v747 = vsub.f32 1.0, %v742
        %v748 = vmul.f32 %v747, %v746
        %v749 = vmul.f32 %v742, %v583
        %v750 = vadd.f32 %v748, %v749
        %v751 = vsel %vm360, 1, 0
        %752 = vset.pattern.permute.xlu0 0
        %753 = vperm.xlu0 %752, %v751
        %v754 = vpop.permute.xlu0 %753
        %vm755 = vcmp.eq.s32.totalorder %v754, 1
        %v756 = vsel %vm755, %v750, 0.0
        %s757 = scalar_lea.vmem %s291, 8 [#allocation8]
        %758 = vst [vmem:[%s757] sm:$0xff] %v756
        %v759 = vsel %vm755, %v750, %v583
        %s760 = scalar_lea.vmem %s259, 48 [#allocation3]
        %v761 = vld [vmem:[%s760] sm:$0xff]
        %v762 = vld [vmem:[%s760 + $0x8] sm:$0xff]
        %v763 = vld [vmem:[%s760 + $0x10] sm:$0xff]
        %764 = vmatprep.subr.mxu0 %v306
        %765 = vmatpush1.msra.mxu0 %v305
        %766 = vmatprep.subr.mxu0 %v309
        %767 = vmatpush1.msra.mxu0 %v308
        %768 = vmatprep.subr.mxu0 %v312
        %769 = vmatpush1.msra.mxu0 %v311
        %770 = vmatprep.subr.mxu0 %v315
        %771 = vmatpush1.msra.mxu0 %v314
        %772 = vmatprep.subr.mxu0 %v318
        %773 = vmatpush1.msra.mxu0 %v317
        %774 = vmatprep.subr.mxu0 %v321
        %775 = vmatpush1.msra.mxu0 %v320
        %776 = vmatprep.subr.mxu0 %v324
        %777 = vmatpush1.msra.mxu0 %v323
        %778 = vmatprep.subr.mxu0 %v327
        %779 = vmatpush1.msra.mxu0 %v326
        %780 = vmatprep.subr.mxu0 %v330
        %781 = vmatpush1.msra.mxu0 %v329
        %782 = vmatprep.subr.mxu0 %v333
        %783 = vmatpush1.msra.mxu0 %v332
        %784 = vmatprep.subr.mxu0 %v336
        %785 = vmatpush1.msra.mxu0 %v335
        %786 = vmatprep.subr.mxu0 %v339
        %787 = vmatpush1.msra.mxu0 %v338
        %788 = vmatprep.subr.mxu0 %v342
        %789 = vmatpush1.msra.mxu0 %v341
        %790 = vmatprep.subr.mxu0 %v345
        %791 = vmatpush1.msra.mxu0 %v344
        %792 = vmatprep.subr.mxu0 %v348
        %793 = vmatpush1.msra.mxu0 %v347
        %794 = vmatprep.subr.mxu0 %v351
        %795 = vmatpush1.msra.mxu0 %v350
        %796 = vmatprep.subr.mxu0 0.0
        %797 = vmatpush1.msra.mxu0 0.0
        %798 = vmatprep.subr.mxu0 0.0
        %799 = vmatpush1.msra.mxu0 0.0
        %800 = vmatprep.subr.mxu0 0.0
        %801 = vmatpush1.msra.mxu0 0.0
        %802 = vmatprep.subr.mxu0 0.0
        %803 = vmatpush1.msra.mxu0 0.0
        %804 = vmatprep.subr.mxu0 0.0
        %805 = vmatpush1.msra.mxu0 0.0
        %806 = vmatprep.subr.mxu0 0.0
        %807 = vmatpush1.msra.mxu0 0.0
        %808 = vmatprep.subr.mxu0 0.0
        %809 = vmatpush1.msra.mxu0 0.0
        %810 = vmatprep.subr.mxu0 0.0
        %811 = vmatpush1.msra.mxu0 0.0
        %812 = vmatprep.subr.mxu0 0.0
        %813 = vmatpush1.msra.mxu0 0.0
        %814 = vmatprep.subr.mxu0 0.0
        %815 = vmatpush1.msra.mxu0 0.0
        %816 = vmatprep.subr.mxu0 0.0
        %817 = vmatpush1.msra.mxu0 0.0
        %818 = vmatprep.subr.mxu0 0.0
        %819 = vmatpush1.msra.mxu0 0.0
        %820 = vmatprep.subr.mxu0 0.0
        %821 = vmatpush1.msra.mxu0 0.0
        %822 = vmatprep.subr.mxu0 0.0
        %823 = vmatpush1.msra.mxu0 0.0
        %824 = vmatprep.subr.mxu0 0.0
        %825 = vmatpush1.msra.mxu0 0.0
        %826 = vmatprep.subr.mxu0 0.0
        %827 = vmatpush1.msra.mxu0 0.0
        %828 = vmatprep.mubr.f32.mxu0 0.0
        %829 = vmatmul.mubr.f32.gmra.mrb[0].mxu0 %v759
        %v830 = vpop.f32.mrb[0].mxu0
        %v831 = vadd.f32 0.0, %v830
        %v832 = vpop.f32.mrb[0].mxu0
        %v833 = vadd.f32 0.0, %v832
        %834 = vdwg.mxu0
        %835 = vmatprep.subr.mxu0 0.0
        %836 = vmatpush1.msra.mxu0 %v307
        %837 = vmatprep.subr.mxu0 0.0
        %838 = vmatpush1.msra.mxu0 %v310
        %839 = vmatprep.subr.mxu0 0.0
        %840 = vmatpush1.msra.mxu0 %v313
        %841 = vmatprep.subr.mxu0 0.0
        %842 = vmatpush1.msra.mxu0 %v316
        %843 = vmatprep.subr.mxu0 0.0
        %844 = vmatpush1.msra.mxu0 %v319
        %845 = vmatprep.subr.mxu0 0.0
        %846 = vmatpush1.msra.mxu0 %v322
        %847 = vmatprep.subr.mxu0 0.0
        %848 = vmatpush1.msra.mxu0 %v325
        %849 = vmatprep.subr.mxu0 0.0
        %850 = vmatpush1.msra.mxu0 %v328
        %851 = vmatprep.subr.mxu0 0.0
        %852 = vmatpush1.msra.mxu0 %v331
        %853 = vmatprep.subr.mxu0 0.0
        %854 = vmatpush1.msra.mxu0 %v334
        %855 = vmatprep.subr.mxu0 0.0
        %856 = vmatpush1.msra.mxu0 %v337
        %857 = vmatprep.subr.mxu0 0.0
        %858 = vmatpush1.msra.mxu0 %v340
        %859 = vmatprep.subr.mxu0 0.0
        %860 = vmatpush1.msra.mxu0 %v343
        %861 = vmatprep.subr.mxu0 0.0
        %862 = vmatpush1.msra.mxu0 %v346
        %863 = vmatprep.subr.mxu0 0.0
        %864 = vmatpush1.msra.mxu0 %v349
        %865 = vmatprep.subr.mxu0 0.0
        %866 = vmatpush1.msra.mxu0 %v352
        %867 = vmatprep.subr.mxu0 0.0
        %868 = vmatpush1.msra.mxu0 0.0
        %869 = vmatprep.subr.mxu0 0.0
        %870 = vmatpush1.msra.mxu0 0.0
        %871 = vmatprep.subr.mxu0 0.0
        %872 = vmatpush1.msra.mxu0 0.0
        %873 = vmatprep.subr.mxu0 0.0
        %874 = vmatpush1.msra.mxu0 0.0
        %875 = vmatprep.subr.mxu0 0.0
        %876 = vmatpush1.msra.mxu0 0.0
        %877 = vmatprep.subr.mxu0 0.0
        %878 = vmatpush1.msra.mxu0 0.0
        %879 = vmatprep.subr.mxu0 0.0
        %880 = vmatpush1.msra.mxu0 0.0
        %881 = vmatprep.subr.mxu0 0.0
        %882 = vmatpush1.msra.mxu0 0.0
        %883 = vmatprep.subr.mxu0 0.0
        %884 = vmatpush1.msra.mxu0 0.0
        %885 = vmatprep.subr.mxu0 0.0
        %886 = vmatpush1.msra.mxu0 0.0
        %887 = vmatprep.subr.mxu0 0.0
        %888 = vmatpush1.msra.mxu0 0.0
        %889 = vmatprep.subr.mxu0 0.0
        %890 = vmatpush1.msra.mxu0 0.0
        %891 = vmatprep.subr.mxu0 0.0
        %892 = vmatpush1.msra.mxu0 0.0
        %893 = vmatprep.subr.mxu0 0.0
        %894 = vmatpush1.msra.mxu0 0.0
        %895 = vmatprep.subr.mxu0 0.0
        %896 = vmatpush1.msra.mxu0 0.0
        %897 = vmatprep.subr.mxu0 0.0
        %898 = vmatpush1.msra.mxu0 0.0
        %899 = vmatprep.mubr.f32.mxu0 0.0
        %900 = vmatmul.mubr.f32.gmra.mrb[0].mxu0 %v759
        %v901 = vpop.f32.mrb[0].mxu0
        %v902 = vadd.f32 0.0, %v901
        %v903 = vpop.f32.mrb[0].mxu0
        %904 = vdwg.mxu0
        %v905 = vadd.f32 %v761, %v831
        %v906 = vxor.u32 %v905, 2147483648
        %v907 = vmul.f32 %v906, 1.442695
        %v908 = vpow.pop %v907
        %v909 = vadd.f32 %v908, 1.0
        %v910 = vrcp.pop %v909
        %v911 = vmul.f32 1.0, %v910
        %v912 = vadd.f32 %v762, %v833
        %v913 = vxor.u32 %v912, 2147483648
        %v914 = vmul.f32 %v913, 1.442695
        %v915 = vpow.pop %v914
        %v916 = vadd.f32 %v915, 1.0
        %v917 = vrcp.pop %v916
        %v918 = vmul.f32 1.0, %v917
        %v919 = vadd.f32 %v902, %v566
        %v920 = vmul.f32 %v911, %v919
        %v921 = vadd.f32 %v763, %v920
        %v922 = vtanh.pop %v921
        %v923 = vsub.f32 1.0, %v918
        %v924 = vmul.f32 %v923, %v922
        %v925 = vmul.f32 %v918, %v759
        %v926 = vadd.f32 %v924, %v925
        %v927 = vsel %vm363, 1, 0
        %928 = vset.pattern.permute.xlu0 0
        %929 = vperm.xlu0 %928, %v927
        %v930 = vpop.permute.xlu0 %929
        %vm931 = vcmp.eq.s32.totalorder %v930, 1
        %v932 = vsel %vm931, %v926, 0.0
        %s933 = scalar_lea.vmem %s291, 16 [#allocation8]
        %934 = vst [vmem:[%s933] sm:$0xff] %v932
        %v935 = vsel %vm931, %v926, %v759
        %s936 = scalar_lea.vmem %s259, 72 [#allocation3]
        %v937 = vld [vmem:[%s936] sm:$0xff]
        %v938 = vld [vmem:[%s936 + $0x8] sm:$0xff]
        %v939 = vld [vmem:[%s936 + $0x10] sm:$0xff]
        %940 = vmatprep.subr.mxu0 %v306
        %941 = vmatpush1.msra.mxu0 %v305
        %942 = vmatprep.subr.mxu0 %v309
        %943 = vmatpush1.msra.mxu0 %v308
        %944 = vmatprep.subr.mxu0 %v312
        %945 = vmatpush1.msra.mxu0 %v311
        %946 = vmatprep.subr.mxu0 %v315
        %947 = vmatpush1.msra.mxu0 %v314
        %948 = vmatprep.subr.mxu0 %v318
        %949 = vmatpush1.msra.mxu0 %v317
        %950 = vmatprep.subr.mxu0 %v321
        %951 = vmatpush1.msra.mxu0 %v320
        %952 = vmatprep.subr.mxu0 %v324
        %953 = vmatpush1.msra.mxu0 %v323
        %954 = vmatprep.subr.mxu0 %v327
        %955 = vmatpush1.msra.mxu0 %v326
        %956 = vmatprep.subr.mxu0 %v330
        %957 = vmatpush1.msra.mxu0 %v329
        %958 = vmatprep.subr.mxu0 %v333
        %959 = vmatpush1.msra.mxu0 %v332
        %960 = vmatprep.subr.mxu0 %v336
        %961 = vmatpush1.msra.mxu0 %v335
        %962 = vmatprep.subr.mxu0 %v339
        %963 = vmatpush1.msra.mxu0 %v338
        %964 = vmatprep.subr.mxu0 %v342
        %965 = vmatpush1.msra.mxu0 %v341
        %966 = vmatprep.subr.mxu0 %v345
        %967 = vmatpush1.msra.mxu0 %v344
        %968 = vmatprep.subr.mxu0 %v348
        %969 = vmatpush1.msra.mxu0 %v347
        %970 = vmatprep.subr.mxu0 %v351
        %971 = vmatpush1.msra.mxu0 %v350
        %972 = vmatprep.subr.mxu0 0.0
        %973 = vmatpush1.msra.mxu0 0.0
        %974 = vmatprep.subr.mxu0 0.0
        %975 = vmatpush1.msra.mxu0 0.0
        %976 = vmatprep.subr.mxu0 0.0
        %977 = vmatpush1.msra.mxu0 0.0
        %978 = vmatprep.subr.mxu0 0.0
        %979 = vmatpush1.msra.mxu0 0.0
        %980 = vmatprep.subr.mxu0 0.0
        %981 = vmatpush1.msra.mxu0 0.0
        %982 = vmatprep.subr.mxu0 0.0
        %983 = vmatpush1.msra.mxu0 0.0
        %984 = vmatprep.subr.mxu0 0.0
        %985 = vmatpush1.msra.mxu0 0.0
        %986 = vmatprep.subr.mxu0 0.0
        %987 = vmatpush1.msra.mxu0 0.0
        %988 = vmatprep.subr.mxu0 0.0
        %989 = vmatpush1.msra.mxu0 0.0
        %990 = vmatprep.subr.mxu0 0.0
        %991 = vmatpush1.msra.mxu0 0.0
        %992 = vmatprep.subr.mxu0 0.0
        %993 = vmatpush1.msra.mxu0 0.0
        %994 = vmatprep.subr.mxu0 0.0
        %995 = vmatpush1.msra.mxu0 0.0
        %996 = vmatprep.subr.mxu0 0.0
        %997 = vmatpush1.msra.mxu0 0.0
        %998 = vmatprep.subr.mxu0 0.0
        %999 = vmatpush1.msra.mxu0 0.0
        %1000 = vmatprep.subr.mxu0 0.0
        %1001 = vmatpush1.msra.mxu0 0.0
        %1002 = vmatprep.subr.mxu0 0.0
        %1003 = vmatpush1.msra.mxu0 0.0
        %1004 = vmatprep.mubr.f32.mxu0 0.0
        %1005 = vmatmul.mubr.f32.gmra.mrb[0].mxu0 %v935
        %v1006 = vpop.f32.mrb[0].mxu0
        %v1007 = vadd.f32 0.0, %v1006
        %v1008 = vpop.f32.mrb[0].mxu0
        %v1009 = vadd.f32 0.0, %v1008
        %1010 = vdwg.mxu0
        %1011 = vmatprep.subr.mxu0 0.0
        %1012 = vmatpush1.msra.mxu0 %v307
        %1013 = vmatprep.subr.mxu0 0.0
        %1014 = vmatpush1.msra.mxu0 %v310
        %1015 = vmatprep.subr.mxu0 0.0
        %1016 = vmatpush1.msra.mxu0 %v313
        %1017 = vmatprep.subr.mxu0 0.0
        %1018 = vmatpush1.msra.mxu0 %v316
        %1019 = vmatprep.subr.mxu0 0.0
        %1020 = vmatpush1.msra.mxu0 %v319
        %1021 = vmatprep.subr.mxu0 0.0
        %1022 = vmatpush1.msra.mxu0 %v322
        %1023 = vmatprep.subr.mxu0 0.0
        %1024 = vmatpush1.msra.mxu0 %v325
        %1025 = vmatprep.subr.mxu0 0.0
        %1026 = vmatpush1.msra.mxu0 %v328
        %1027 = vmatprep.subr.mxu0 0.0
        %1028 = vmatpush1.msra.mxu0 %v331
        %1029 = vmatprep.subr.mxu0 0.0
        %1030 = vmatpush1.msra.mxu0 %v334
        %1031 = vmatprep.subr.mxu0 0.0
        %1032 = vmatpush1.msra.mxu0 %v337
        %1033 = vmatprep.subr.mxu0 0.0
        %1034 = vmatpush1.msra.mxu0 %v340
        %1035 = vmatprep.subr.mxu0 0.0
        %1036 = vmatpush1.msra.mxu0 %v343
        %1037 = vmatprep.subr.mxu0 0.0
        %1038 = vmatpush1.msra.mxu0 %v346
        %1039 = vmatprep.subr.mxu0 0.0
        %1040 = vmatpush1.msra.mxu0 %v349
        %1041 = vmatprep.subr.mxu0 0.0
        %1042 = vmatpush1.msra.mxu0 %v352
        %1043 = vmatprep.subr.mxu0 0.0
        %1044 = vmatpush1.msra.mxu0 0.0
        %1045 = vmatprep.subr.mxu0 0.0
        %1046 = vmatpush1.msra.mxu0 0.0
        %1047 = vmatprep.subr.mxu0 0.0
        %1048 = vmatpush1.msra.mxu0 0.0
        %1049 = vmatprep.subr.mxu0 0.0
        %1050 = vmatpush1.msra.mxu0 0.0
        %1051 = vmatprep.subr.mxu0 0.0
        %1052 = vmatpush1.msra.mxu0 0.0
        %1053 = vmatprep.subr.mxu0 0.0
        %1054 = vmatpush1.msra.mxu0 0.0
        %1055 = vmatprep.subr.mxu0 0.0
        %1056 = vmatpush1.msra.mxu0 0.0
        %1057 = vmatprep.subr.mxu0 0.0
        %1058 = vmatpush1.msra.mxu0 0.0
        %1059 = vmatprep.subr.mxu0 0.0
        %1060 = vmatpush1.msra.mxu0 0.0
        %1061 = vmatprep.subr.mxu0 0.0
        %1062 = vmatpush1.msra.mxu0 0.0
        %1063 = vmatprep.subr.mxu0 0.0
        %1064 = vmatpush1.msra.mxu0 0.0
        %1065 = vmatprep.subr.mxu0 0.0
        %1066 = vmatpush1.msra.mxu0 0.0
        %1067 = vmatprep.subr.mxu0 0.0
        %1068 = vmatpush1.msra.mxu0 0.0
        %1069 = vmatprep.subr.mxu0 0.0
        %1070 = vmatpush1.msra.mxu0 0.0
        %1071 = vmatprep.subr.mxu0 0.0
        %1072 = vmatpush1.msra.mxu0 0.0
        %1073 = vmatprep.subr.mxu0 0.0
        %1074 = vmatpush1.msra.mxu0 0.0
        %1075 = vmatprep.mubr.f32.mxu0 0.0
        %1076 = vmatmul.mubr.f32.gmra.mrb[0].mxu0 %v935
        %v1077 = vpop.f32.mrb[0].mxu0
        %v1078 = vadd.f32 0.0, %v1077
        %v1079 = vpop.f32.mrb[0].mxu0
        %1080 = vdwg.mxu0
        %v1081 = vadd.f32 %v937, %v1007
        %v1082 = vxor.u32 %v1081, 2147483648
        %v1083 = vmul.f32 %v1082, 1.442695
        %v1084 = vpow.pop %v1083
        %v1085 = vadd.f32 %v1084, 1.0
        %v1086 = vrcp.pop %v1085
        %v1087 = vmul.f32 1.0, %v1086
        %v1088 = vadd.f32 %v938, %v1009
        %v1089 = vxor.u32 %v1088, 2147483648
        %v1090 = vmul.f32 %v1089, 1.442695
        %v1091 = vpow.pop %v1090
        %v1092 = vadd.f32 %v1091, 1.0
        %v1093 = vrcp.pop %v1092
        %v1094 = vmul.f32 1.0, %v1093
        %v1095 = vadd.f32 %v1078, %v566
        %v1096 = vmul.f32 %v1087, %v1095
        %v1097 = vadd.f32 %v939, %v1096
        %v1098 = vtanh.pop %v1097
        %v1099 = vsub.f32 1.0, %v1094
        %v1100 = vmul.f32 %v1099, %v1098
        %v1101 = vmul.f32 %v1094, %v935
        %v1102 = vadd.f32 %v1100, %v1101
        %v1103 = vsel %vm366, 1, 0
        %1104 = vset.pattern.permute.xlu0 0
        %1105 = vperm.xlu0 %1104, %v1103
        %v1106 = vpop.permute.xlu0 %1105
        %vm1107 = vcmp.eq.s32.totalorder %v1106, 1
        %v1108 = vsel %vm1107, %v1102, 0.0
        %s1109 = scalar_lea.vmem %s291, 24 [#allocation8]
        %1110 = vst [vmem:[%s1109] sm:$0xff] %v1108
        %v1111 = vsel %vm1107, %v1102, %v935
        %s1112 = scalar_lea.vmem %s259, 96 [#allocation3]
        %v1113 = vld [vmem:[%s1112] sm:$0xff]
        %v1114 = vld [vmem:[%s1112 + $0x8] sm:$0xff]
        %v1115 = vld [vmem:[%s1112 + $0x10] sm:$0xff]
        %1116 = vmatprep.subr.mxu0 %v306
        %1117 = vmatpush1.msra.mxu0 %v305
        %1118 = vmatprep.subr.mxu0 %v309
        %1119 = vmatpush1.msra.mxu0 %v308
        %1120 = vmatprep.subr.mxu0 %v312
        %1121 = vmatpush1.msra.mxu0 %v311
        %1122 = vmatprep.subr.mxu0 %v315
        %1123 = vmatpush1.msra.mxu0 %v314
        %1124 = vmatprep.subr.mxu0 %v318
        %1125 = vmatpush1.msra.mxu0 %v317
        %1126 = vmatprep.subr.mxu0 %v321
        %1127 = vmatpush1.msra.mxu0 %v320
        %1128 = vmatprep.subr.mxu0 %v324
        %1129 = vmatpush1.msra.mxu0 %v323
        %1130 = vmatprep.subr.mxu0 %v327
        %1131 = vmatpush1.msra.mxu0 %v326
        %1132 = vmatprep.subr.mxu0 %v330
        %1133 = vmatpush1.msra.mxu0 %v329
        %1134 = vmatprep.subr.mxu0 %v333
        %1135 = vmatpush1.msra.mxu0 %v332
        %1136 = vmatprep.subr.mxu0 %v336
        %1137 = vmatpush1.msra.mxu0 %v335
        %1138 = vmatprep.subr.mxu0 %v339
        %1139 = vmatpush1.msra.mxu0 %v338
        %1140 = vmatprep.subr.mxu0 %v342
        %1141 = vmatpush1.msra.mxu0 %v341
        %1142 = vmatprep.subr.mxu0 %v345
        %1143 = vmatpush1.msra.mxu0 %v344
        %1144 = vmatprep.subr.mxu0 %v348
        %1145 = vmatpush1.msra.mxu0 %v347
        %1146 = vmatprep.subr.mxu0 %v351
        %1147 = vmatpush1.msra.mxu0 %v350
        %1148 = vmatprep.subr.mxu0 0.0
        %1149 = vmatpush1.msra.mxu0 0.0
        %1150 = vmatprep.subr.mxu0 0.0
        %1151 = vmatpush1.msra.mxu0 0.0
        %1152 = vmatprep.subr.mxu0 0.0
        %1153 = vmatpush1.msra.mxu0 0.0
        %1154 = vmatprep.subr.mxu0 0.0
        %1155 = vmatpush1.msra.mxu0 0.0
        %1156 = vmatprep.subr.mxu0 0.0
        %1157 = vmatpush1.msra.mxu0 0.0
        %1158 = vmatprep.subr.mxu0 0.0
        %1159 = vmatpush1.msra.mxu0 0.0
        %1160 = vmatprep.subr.mxu0 0.0
        %1161 = vmatpush1.msra.mxu0 0.0
        %1162 = vmatprep.subr.mxu0 0.0
        %1163 = vmatpush1.msra.mxu0 0.0
        %1164 = vmatprep.subr.mxu0 0.0
        %1165 = vmatpush1.msra.mxu0 0.0
        %1166 = vmatprep.subr.mxu0 0.0
        %1167 = vmatpush1.msra.mxu0 0.0
        %1168 = vmatprep.subr.mxu0 0.0
        %1169 = vmatpush1.msra.mxu0 0.0
        %1170 = vmatprep.subr.mxu0 0.0
        %1171 = vmatpush1.msra.mxu0 0.0
        %1172 = vmatprep.subr.mxu0 0.0
        %1173 = vmatpush1.msra.mxu0 0.0
        %1174 = vmatprep.subr.mxu0 0.0
        %1175 = vmatpush1.msra.mxu0 0.0
        %1176 = vmatprep.subr.mxu0 0.0
        %1177 = vmatpush1.msra.mxu0 0.0
        %1178 = vmatprep.subr.mxu0 0.0
        %1179 = vmatpush1.msra.mxu0 0.0
        %1180 = vmatprep.mubr.f32.mxu0 0.0
        %1181 = vmatmul.mubr.f32.gmra.mrb[0].mxu0 %v1111
        %v1182 = vpop.f32.mrb[0].mxu0
        %v1183 = vadd.f32 0.0, %v1182
        %v1184 = vpop.f32.mrb[0].mxu0
        %v1185 = vadd.f32 0.0, %v1184
        %1186 = vdwg.mxu0
        %1187 = vmatprep.subr.mxu0 0.0
        %1188 = vmatpush1.msra.mxu0 %v307
        %1189 = vmatprep.subr.mxu0 0.0
        %1190 = vmatpush1.msra.mxu0 %v310
        %1191 = vmatprep.subr.mxu0 0.0
        %1192 = vmatpush1.msra.mxu0 %v313
        %1193 = vmatprep.subr.mxu0 0.0
        %1194 = vmatpush1.msra.mxu0 %v316
        %1195 = vmatprep.subr.mxu0 0.0
        %1196 = vmatpush1.msra.mxu0 %v319
        %1197 = vmatprep.subr.mxu0 0.0
        %1198 = vmatpush1.msra.mxu0 %v322
        %1199 = vmatprep.subr.mxu0 0.0
        %1200 = vmatpush1.msra.mxu0 %v325
        %1201 = vmatprep.subr.mxu0 0.0
        %1202 = vmatpush1.msra.mxu0 %v328
        %1203 = vmatprep.subr.mxu0 0.0
        %1204 = vmatpush1.msra.mxu0 %v331
        %1205 = vmatprep.subr.mxu0 0.0
        %1206 = vmatpush1.msra.mxu0 %v334
        %1207 = vmatprep.subr.mxu0 0.0
        %1208 = vmatpush1.msra.mxu0 %v337
        %1209 = vmatprep.subr.mxu0 0.0
        %1210 = vmatpush1.msra.mxu0 %v340
        %1211 = vmatprep.subr.mxu0 0.0
        %1212 = vmatpush1.msra.mxu0 %v343
        %1213 = vmatprep.subr.mxu0 0.0
        %1214 = vmatpush1.msra.mxu0 %v346
        %1215 = vmatprep.subr.mxu0 0.0
        %1216 = vmatpush1.msra.mxu0 %v349
        %1217 = vmatprep.subr.mxu0 0.0
        %1218 = vmatpush1.msra.mxu0 %v352
        %1219 = vmatprep.subr.mxu0 0.0
        %1220 = vmatpush1.msra.mxu0 0.0
        %1221 = vmatprep.subr.mxu0 0.0
        %1222 = vmatpush1.msra.mxu0 0.0
        %1223 = vmatprep.subr.mxu0 0.0
        %1224 = vmatpush1.msra.mxu0 0.0
        %1225 = vmatprep.subr.mxu0 0.0
        %1226 = vmatpush1.msra.mxu0 0.0
        %1227 = vmatprep.subr.mxu0 0.0
        %1228 = vmatpush1.msra.mxu0 0.0
        %1229 = vmatprep.subr.mxu0 0.0
        %1230 = vmatpush1.msra.mxu0 0.0
        %1231 = vmatprep.subr.mxu0 0.0
        %1232 = vmatpush1.msra.mxu0 0.0
        %1233 = vmatprep.subr.mxu0 0.0
        %1234 = vmatpush1.msra.mxu0 0.0
        %1235 = vmatprep.subr.mxu0 0.0
        %1236 = vmatpush1.msra.mxu0 0.0
        %1237 = vmatprep.subr.mxu0 0.0
        %1238 = vmatpush1.msra.mxu0 0.0
        %1239 = vmatprep.subr.mxu0 0.0
        %1240 = vmatpush1.msra.mxu0 0.0
        %1241 = vmatprep.subr.mxu0 0.0
        %1242 = vmatpush1.msra.mxu0 0.0
        %1243 = vmatprep.subr.mxu0 0.0
        %1244 = vmatpush1.msra.mxu0 0.0
        %1245 = vmatprep.subr.mxu0 0.0
        %1246 = vmatpush1.msra.mxu0 0.0
        %1247 = vmatprep.subr.mxu0 0.0
        %1248 = vmatpush1.msra.mxu0 0.0
        %1249 = vmatprep.subr.mxu0 0.0
        %1250 = vmatpush1.msra.mxu0 0.0
        %1251 = vmatprep.mubr.f32.mxu0 0.0
        %1252 = vmatmul.mubr.f32.gmra.mrb[0].mxu0 %v1111
        %v1253 = vpop.f32.mrb[0].mxu0
        %v1254 = vadd.f32 0.0, %v1253
        %v1255 = vpop.f32.mrb[0].mxu0
        %1256 = vdwg.mxu0
        %v1257 = vadd.f32 %v1113, %v1183
        %v1258 = vxor.u32 %v1257, 2147483648
        %v1259 = vmul.f32 %v1258, 1.442695
        %v1260 = vpow.pop %v1259
        %v1261 = vadd.f32 %v1260, 1.0
        %v1262 = vrcp.pop %v1261
        %v1263 = vmul.f32 1.0, %v1262
        %v1264 = vadd.f32 %v1114, %v1185
        %v1265 = vxor.u32 %v1264, 2147483648
        %v1266 = vmul.f32 %v1265, 1.442695
        %v1267 = vpow.pop %v1266
        %v1268 = vadd.f32 %v1267, 1.0
        %v1269 = vrcp.pop %v1268
        %v1270 = vmul.f32 1.0, %v1269
        %v1271 = vadd.f32 %v1254, %v566
        %v1272 = vmul.f32 %v1263, %v1271
        %v1273 = vadd.f32 %v1115, %v1272
        %v1274 = vtanh.pop %v1273
        %v1275 = vsub.f32 1.0, %v1270
        %v1276 = vmul.f32 %v1275, %v1274
        %v1277 = vmul.f32 %v1270, %v1111
        %v1278 = vadd.f32 %v1276, %v1277
        %v1279 = vsel %vm369, 1, 0
        %1280 = vset.pattern.permute.xlu0 0
        %1281 = vperm.xlu0 %1280, %v1279
        %v1282 = vpop.permute.xlu0 %1281
        %vm1283 = vcmp.eq.s32.totalorder %v1282, 1
        %v1284 = vsel %vm1283, %v1278, 0.0
        %s1285 = scalar_lea.vmem %s291, 32 [#allocation8]
        %1286 = vst [vmem:[%s1285] sm:$0xff] %v1284
        %v1287 = vsel %vm1283, %v1278, %v1111
        %s1288 = scalar_lea.vmem %s259, 120 [#allocation3]
        %v1289 = vld [vmem:[%s1288] sm:$0xff]
        %v1290 = vld [vmem:[%s1288 + $0x8] sm:$0xff]
        %v1291 = vld [vmem:[%s1288 + $0x10] sm:$0xff]
        %1292 = vmatprep.subr.mxu0 %v306
        %1293 = vmatpush1.msra.mxu0 %v305
        %1294 = vmatprep.subr.mxu0 %v309
        %1295 = vmatpush1.msra.mxu0 %v308
        %1296 = vmatprep.subr.mxu0 %v312
        %1297 = vmatpush1.msra.mxu0 %v311
        %1298 = vmatprep.subr.mxu0 %v315
        %1299 = vmatpush1.msra.mxu0 %v314
        %1300 = vmatprep.subr.mxu0 %v318
        %1301 = vmatpush1.msra.mxu0 %v317
        %1302 = vmatprep.subr.mxu0 %v321
        %1303 = vmatpush1.msra.mxu0 %v320
        %1304 = vmatprep.subr.mxu0 %v324
        %1305 = vmatpush1.msra.mxu0 %v323
        %1306 = vmatprep.subr.mxu0 %v327
        %1307 = vmatpush1.msra.mxu0 %v326
        %1308 = vmatprep.subr.mxu0 %v330
        %1309 = vmatpush1.msra.mxu0 %v329
        %1310 = vmatprep.subr.mxu0 %v333
        %1311 = vmatpush1.msra.mxu0 %v332
        %1312 = vmatprep.subr.mxu0 %v336
        %1313 = vmatpush1.msra.mxu0 %v335
        %1314 = vmatprep.subr.mxu0 %v339
        %1315 = vmatpush1.msra.mxu0 %v338
        %1316 = vmatprep.subr.mxu0 %v342
        %1317 = vmatpush1.msra.mxu0 %v341
        %1318 = vmatprep.subr.mxu0 %v345
        %1319 = vmatpush1.msra.mxu0 %v344
        %1320 = vmatprep.subr.mxu0 %v348
        %1321 = vmatpush1.msra.mxu0 %v347
        %1322 = vmatprep.subr.mxu0 %v351
        %1323 = vmatpush1.msra.mxu0 %v350
        %1324 = vmatprep.subr.mxu0 0.0
        %1325 = vmatpush1.msra.mxu0 0.0
        %1326 = vmatprep.subr.mxu0 0.0
        %1327 = vmatpush1.msra.mxu0 0.0
        %1328 = vmatprep.subr.mxu0 0.0
        %1329 = vmatpush1.msra.mxu0 0.0
        %1330 = vmatprep.subr.mxu0 0.0
        %1331 = vmatpush1.msra.mxu0 0.0
        %1332 = vmatprep.subr.mxu0 0.0
        %1333 = vmatpush1.msra.mxu0 0.0
        %1334 = vmatprep.subr.mxu0 0.0
        %1335 = vmatpush1.msra.mxu0 0.0
        %1336 = vmatprep.subr.mxu0 0.0
        %1337 = vmatpush1.msra.mxu0 0.0
        %1338 = vmatprep.subr.mxu0 0.0
        %1339 = vmatpush1.msra.mxu0 0.0
        %1340 = vmatprep.subr.mxu0 0.0
        %1341 = vmatpush1.msra.mxu0 0.0
        %1342 = vmatprep.subr.mxu0 0.0
        %1343 = vmatpush1.msra.mxu0 0.0
        %1344 = vmatprep.subr.mxu0 0.0
        %1345 = vmatpush1.msra.mxu0 0.0
        %1346 = vmatprep.subr.mxu0 0.0
        %1347 = vmatpush1.msra.mxu0 0.0
        %1348 = vmatprep.subr.mxu0 0.0
        %1349 = vmatpush1.msra.mxu0 0.0
        %1350 = vmatprep.subr.mxu0 0.0
        %1351 = vmatpush1.msra.mxu0 0.0
        %1352 = vmatprep.subr.mxu0 0.0
        %1353 = vmatpush1.msra.mxu0 0.0
        %1354 = vmatprep.subr.mxu0 0.0
        %1355 = vmatpush1.msra.mxu0 0.0
        %1356 = vmatprep.mubr.f32.mxu0 0.0
        %1357 = vmatmul.mubr.f32.gmra.mrb[0].mxu0 %v1287
        %v1358 = vpop.f32.mrb[0].mxu0
        %v1359 = vadd.f32 0.0, %v1358
        %v1360 = vpop.f32.mrb[0].mxu0
        %v1361 = vadd.f32 0.0, %v1360
        %1362 = vdwg.mxu0
        %1363 = vmatprep.subr.mxu0 0.0
        %1364 = vmatpush1.msra.mxu0 %v307
        %1365 = vmatprep.subr.mxu0 0.0
        %1366 = vmatpush1.msra.mxu0 %v310
        %1367 = vmatprep.subr.mxu0 0.0
        %1368 = vmatpush1.msra.mxu0 %v313
        %1369 = vmatprep.subr.mxu0 0.0
        %1370 = vmatpush1.msra.mxu0 %v316
        %1371 = vmatprep.subr.mxu0 0.0
        %1372 = vmatpush1.msra.mxu0 %v319
        %1373 = vmatprep.subr.mxu0 0.0
        %1374 = vmatpush1.msra.mxu0 %v322
        %1375 = vmatprep.subr.mxu0 0.0
        %1376 = vmatpush1.msra.mxu0 %v325
        %1377 = vmatprep.subr.mxu0 0.0
        %1378 = vmatpush1.msra.mxu0 %v328
        %1379 = vmatprep.subr.mxu0 0.0
        %1380 = vmatpush1.msra.mxu0 %v331
        %1381 = vmatprep.subr.mxu0 0.0
        %1382 = vmatpush1.msra.mxu0 %v334
        %1383 = vmatprep.subr.mxu0 0.0
        %1384 = vmatpush1.msra.mxu0 %v337
        %1385 = vmatprep.subr.mxu0 0.0
        %1386 = vmatpush1.msra.mxu0 %v340
        %1387 = vmatprep.subr.mxu0 0.0
        %1388 = vmatpush1.msra.mxu0 %v343
        %1389 = vmatprep.subr.mxu0 0.0
        %1390 = vmatpush1.msra.mxu0 %v346
        %1391 = vmatprep.subr.mxu0 0.0
        %1392 = vmatpush1.msra.mxu0 %v349
        %1393 = vmatprep.subr.mxu0 0.0
        %1394 = vmatpush1.msra.mxu0 %v352
        %1395 = vmatprep.subr.mxu0 0.0
        %1396 = vmatpush1.msra.mxu0 0.0
        %1397 = vmatprep.subr.mxu0 0.0
        %1398 = vmatpush1.msra.mxu0 0.0
        %1399 = vmatprep.subr.mxu0 0.0
        %1400 = vmatpush1.msra.mxu0 0.0
        %1401 = vmatprep.subr.mxu0 0.0
        %1402 = vmatpush1.msra.mxu0 0.0
        %1403 = vmatprep.subr.mxu0 0.0
        %1404 = vmatpush1.msra.mxu0 0.0
        %1405 = vmatprep.subr.mxu0 0.0
        %1406 = vmatpush1.msra.mxu0 0.0
        %1407 = vmatprep.subr.mxu0 0.0
        %1408 = vmatpush1.msra.mxu0 0.0
        %1409 = vmatprep.subr.mxu0 0.0
        %1410 = vmatpush1.msra.mxu0 0.0
        %1411 = vmatprep.subr.mxu0 0.0
        %1412 = vmatpush1.msra.mxu0 0.0
        %1413 = vmatprep.subr.mxu0 0.0
        %1414 = vmatpush1.msra.mxu0 0.0
        %1415 = vmatprep.subr.mxu0 0.0
        %1416 = vmatpush1.msra.mxu0 0.0
        %1417 = vmatprep.subr.mxu0 0.0
        %1418 = vmatpush1.msra.mxu0 0.0
        %1419 = vmatprep.subr.mxu0 0.0
        %1420 = vmatpush1.msra.mxu0 0.0
        %1421 = vmatprep.subr.mxu0 0.0
        %1422 = vmatpush1.msra.mxu0 0.0
        %1423 = vmatprep.subr.mxu0 0.0
        %1424 = vmatpush1.msra.mxu0 0.0
        %1425 = vmatprep.subr.mxu0 0.0
        %1426 = vmatpush1.msra.mxu0 0.0
        %1427 = vmatprep.mubr.f32.mxu0 0.0
        %1428 = vmatmul.mubr.f32.gmra.mrb[0].mxu0 %v1287
        %v1429 = vpop.f32.mrb[0].mxu0
        %v1430 = vadd.f32 0.0, %v1429
        %v1431 = vpop.f32.mrb[0].mxu0
        %1432 = vdwg.mxu0
        %v1433 = vadd.f32 %v1289, %v1359
        %v1434 = vxor.u32 %v1433, 2147483648
        %v1435 = vmul.f32 %v1434, 1.442695
        %v1436 = vpow.pop %v1435
        %v1437 = vadd.f32 %v1436, 1.0
        %v1438 = vrcp.pop %v1437
        %v1439 = vmul.f32 1.0, %v1438
        %v1440 = vadd.f32 %v1290, %v1361
        %v1441 = vxor.u32 %v1440, 2147483648
        %v1442 = vmul.f32 %v1441, 1.442695
        %v1443 = vpow.pop %v1442
        %v1444 = vadd.f32 %v1443, 1.0
        %v1445 = vrcp.pop %v1444
        %v1446 = vmul.f32 1.0, %v1445
        %v1447 = vadd.f32 %v1430, %v566
        %v1448 = vmul.f32 %v1439, %v1447
        %v1449 = vadd.f32 %v1291, %v1448
        %v1450 = vtanh.pop %v1449
        %v1451 = vsub.f32 1.0, %v1446
        %v1452 = vmul.f32 %v1451, %v1450
        %v1453 = vmul.f32 %v1446, %v1287
        %v1454 = vadd.f32 %v1452, %v1453
        %v1455 = vsel %vm372, 1, 0
        %1456 = vset.pattern.permute.xlu0 0
        %1457 = vperm.xlu0 %1456, %v1455
        %v1458 = vpop.permute.xlu0 %1457
        %vm1459 = vcmp.eq.s32.totalorder %v1458, 1
        %v1460 = vsel %vm1459, %v1454, 0.0
        %s1461 = scalar_lea.vmem %s291, 40 [#allocation8]
        %1462 = vst [vmem:[%s1461] sm:$0xff] %v1460
        %v1463 = vsel %vm1459, %v1454, %v1287
        %s1464 = scalar_lea.vmem %s259, 144 [#allocation3]
        %v1465 = vld [vmem:[%s1464] sm:$0xff]
        %v1466 = vld [vmem:[%s1464 + $0x8] sm:$0xff]
        %v1467 = vld [vmem:[%s1464 + $0x10] sm:$0xff]
        %1468 = vmatprep.subr.mxu0 %v306
        %1469 = vmatpush1.msra.mxu0 %v305
        %1470 = vmatprep.subr.mxu0 %v309
        %1471 = vmatpush1.msra.mxu0 %v308
        %1472 = vmatprep.subr.mxu0 %v312
        %1473 = vmatpush1.msra.mxu0 %v311
        %1474 = vmatprep.subr.mxu0 %v315
        %1475 = vmatpush1.msra.mxu0 %v314
        %1476 = vmatprep.subr.mxu0 %v318
        %1477 = vmatpush1.msra.mxu0 %v317
        %1478 = vmatprep.subr.mxu0 %v321
        %1479 = vmatpush1.msra.mxu0 %v320
        %1480 = vmatprep.subr.mxu0 %v324
        %1481 = vmatpush1.msra.mxu0 %v323
        %1482 = vmatprep.subr.mxu0 %v327
        %1483 = vmatpush1.msra.mxu0 %v326
        %1484 = vmatprep.subr.mxu0 %v330
        %1485 = vmatpush1.msra.mxu0 %v329
        %1486 = vmatprep.subr.mxu0 %v333
        %1487 = vmatpush1.msra.mxu0 %v332
        %1488 = vmatprep.subr.mxu0 %v336
        %1489 = vmatpush1.msra.mxu0 %v335
        %1490 = vmatprep.subr.mxu0 %v339
        %1491 = vmatpush1.msra.mxu0 %v338
        %1492 = vmatprep.subr.mxu0 %v342
        %1493 = vmatpush1.msra.mxu0 %v341
        %1494 = vmatprep.subr.mxu0 %v345
        %1495 = vmatpush1.msra.mxu0 %v344
        %1496 = vmatprep.subr.mxu0 %v348
        %1497 = vmatpush1.msra.mxu0 %v347
        %1498 = vmatprep.subr.mxu0 %v351
        %1499 = vmatpush1.msra.mxu0 %v350
        %1500 = vmatprep.subr.mxu0 0.0
        %1501 = vmatpush1.msra.mxu0 0.0
        %1502 = vmatprep.subr.mxu0 0.0
        %1503 = vmatpush1.msra.mxu0 0.0
        %1504 = vmatprep.subr.mxu0 0.0
        %1505 = vmatpush1.msra.mxu0 0.0
        %1506 = vmatprep.subr.mxu0 0.0
        %1507 = vmatpush1.msra.mxu0 0.0
        %1508 = vmatprep.subr.mxu0 0.0
        %1509 = vmatpush1.msra.mxu0 0.0
        %1510 = vmatprep.subr.mxu0 0.0
        %1511 = vmatpush1.msra.mxu0 0.0
        %1512 = vmatprep.subr.mxu0 0.0
        %1513 = vmatpush1.msra.mxu0 0.0
        %1514 = vmatprep.subr.mxu0 0.0
        %1515 = vmatpush1.msra.mxu0 0.0
        %1516 = vmatprep.subr.mxu0 0.0
        %1517 = vmatpush1.msra.mxu0 0.0
        %1518 = vmatprep.subr.mxu0 0.0
        %1519 = vmatpush1.msra.mxu0 0.0
        %1520 = vmatprep.subr.mxu0 0.0
        %1521 = vmatpush1.msra.mxu0 0.0
        %1522 = vmatprep.subr.mxu0 0.0
        %1523 = vmatpush1.msra.mxu0 0.0
        %1524 = vmatprep.subr.mxu0 0.0
        %1525 = vmatpush1.msra.mxu0 0.0
        %1526 = vmatprep.subr.mxu0 0.0
        %1527 = vmatpush1.msra.mxu0 0.0
        %1528 = vmatprep.subr.mxu0 0.0
        %1529 = vmatpush1.msra.mxu0 0.0
        %1530 = vmatprep.subr.mxu0 0.0
        %1531 = vmatpush1.msra.mxu0 0.0
        %1532 = vmatprep.mubr.f32.mxu0 0.0
        %1533 = vmatmul.mubr.f32.gmra.mrb[0].mxu0 %v1463
        %v1534 = vpop.f32.mrb[0].mxu0
        %v1535 = vadd.f32 0.0, %v1534
        %v1536 = vpop.f32.mrb[0].mxu0
        %v1537 = vadd.f32 0.0, %v1536
        %1538 = vdwg.mxu0
        %1539 = vmatprep.subr.mxu0 0.0
        %1540 = vmatpush1.msra.mxu0 %v307
        %1541 = vmatprep.subr.mxu0 0.0
        %1542 = vmatpush1.msra.mxu0 %v310
        %1543 = vmatprep.subr.mxu0 0.0
        %1544 = vmatpush1.msra.mxu0 %v313
        %1545 = vmatprep.subr.mxu0 0.0
        %1546 = vmatpush1.msra.mxu0 %v316
        %1547 = vmatprep.subr.mxu0 0.0
        %1548 = vmatpush1.msra.mxu0 %v319
        %1549 = vmatprep.subr.mxu0 0.0
        %1550 = vmatpush1.msra.mxu0 %v322
        %1551 = vmatprep.subr.mxu0 0.0
        %1552 = vmatpush1.msra.mxu0 %v325
        %1553 = vmatprep.subr.mxu0 0.0
        %1554 = vmatpush1.msra.mxu0 %v328
        %1555 = vmatprep.subr.mxu0 0.0
        %1556 = vmatpush1.msra.mxu0 %v331
        %1557 = vmatprep.subr.mxu0 0.0
        %1558 = vmatpush1.msra.mxu0 %v334
        %1559 = vmatprep.subr.mxu0 0.0
        %1560 = vmatpush1.msra.mxu0 %v337
        %1561 = vmatprep.subr.mxu0 0.0
        %1562 = vmatpush1.msra.mxu0 %v340
        %1563 = vmatprep.subr.mxu0 0.0
        %1564 = vmatpush1.msra.mxu0 %v343
        %1565 = vmatprep.subr.mxu0 0.0
        %1566 = vmatpush1.msra.mxu0 %v346
        %1567 = vmatprep.subr.mxu0 0.0
        %1568 = vmatpush1.msra.mxu0 %v349
        %1569 = vmatprep.subr.mxu0 0.0
        %1570 = vmatpush1.msra.mxu0 %v352
        %1571 = vmatprep.subr.mxu0 0.0
        %1572 = vmatpush1.msra.mxu0 0.0
        %1573 = vmatprep.subr.mxu0 0.0
        %1574 = vmatpush1.msra.mxu0 0.0
        %1575 = vmatprep.subr.mxu0 0.0
        %1576 = vmatpush1.msra.mxu0 0.0
        %1577 = vmatprep.subr.mxu0 0.0
        %1578 = vmatpush1.msra.mxu0 0.0
        %1579 = vmatprep.subr.mxu0 0.0
        %1580 = vmatpush1.msra.mxu0 0.0
        %1581 = vmatprep.subr.mxu0 0.0
        %1582 = vmatpush1.msra.mxu0 0.0
        %1583 = vmatprep.subr.mxu0 0.0
        %1584 = vmatpush1.msra.mxu0 0.0
        %1585 = vmatprep.subr.mxu0 0.0
        %1586 = vmatpush1.msra.mxu0 0.0
        %1587 = vmatprep.subr.mxu0 0.0
        %1588 = vmatpush1.msra.mxu0 0.0
        %1589 = vmatprep.subr.mxu0 0.0
        %1590 = vmatpush1.msra.mxu0 0.0
        %1591 = vmatprep.subr.mxu0 0.0
        %1592 = vmatpush1.msra.mxu0 0.0
        %1593 = vmatprep.subr.mxu0 0.0
        %1594 = vmatpush1.msra.mxu0 0.0
        %1595 = vmatprep.subr.mxu0 0.0
        %1596 = vmatpush1.msra.mxu0 0.0
        %1597 = vmatprep.subr.mxu0 0.0
        %1598 = vmatpush1.msra.mxu0 0.0
        %1599 = vmatprep.subr.mxu0 0.0
        %1600 = vmatpush1.msra.mxu0 0.0
        %1601 = vmatprep.subr.mxu0 0.0
        %1602 = vmatpush1.msra.mxu0 0.0
        %1603 = vmatprep.mubr.f32.mxu0 0.0
        %1604 = vmatmul.mubr.f32.gmra.mrb[0].mxu0 %v1463
        %v1605 = vpop.f32.mrb[0].mxu0
        %v1606 = vadd.f32 0.0, %v1605
        %v1607 = vpop.f32.mrb[0].mxu0
        %1608 = vdwg.mxu0
        %v1609 = vadd.f32 %v1465, %v1535
        %v1610 = vxor.u32 %v1609, 2147483648
        %v1611 = vmul.f32 %v1610, 1.442695
        %v1612 = vpow.pop %v1611
        %v1613 = vadd.f32 %v1612, 1.0
        %v1614 = vrcp.pop %v1613
        %v1615 = vmul.f32 1.0, %v1614
        %v1616 = vadd.f32 %v1466, %v1537
        %v1617 = vxor.u32 %v1616, 2147483648
        %v1618 = vmul.f32 %v1617, 1.442695
        %v1619 = vpow.pop %v1618
        %v1620 = vadd.f32 %v1619, 1.0
        %v1621 = vrcp.pop %v1620
        %v1622 = vmul.f32 1.0, %v1621
        %v1623 = vadd.f32 %v1606, %v566
        %v1624 = vmul.f32 %v1615, %v1623
        %v1625 = vadd.f32 %v1467, %v1624
        %v1626 = vtanh.pop %v1625
        %v1627 = vsub.f32 1.0, %v1622
        %v1628 = vmul.f32 %v1627, %v1626
        %v1629 = vmul.f32 %v1622, %v1463
        %v1630 = vadd.f32 %v1628, %v1629
        %v1631 = vsel %vm375, 1, 0
        %1632 = vset.pattern.permute.xlu0 0
        %1633 = vperm.xlu0 %1632, %v1631
        %v1634 = vpop.permute.xlu0 %1633
        %vm1635 = vcmp.eq.s32.totalorder %v1634, 1
        %v1636 = vsel %vm1635, %v1630, 0.0
        %s1637 = scalar_lea.vmem %s291, 48 [#allocation8]
        %1638 = vst [vmem:[%s1637] sm:$0xff] %v1636
        %v1639 = vsel %vm1635, %v1630, %v1463
        %s1640 = scalar_lea.vmem %s259, 168 [#allocation3]
        %v1641 = vld [vmem:[%s1640] sm:$0xff]
        %v1642 = vld [vmem:[%s1640 + $0x8] sm:$0xff]
        %v1643 = vld [vmem:[%s1640 + $0x10] sm:$0xff]
        %1644 = vmatprep.subr.mxu0 %v306
        %1645 = vmatpush1.msra.mxu0 %v305
        %1646 = vmatprep.subr.mxu0 %v309
        %1647 = vmatpush1.msra.mxu0 %v308
        %1648 = vmatprep.subr.mxu0 %v312
        %1649 = vmatpush1.msra.mxu0 %v311
        %1650 = vmatprep.subr.mxu0 %v315
        %1651 = vmatpush1.msra.mxu0 %v314
        %1652 = vmatprep.subr.mxu0 %v318
        %1653 = vmatpush1.msra.mxu0 %v317
        %1654 = vmatprep.subr.mxu0 %v321
        %1655 = vmatpush1.msra.mxu0 %v320
        %1656 = vmatprep.subr.mxu0 %v324
        %1657 = vmatpush1.msra.mxu0 %v323
        %1658 = vmatprep.subr.mxu0 %v327
        %1659 = vmatpush1.msra.mxu0 %v326
        %1660 = vmatprep.subr.mxu0 %v330
        %1661 = vmatpush1.msra.mxu0 %v329
        %1662 = vmatprep.subr.mxu0 %v333
        %1663 = vmatpush1.msra.mxu0 %v332
        %1664 = vmatprep.subr.mxu0 %v336
        %1665 = vmatpush1.msra.mxu0 %v335
        %1666 = vmatprep.subr.mxu0 %v339
        %1667 = vmatpush1.msra.mxu0 %v338
        %1668 = vmatprep.subr.mxu0 %v342
        %1669 = vmatpush1.msra.mxu0 %v341
        %1670 = vmatprep.subr.mxu0 %v345
        %1671 = vmatpush1.msra.mxu0 %v344
        %1672 = vmatprep.subr.mxu0 %v348
        %1673 = vmatpush1.msra.mxu0 %v347
        %1674 = vmatprep.subr.mxu0 %v351
        %1675 = vmatpush1.msra.mxu0 %v350
        %1676 = vmatprep.subr.mxu0 0.0
        %1677 = vmatpush1.msra.mxu0 0.0
        %1678 = vmatprep.subr.mxu0 0.0
        %1679 = vmatpush1.msra.mxu0 0.0
        %1680 = vmatprep.subr.mxu0 0.0
        %1681 = vmatpush1.msra.mxu0 0.0
        %1682 = vmatprep.subr.mxu0 0.0
        %1683 = vmatpush1.msra.mxu0 0.0
        %1684 = vmatprep.subr.mxu0 0.0
        %1685 = vmatpush1.msra.mxu0 0.0
        %1686 = vmatprep.subr.mxu0 0.0
        %1687 = vmatpush1.msra.mxu0 0.0
        %1688 = vmatprep.subr.mxu0 0.0
        %1689 = vmatpush1.msra.mxu0 0.0
        %1690 = vmatprep.subr.mxu0 0.0
        %1691 = vmatpush1.msra.mxu0 0.0
        %1692 = vmatprep.subr.mxu0 0.0
        %1693 = vmatpush1.msra.mxu0 0.0
        %1694 = vmatprep.subr.mxu0 0.0
        %1695 = vmatpush1.msra.mxu0 0.0
        %1696 = vmatprep.subr.mxu0 0.0
        %1697 = vmatpush1.msra.mxu0 0.0
        %1698 = vmatprep.subr.mxu0 0.0
        %1699 = vmatpush1.msra.mxu0 0.0
        %1700 = vmatprep.subr.mxu0 0.0
        %1701 = vmatpush1.msra.mxu0 0.0
        %1702 = vmatprep.subr.mxu0 0.0
        %1703 = vmatpush1.msra.mxu0 0.0
        %1704 = vmatprep.subr.mxu0 0.0
        %1705 = vmatpush1.msra.mxu0 0.0
        %1706 = vmatprep.subr.mxu0 0.0
        %1707 = vmatpush1.msra.mxu0 0.0
        %1708 = vmatprep.mubr.f32.mxu0 0.0
        %1709 = vmatmul.mubr.f32.gmra.mrb[0].mxu0 %v1639
        %v1710 = vpop.f32.mrb[0].mxu0
        %v1711 = vadd.f32 0.0, %v1710
        %v1712 = vpop.f32.mrb[0].mxu0
        %v1713 = vadd.f32 0.0, %v1712
        %1714 = vdwg.mxu0
        %1715 = vmatprep.subr.mxu0 0.0
        %1716 = vmatpush1.msra.mxu0 %v307
        %1717 = vmatprep.subr.mxu0 0.0
        %1718 = vmatpush1.msra.mxu0 %v310
        %1719 = vmatprep.subr.mxu0 0.0
        %1720 = vmatpush1.msra.mxu0 %v313
        %1721 = vmatprep.subr.mxu0 0.0
        %1722 = vmatpush1.msra.mxu0 %v316
        %1723 = vmatprep.subr.mxu0 0.0
        %1724 = vmatpush1.msra.mxu0 %v319
        %1725 = vmatprep.subr.mxu0 0.0
        %1726 = vmatpush1.msra.mxu0 %v322
        %1727 = vmatprep.subr.mxu0 0.0
        %1728 = vmatpush1.msra.mxu0 %v325
        %1729 = vmatprep.subr.mxu0 0.0
        %1730 = vmatpush1.msra.mxu0 %v328
        %1731 = vmatprep.subr.mxu0 0.0
        %1732 = vmatpush1.msra.mxu0 %v331
        %1733 = vmatprep.subr.mxu0 0.0
        %1734 = vmatpush1.msra.mxu0 %v334
        %1735 = vmatprep.subr.mxu0 0.0
        %1736 = vmatpush1.msra.mxu0 %v337
        %1737 = vmatprep.subr.mxu0 0.0
        %1738 = vmatpush1.msra.mxu0 %v340
        %1739 = vmatprep.subr.mxu0 0.0
        %1740 = vmatpush1.msra.mxu0 %v343
        %1741 = vmatprep.subr.mxu0 0.0
        %1742 = vmatpush1.msra.mxu0 %v346
        %1743 = vmatprep.subr.mxu0 0.0
        %1744 = vmatpush1.msra.mxu0 %v349
        %1745 = vmatprep.subr.mxu0 0.0
        %1746 = vmatpush1.msra.mxu0 %v352
        %1747 = vmatprep.subr.mxu0 0.0
        %1748 = vmatpush1.msra.mxu0 0.0
        %1749 = vmatprep.subr.mxu0 0.0
        %1750 = vmatpush1.msra.mxu0 0.0
        %1751 = vmatprep.subr.mxu0 0.0
        %1752 = vmatpush1.msra.mxu0 0.0
        %1753 = vmatprep.subr.mxu0 0.0
        %1754 = vmatpush1.msra.mxu0 0.0
        %1755 = vmatprep.subr.mxu0 0.0
        %1756 = vmatpush1.msra.mxu0 0.0
        %1757 = vmatprep.subr.mxu0 0.0
        %1758 = vmatpush1.msra.mxu0 0.0
        %1759 = vmatprep.subr.mxu0 0.0
        %1760 = vmatpush1.msra.mxu0 0.0
        %1761 = vmatprep.subr.mxu0 0.0
        %1762 = vmatpush1.msra.mxu0 0.0
        %1763 = vmatprep.subr.mxu0 0.0
        %1764 = vmatpush1.msra.mxu0 0.0
        %1765 = vmatprep.subr.mxu0 0.0
        %1766 = vmatpush1.msra.mxu0 0.0
        %1767 = vmatprep.subr.mxu0 0.0
        %1768 = vmatpush1.msra.mxu0 0.0
        %1769 = vmatprep.subr.mxu0 0.0
        %1770 = vmatpush1.msra.mxu0 0.0
        %1771 = vmatprep.subr.mxu0 0.0
        %1772 = vmatpush1.msra.mxu0 0.0
        %1773 = vmatprep.subr.mxu0 0.0
        %1774 = vmatpush1.msra.mxu0 0.0
        %1775 = vmatprep.subr.mxu0 0.0
        %1776 = vmatpush1.msra.mxu0 0.0
        %1777 = vmatprep.subr.mxu0 0.0
        %1778 = vmatpush1.msra.mxu0 0.0
        %1779 = vmatprep.mubr.f32.mxu0 0.0
        %1780 = vmatmul.mubr.f32.gmra.mrb[0].mxu0 %v1639
        %v1781 = vpop.f32.mrb[0].mxu0
        %v1782 = vadd.f32 0.0, %v1781
        %v1783 = vpop.f32.mrb[0].mxu0
        %1784 = vdwg.mxu0
        %v1785 = vadd.f32 %v1641, %v1711
        %v1786 = vxor.u32 %v1785, 2147483648
        %v1787 = vmul.f32 %v1786, 1.442695
        %v1788 = vpow.pop %v1787
        %v1789 = vadd.f32 %v1788, 1.0
        %v1790 = vrcp.pop %v1789
        %v1791 = vmul.f32 1.0, %v1790
        %v1792 = vadd.f32 %v1642, %v1713
        %v1793 = vxor.u32 %v1792, 2147483648
        %v1794 = vmul.f32 %v1793, 1.442695
        %v1795 = vpow.pop %v1794
        %v1796 = vadd.f32 %v1795, 1.0
        %v1797 = vrcp.pop %v1796
        %v1798 = vmul.f32 1.0, %v1797
        %v1799 = vadd.f32 %v1782, %v566
        %v1800 = vmul.f32 %v1791, %v1799
        %v1801 = vadd.f32 %v1643, %v1800
        %v1802 = vtanh.pop %v1801
        %v1803 = vsub.f32 1.0, %v1798
        %v1804 = vmul.f32 %v1803, %v1802
        %v1805 = vmul.f32 %v1798, %v1639
        %v1806 = vadd.f32 %v1804, %v1805
        %v1807 = vsel %vm378, 1, 0
        %1808 = vset.pattern.permute.xlu0 0
        %1809 = vperm.xlu0 %1808, %v1807
        %v1810 = vpop.permute.xlu0 %1809
        %vm1811 = vcmp.eq.s32.totalorder %v1810, 1
        %v1812 = vsel %vm1811, %v1806, 0.0
        %s1813 = scalar_lea.vmem %s291, 56 [#allocation8]
        %1814 = vst [vmem:[%s1813] sm:$0xff] %v1812
        %v1815 = vsel %vm1811, %v1806, %v1639
        %s1816 = scalar_lea.vmem %s259, 192 [#allocation3]
        %v1817 = vld [vmem:[%s1816] sm:$0xff]
        %v1818 = vld [vmem:[%s1816 + $0x8] sm:$0xff]
        %v1819 = vld [vmem:[%s1816 + $0x10] sm:$0xff]
        %1820 = vmatprep.subr.mxu0 %v306
        %1821 = vmatpush1.msra.mxu0 %v305
        %1822 = vmatprep.subr.mxu0 %v309
        %1823 = vmatpush1.msra.mxu0 %v308
        %1824 = vmatprep.subr.mxu0 %v312
        %1825 = vmatpush1.msra.mxu0 %v311
        %1826 = vmatprep.subr.mxu0 %v315
        %1827 = vmatpush1.msra.mxu0 %v314
        %1828 = vmatprep.subr.mxu0 %v318
        %1829 = vmatpush1.msra.mxu0 %v317
        %1830 = vmatprep.subr.mxu0 %v321
        %1831 = vmatpush1.msra.mxu0 %v320
        %1832 = vmatprep.subr.mxu0 %v324
        %1833 = vmatpush1.msra.mxu0 %v323
        %1834 = vmatprep.subr.mxu0 %v327
        %1835 = vmatpush1.msra.mxu0 %v326
        %1836 = vmatprep.subr.mxu0 %v330
        %1837 = vmatpush1.msra.mxu0 %v329
        %1838 = vmatprep.subr.mxu0 %v333
        %1839 = vmatpush1.msra.mxu0 %v332
        %1840 = vmatprep.subr.mxu0 %v336
        %1841 = vmatpush1.msra.mxu0 %v335
        %1842 = vmatprep.subr.mxu0 %v339
        %1843 = vmatpush1.msra.mxu0 %v338
        %1844 = vmatprep.subr.mxu0 %v342
        %1845 = vmatpush1.msra.mxu0 %v341
        %1846 = vmatprep.subr.mxu0 %v345
        %1847 = vmatpush1.msra.mxu0 %v344
        %1848 = vmatprep.subr.mxu0 %v348
        %1849 = vmatpush1.msra.mxu0 %v347
        %1850 = vmatprep.subr.mxu0 %v351
        %1851 = vmatpush1.msra.mxu0 %v350
        %1852 = vmatprep.subr.mxu0 0.0
        %1853 = vmatpush1.msra.mxu0 0.0
        %1854 = vmatprep.subr.mxu0 0.0
        %1855 = vmatpush1.msra.mxu0 0.0
        %1856 = vmatprep.subr.mxu0 0.0
        %1857 = vmatpush1.msra.mxu0 0.0
        %1858 = vmatprep.subr.mxu0 0.0
        %1859 = vmatpush1.msra.mxu0 0.0
        %1860 = vmatprep.subr.mxu0 0.0
        %1861 = vmatpush1.msra.mxu0 0.0
        %1862 = vmatprep.subr.mxu0 0.0
        %1863 = vmatpush1.msra.mxu0 0.0
        %1864 = vmatprep.subr.mxu0 0.0
        %1865 = vmatpush1.msra.mxu0 0.0
        %1866 = vmatprep.subr.mxu0 0.0
        %1867 = vmatpush1.msra.mxu0 0.0
        %1868 = vmatprep.subr.mxu0 0.0
        %1869 = vmatpush1.msra.mxu0 0.0
        %1870 = vmatprep.subr.mxu0 0.0
        %1871 = vmatpush1.msra.mxu0 0.0
        %1872 = vmatprep.subr.mxu0 0.0
        %1873 = vmatpush1.msra.mxu0 0.0
        %1874 = vmatprep.subr.mxu0 0.0
        %1875 = vmatpush1.msra.mxu0 0.0
        %1876 = vmatprep.subr.mxu0 0.0
        %1877 = vmatpush1.msra.mxu0 0.0
        %1878 = vmatprep.subr.mxu0 0.0
        %1879 = vmatpush1.msra.mxu0 0.0
        %1880 = vmatprep.subr.mxu0 0.0
        %1881 = vmatpush1.msra.mxu0 0.0
        %1882 = vmatprep.subr.mxu0 0.0
        %1883 = vmatpush1.msra.mxu0 0.0
        %1884 = vmatprep.mubr.f32.mxu0 0.0
        %1885 = vmatmul.mubr.f32.gmra.mrb[0].mxu0 %v1815
        %v1886 = vpop.f32.mrb[0].mxu0
        %v1887 = vadd.f32 0.0, %v1886
        %v1888 = vpop.f32.mrb[0].mxu0
        %v1889 = vadd.f32 0.0, %v1888
        %1890 = vdwg.mxu0
        %1891 = vmatprep.subr.mxu0 0.0
        %1892 = vmatpush1.msra.mxu0 %v307
        %1893 = vmatprep.subr.mxu0 0.0
        %1894 = vmatpush1.msra.mxu0 %v310
        %1895 = vmatprep.subr.mxu0 0.0
        %1896 = vmatpush1.msra.mxu0 %v313
        %1897 = vmatprep.subr.mxu0 0.0
        %1898 = vmatpush1.msra.mxu0 %v316
        %1899 = vmatprep.subr.mxu0 0.0
        %1900 = vmatpush1.msra.mxu0 %v319
        %1901 = vmatprep.subr.mxu0 0.0
        %1902 = vmatpush1.msra.mxu0 %v322
        %1903 = vmatprep.subr.mxu0 0.0
        %1904 = vmatpush1.msra.mxu0 %v325
        %1905 = vmatprep.subr.mxu0 0.0
        %1906 = vmatpush1.msra.mxu0 %v328
        %1907 = vmatprep.subr.mxu0 0.0
        %1908 = vmatpush1.msra.mxu0 %v331
        %1909 = vmatprep.subr.mxu0 0.0
        %1910 = vmatpush1.msra.mxu0 %v334
        %1911 = vmatprep.subr.mxu0 0.0
        %1912 = vmatpush1.msra.mxu0 %v337
        %1913 = vmatprep.subr.mxu0 0.0
        %1914 = vmatpush1.msra.mxu0 %v340
        %1915 = vmatprep.subr.mxu0 0.0
        %1916 = vmatpush1.msra.mxu0 %v343
        %1917 = vmatprep.subr.mxu0 0.0
        %1918 = vmatpush1.msra.mxu0 %v346
        %1919 = vmatprep.subr.mxu0 0.0
        %1920 = vmatpush1.msra.mxu0 %v349
        %1921 = vmatprep.subr.mxu0 0.0
        %1922 = vmatpush1.msra.mxu0 %v352
        %1923 = vmatprep.subr.mxu0 0.0
        %1924 = vmatpush1.msra.mxu0 0.0
        %1925 = vmatprep.subr.mxu0 0.0
        %1926 = vmatpush1.msra.mxu0 0.0
        %1927 = vmatprep.subr.mxu0 0.0
        %1928 = vmatpush1.msra.mxu0 0.0
        %1929 = vmatprep.subr.mxu0 0.0
        %1930 = vmatpush1.msra.mxu0 0.0
        %1931 = vmatprep.subr.mxu0 0.0
        %1932 = vmatpush1.msra.mxu0 0.0
        %1933 = vmatprep.subr.mxu0 0.0
        %1934 = vmatpush1.msra.mxu0 0.0
        %1935 = vmatprep.subr.mxu0 0.0
        %1936 = vmatpush1.msra.mxu0 0.0
        %1937 = vmatprep.subr.mxu0 0.0
        %1938 = vmatpush1.msra.mxu0 0.0
        %1939 = vmatprep.subr.mxu0 0.0
        %1940 = vmatpush1.msra.mxu0 0.0
        %1941 = vmatprep.subr.mxu0 0.0
        %1942 = vmatpush1.msra.mxu0 0.0
        %1943 = vmatprep.subr.mxu0 0.0
        %1944 = vmatpush1.msra.mxu0 0.0
        %1945 = vmatprep.subr.mxu0 0.0
        %1946 = vmatpush1.msra.mxu0 0.0
        %1947 = vmatprep.subr.mxu0 0.0
        %1948 = vmatpush1.msra.mxu0 0.0
        %1949 = vmatprep.subr.mxu0 0.0
        %1950 = vmatpush1.msra.mxu0 0.0
        %1951 = vmatprep.subr.mxu0 0.0
        %1952 = vmatpush1.msra.mxu0 0.0
        %1953 = vmatprep.subr.mxu0 0.0
        %1954 = vmatpush1.msra.mxu0 0.0
        %1955 = vmatprep.mubr.f32.mxu0 0.0
        %1956 = vmatmul.mubr.f32.gmra.mrb[0].mxu0 %v1815
        %v1957 = vpop.f32.mrb[0].mxu0
        %v1958 = vadd.f32 0.0, %v1957
        %v1959 = vpop.f32.mrb[0].mxu0
        %1960 = vdwg.mxu0
        %v1961 = vadd.f32 %v1817, %v1887
        %v1962 = vxor.u32 %v1961, 2147483648
        %v1963 = vmul.f32 %v1962, 1.442695
        %v1964 = vpow.pop %v1963
        %v1965 = vadd.f32 %v1964, 1.0
        %v1966 = vrcp.pop %v1965
        %v1967 = vmul.f32 1.0, %v1966
        %v1968 = vadd.f32 %v1818, %v1889
        %v1969 = vxor.u32 %v1968, 2147483648
        %v1970 = vmul.f32 %v1969, 1.442695
        %v1971 = vpow.pop %v1970
        %v1972 = vadd.f32 %v1971, 1.0
        %v1973 = vrcp.pop %v1972
        %v1974 = vmul.f32 1.0, %v1973
        %v1975 = vadd.f32 %v1958, %v566
        %v1976 = vmul.f32 %v1967, %v1975
        %v1977 = vadd.f32 %v1819, %v1976
        %v1978 = vtanh.pop %v1977
        %v1979 = vsub.f32 1.0, %v1974
        %v1980 = vmul.f32 %v1979, %v1978
        %v1981 = vmul.f32 %v1974, %v1815
        %v1982 = vadd.f32 %v1980, %v1981
        %v1983 = vsel %vm381, 1, 0
        %1984 = vset.pattern.permute.xlu0 0
        %1985 = vperm.xlu0 %1984, %v1983
        %v1986 = vpop.permute.xlu0 %1985
        %vm1987 = vcmp.eq.s32.totalorder %v1986, 1
        %v1988 = vsel %vm1987, %v1982, 0.0
        %s1989 = scalar_lea.vmem %s291, 64 [#allocation8]
        %1990 = vst [vmem:[%s1989] sm:$0xff] %v1988
        %v1991 = vsel %vm1987, %v1982, %v1815
        %s1992 = scalar_lea.vmem %s259, 216 [#allocation3]
        %v1993 = vld [vmem:[%s1992] sm:$0xff]
        %v1994 = vld [vmem:[%s1992 + $0x8] sm:$0xff]
        %v1995 = vld [vmem:[%s1992 + $0x10] sm:$0xff]
        %1996 = vmatprep.subr.mxu0 %v306
        %1997 = vmatpush1.msra.mxu0 %v305
        %1998 = vmatprep.subr.mxu0 %v309
        %1999 = vmatpush1.msra.mxu0 %v308
        %2000 = vmatprep.subr.mxu0 %v312
        %2001 = vmatpush1.msra.mxu0 %v311
        %2002 = vmatprep.subr.mxu0 %v315
        %2003 = vmatpush1.msra.mxu0 %v314
        %2004 = vmatprep.subr.mxu0 %v318
        %2005 = vmatpush1.msra.mxu0 %v317
        %2006 = vmatprep.subr.mxu0 %v321
        %2007 = vmatpush1.msra.mxu0 %v320
        %2008 = vmatprep.subr.mxu0 %v324
        %2009 = vmatpush1.msra.mxu0 %v323
        %2010 = vmatprep.subr.mxu0 %v327
        %2011 = vmatpush1.msra.mxu0 %v326
        %2012 = vmatprep.subr.mxu0 %v330
        %2013 = vmatpush1.msra.mxu0 %v329
        %2014 = vmatprep.subr.mxu0 %v333
        %2015 = vmatpush1.msra.mxu0 %v332
        %2016 = vmatprep.subr.mxu0 %v336
        %2017 = vmatpush1.msra.mxu0 %v335
        %2018 = vmatprep.subr.mxu0 %v339
        %2019 = vmatpush1.msra.mxu0 %v338
        %2020 = vmatprep.subr.mxu0 %v342
        %2021 = vmatpush1.msra.mxu0 %v341
        %2022 = vmatprep.subr.mxu0 %v345
        %2023 = vmatpush1.msra.mxu0 %v344
        %2024 = vmatprep.subr.mxu0 %v348
        %2025 = vmatpush1.msra.mxu0 %v347
        %2026 = vmatprep.subr.mxu0 %v351
        %2027 = vmatpush1.msra.mxu0 %v350
        %2028 = vmatprep.subr.mxu0 0.0
        %2029 = vmatpush1.msra.mxu0 0.0
        %2030 = vmatprep.subr.mxu0 0.0
        %2031 = vmatpush1.msra.mxu0 0.0
        %2032 = vmatprep.subr.mxu0 0.0
        %2033 = vmatpush1.msra.mxu0 0.0
        %2034 = vmatprep.subr.mxu0 0.0
        %2035 = vmatpush1.msra.mxu0 0.0
        %2036 = vmatprep.subr.mxu0 0.0
        %2037 = vmatpush1.msra.mxu0 0.0
        %2038 = vmatprep.subr.mxu0 0.0
        %2039 = vmatpush1.msra.mxu0 0.0
        %2040 = vmatprep.subr.mxu0 0.0
        %2041 = vmatpush1.msra.mxu0 0.0
        %2042 = vmatprep.subr.mxu0 0.0
        %2043 = vmatpush1.msra.mxu0 0.0
        %2044 = vmatprep.subr.mxu0 0.0
        %2045 = vmatpush1.msra.mxu0 0.0
        %2046 = vmatprep.subr.mxu0 0.0
        %2047 = vmatpush1.msra.mxu0 0.0
        %2048 = vmatprep.subr.mxu0 0.0
        %2049 = vmatpush1.msra.mxu0 0.0
        %2050 = vmatprep.subr.mxu0 0.0
        %2051 = vmatpush1.msra.mxu0 0.0
        %2052 = vmatprep.subr.mxu0 0.0
        %2053 = vmatpush1.msra.mxu0 0.0
        %2054 = vmatprep.subr.mxu0 0.0
        %2055 = vmatpush1.msra.mxu0 0.0
        %2056 = vmatprep.subr.mxu0 0.0
        %2057 = vmatpush1.msra.mxu0 0.0
        %2058 = vmatprep.subr.mxu0 0.0
        %2059 = vmatpush1.msra.mxu0 0.0
        %2060 = vmatprep.mubr.f32.mxu0 0.0
        %2061 = vmatmul.mubr.f32.gmra.mrb[0].mxu0 %v1991
        %v2062 = vpop.f32.mrb[0].mxu0
        %v2063 = vadd.f32 0.0, %v2062
        %v2064 = vpop.f32.mrb[0].mxu0
        %v2065 = vadd.f32 0.0, %v2064
        %2066 = vdwg.mxu0
        %2067 = vmatprep.subr.mxu0 0.0
        %2068 = vmatpush1.msra.mxu0 %v307
        %2069 = vmatprep.subr.mxu0 0.0
        %2070 = vmatpush1.msra.mxu0 %v310
        %2071 = vmatprep.subr.mxu0 0.0
        %2072 = vmatpush1.msra.mxu0 %v313
        %2073 = vmatprep.subr.mxu0 0.0
        %2074 = vmatpush1.msra.mxu0 %v316
        %2075 = vmatprep.subr.mxu0 0.0
        %2076 = vmatpush1.msra.mxu0 %v319
        %2077 = vmatprep.subr.mxu0 0.0
        %2078 = vmatpush1.msra.mxu0 %v322
        %2079 = vmatprep.subr.mxu0 0.0
        %2080 = vmatpush1.msra.mxu0 %v325
        %2081 = vmatprep.subr.mxu0 0.0
        %2082 = vmatpush1.msra.mxu0 %v328
        %2083 = vmatprep.subr.mxu0 0.0
        %2084 = vmatpush1.msra.mxu0 %v331
        %2085 = vmatprep.subr.mxu0 0.0
        %2086 = vmatpush1.msra.mxu0 %v334
        %2087 = vmatprep.subr.mxu0 0.0
        %2088 = vmatpush1.msra.mxu0 %v337
        %2089 = vmatprep.subr.mxu0 0.0
        %2090 = vmatpush1.msra.mxu0 %v340
        %2091 = vmatprep.subr.mxu0 0.0
        %2092 = vmatpush1.msra.mxu0 %v343
        %2093 = vmatprep.subr.mxu0 0.0
        %2094 = vmatpush1.msra.mxu0 %v346
        %2095 = vmatprep.subr.mxu0 0.0
        %2096 = vmatpush1.msra.mxu0 %v349
        %2097 = vmatprep.subr.mxu0 0.0
        %2098 = vmatpush1.msra.mxu0 %v352
        %2099 = vmatprep.subr.mxu0 0.0
        %2100 = vmatpush1.msra.mxu0 0.0
        %2101 = vmatprep.subr.mxu0 0.0
        %2102 = vmatpush1.msra.mxu0 0.0
        %2103 = vmatprep.subr.mxu0 0.0
        %2104 = vmatpush1.msra.mxu0 0.0
        %2105 = vmatprep.subr.mxu0 0.0
        %2106 = vmatpush1.msra.mxu0 0.0
        %2107 = vmatprep.subr.mxu0 0.0
        %2108 = vmatpush1.msra.mxu0 0.0
        %2109 = vmatprep.subr.mxu0 0.0
        %2110 = vmatpush1.msra.mxu0 0.0
        %2111 = vmatprep.subr.mxu0 0.0
        %2112 = vmatpush1.msra.mxu0 0.0
        %2113 = vmatprep.subr.mxu0 0.0
        %2114 = vmatpush1.msra.mxu0 0.0
        %2115 = vmatprep.subr.mxu0 0.0
        %2116 = vmatpush1.msra.mxu0 0.0
        %2117 = vmatprep.subr.mxu0 0.0
        %2118 = vmatpush1.msra.mxu0 0.0
        %2119 = vmatprep.subr.mxu0 0.0
        %2120 = vmatpush1.msra.mxu0 0.0
        %2121 = vmatprep.subr.mxu0 0.0
        %2122 = vmatpush1.msra.mxu0 0.0
        %2123 = vmatprep.subr.mxu0 0.0
        %2124 = vmatpush1.msra.mxu0 0.0
        %2125 = vmatprep.subr.mxu0 0.0
        %2126 = vmatpush1.msra.mxu0 0.0
        %2127 = vmatprep.subr.mxu0 0.0
        %2128 = vmatpush1.msra.mxu0 0.0
        %2129 = vmatprep.subr.mxu0 0.0
        %2130 = vmatpush1.msra.mxu0 0.0
        %2131 = vmatprep.mubr.f32.mxu0 0.0
        %2132 = vmatmul.mubr.f32.gmra.mrb[0].mxu0 %v1991
        %v2133 = vpop.f32.mrb[0].mxu0
        %v2134 = vadd.f32 0.0, %v2133
        %v2135 = vpop.f32.mrb[0].mxu0
        %2136 = vdwg.mxu0
        %v2137 = vadd.f32 %v1993, %v2063
        %v2138 = vxor.u32 %v2137, 2147483648
        %v2139 = vmul.f32 %v2138, 1.442695
        %v2140 = vpow.pop %v2139
        %v2141 = vadd.f32 %v2140, 1.0
        %v2142 = vrcp.pop %v2141
        %v2143 = vmul.f32 1.0, %v2142
        %v2144 = vadd.f32 %v1994, %v2065
        %v2145 = vxor.u32 %v2144, 2147483648
        %v2146 = vmul.f32 %v2145, 1.442695
        %v2147 = vpow.pop %v2146
        %v2148 = vadd.f32 %v2147, 1.0
        %v2149 = vrcp.pop %v2148
        %v2150 = vmul.f32 1.0, %v2149
        %v2151 = vadd.f32 %v2134, %v566
        %v2152 = vmul.f32 %v2143, %v2151
        %v2153 = vadd.f32 %v1995, %v2152
        %v2154 = vtanh.pop %v2153
        %v2155 = vsub.f32 1.0, %v2150
        %v2156 = vmul.f32 %v2155, %v2154
        %v2157 = vmul.f32 %v2150, %v1991
        %v2158 = vadd.f32 %v2156, %v2157
        %v2159 = vsel %vm384, 1, 0
        %2160 = vset.pattern.permute.xlu0 0
        %2161 = vperm.xlu0 %2160, %v2159
        %v2162 = vpop.permute.xlu0 %2161
        %vm2163 = vcmp.eq.s32.totalorder %v2162, 1
        %v2164 = vsel %vm2163, %v2158, 0.0
        %s2165 = scalar_lea.vmem %s291, 72 [#allocation8]
        %2166 = vst [vmem:[%s2165] sm:$0xff] %v2164
        %v2167 = vsel %vm2163, %v2158, %v1991
        %s2168 = scalar_lea.vmem %s259, 240 [#allocation3]
        %v2169 = vld [vmem:[%s2168] sm:$0xff]
        %v2170 = vld [vmem:[%s2168 + $0x8] sm:$0xff]
        %v2171 = vld [vmem:[%s2168 + $0x10] sm:$0xff]
        %2172 = vmatprep.subr.mxu0 %v306
        %2173 = vmatpush1.msra.mxu0 %v305
        %2174 = vmatprep.subr.mxu0 %v309
        %2175 = vmatpush1.msra.mxu0 %v308
        %2176 = vmatprep.subr.mxu0 %v312
        %2177 = vmatpush1.msra.mxu0 %v311
        %2178 = vmatprep.subr.mxu0 %v315
        %2179 = vmatpush1.msra.mxu0 %v314
        %2180 = vmatprep.subr.mxu0 %v318
        %2181 = vmatpush1.msra.mxu0 %v317
        %2182 = vmatprep.subr.mxu0 %v321
        %2183 = vmatpush1.msra.mxu0 %v320
        %2184 = vmatprep.subr.mxu0 %v324
        %2185 = vmatpush1.msra.mxu0 %v323
        %2186 = vmatprep.subr.mxu0 %v327
        %2187 = vmatpush1.msra.mxu0 %v326
        %2188 = vmatprep.subr.mxu0 %v330
        %2189 = vmatpush1.msra.mxu0 %v329
        %2190 = vmatprep.subr.mxu0 %v333
        %2191 = vmatpush1.msra.mxu0 %v332
        %2192 = vmatprep.subr.mxu0 %v336
        %2193 = vmatpush1.msra.mxu0 %v335
        %2194 = vmatprep.subr.mxu0 %v339
        %2195 = vmatpush1.msra.mxu0 %v338
        %2196 = vmatprep.subr.mxu0 %v342
        %2197 = vmatpush1.msra.mxu0 %v341
        %2198 = vmatprep.subr.mxu0 %v345
        %2199 = vmatpush1.msra.mxu0 %v344
        %2200 = vmatprep.subr.mxu0 %v348
        %2201 = vmatpush1.msra.mxu0 %v347
        %2202 = vmatprep.subr.mxu0 %v351
        %2203 = vmatpush1.msra.mxu0 %v350
        %2204 = vmatprep.subr.mxu0 0.0
        %2205 = vmatpush1.msra.mxu0 0.0
        %2206 = vmatprep.subr.mxu0 0.0
        %2207 = vmatpush1.msra.mxu0 0.0
        %2208 = vmatprep.subr.mxu0 0.0
        %2209 = vmatpush1.msra.mxu0 0.0
        %2210 = vmatprep.subr.mxu0 0.0
        %2211 = vmatpush1.msra.mxu0 0.0
        %2212 = vmatprep.subr.mxu0 0.0
        %2213 = vmatpush1.msra.mxu0 0.0
        %2214 = vmatprep.subr.mxu0 0.0
        %2215 = vmatpush1.msra.mxu0 0.0
        %2216 = vmatprep.subr.mxu0 0.0
        %2217 = vmatpush1.msra.mxu0 0.0
        %2218 = vmatprep.subr.mxu0 0.0
        %2219 = vmatpush1.msra.mxu0 0.0
        %2220 = vmatprep.subr.mxu0 0.0
        %2221 = vmatpush1.msra.mxu0 0.0
        %2222 = vmatprep.subr.mxu0 0.0
        %2223 = vmatpush1.msra.mxu0 0.0
        %2224 = vmatprep.subr.mxu0 0.0
        %2225 = vmatpush1.msra.mxu0 0.0
        %2226 = vmatprep.subr.mxu0 0.0
        %2227 = vmatpush1.msra.mxu0 0.0
        %2228 = vmatprep.subr.mxu0 0.0
        %2229 = vmatpush1.msra.mxu0 0.0
        %2230 = vmatprep.subr.mxu0 0.0
        %2231 = vmatpush1.msra.mxu0 0.0
        %2232 = vmatprep.subr.mxu0 0.0
        %2233 = vmatpush1.msra.mxu0 0.0
        %2234 = vmatprep.subr.mxu0 0.0
        %2235 = vmatpush1.msra.mxu0 0.0
        %2236 = vmatprep.mubr.f32.mxu0 0.0
        %2237 = vmatmul.mubr.f32.gmra.mrb[0].mxu0 %v2167
        %v2238 = vpop.f32.mrb[0].mxu0
        %v2239 = vadd.f32 0.0, %v2238
        %v2240 = vpop.f32.mrb[0].mxu0
        %v2241 = vadd.f32 0.0, %v2240
        %2242 = vdwg.mxu0
        %2243 = vmatprep.subr.mxu0 0.0
        %2244 = vmatpush1.msra.mxu0 %v307
        %2245 = vmatprep.subr.mxu0 0.0
        %2246 = vmatpush1.msra.mxu0 %v310
        %2247 = vmatprep.subr.mxu0 0.0
        %2248 = vmatpush1.msra.mxu0 %v313
        %2249 = vmatprep.subr.mxu0 0.0
        %2250 = vmatpush1.msra.mxu0 %v316
        %2251 = vmatprep.subr.mxu0 0.0
        %2252 = vmatpush1.msra.mxu0 %v319
        %2253 = vmatprep.subr.mxu0 0.0
        %2254 = vmatpush1.msra.mxu0 %v322
        %2255 = vmatprep.subr.mxu0 0.0
        %2256 = vmatpush1.msra.mxu0 %v325
        %2257 = vmatprep.subr.mxu0 0.0
        %2258 = vmatpush1.msra.mxu0 %v328
        %2259 = vmatprep.subr.mxu0 0.0
        %2260 = vmatpush1.msra.mxu0 %v331
        %2261 = vmatprep.subr.mxu0 0.0
        %2262 = vmatpush1.msra.mxu0 %v334
        %2263 = vmatprep.subr.mxu0 0.0
        %2264 = vmatpush1.msra.mxu0 %v337
        %2265 = vmatprep.subr.mxu0 0.0
        %2266 = vmatpush1.msra.mxu0 %v340
        %2267 = vmatprep.subr.mxu0 0.0
        %2268 = vmatpush1.msra.mxu0 %v343
        %2269 = vmatprep.subr.mxu0 0.0
        %2270 = vmatpush1.msra.mxu0 %v346
        %2271 = vmatprep.subr.mxu0 0.0
        %2272 = vmatpush1.msra.mxu0 %v349
        %2273 = vmatprep.subr.mxu0 0.0
        %2274 = vmatpush1.msra.mxu0 %v352
        %2275 = vmatprep.subr.mxu0 0.0
        %2276 = vmatpush1.msra.mxu0 0.0
        %2277 = vmatprep.subr.mxu0 0.0
        %2278 = vmatpush1.msra.mxu0 0.0
        %2279 = vmatprep.subr.mxu0 0.0
        %2280 = vmatpush1.msra.mxu0 0.0
        %2281 = vmatprep.subr.mxu0 0.0
        %2282 = vmatpush1.msra.mxu0 0.0
        %2283 = vmatprep.subr.mxu0 0.0
        %2284 = vmatpush1.msra.mxu0 0.0
        %2285 = vmatprep.subr.mxu0 0.0
        %2286 = vmatpush1.msra.mxu0 0.0
        %2287 = vmatprep.subr.mxu0 0.0
        %2288 = vmatpush1.msra.mxu0 0.0
        %2289 = vmatprep.subr.mxu0 0.0
        %2290 = vmatpush1.msra.mxu0 0.0
        %2291 = vmatprep.subr.mxu0 0.0
        %2292 = vmatpush1.msra.mxu0 0.0
        %2293 = vmatprep.subr.mxu0 0.0
        %2294 = vmatpush1.msra.mxu0 0.0
        %2295 = vmatprep.subr.mxu0 0.0
        %2296 = vmatpush1.msra.mxu0 0.0
        %2297 = vmatprep.subr.mxu0 0.0
        %2298 = vmatpush1.msra.mxu0 0.0
        %2299 = vmatprep.subr.mxu0 0.0
        %2300 = vmatpush1.msra.mxu0 0.0
        %2301 = vmatprep.subr.mxu0 0.0
        %2302 = vmatpush1.msra.mxu0 0.0
        %2303 = vmatprep.subr.mxu0 0.0
        %2304 = vmatpush1.msra.mxu0 0.0
        %2305 = vmatprep.subr.mxu0 0.0
        %2306 = vmatpush1.msra.mxu0 0.0
        %2307 = vmatprep.mubr.f32.mxu0 0.0
        %2308 = vmatmul.mubr.f32.gmra.mrb[0].mxu0 %v2167
        %v2309 = vpop.f32.mrb[0].mxu0
        %v2310 = vadd.f32 0.0, %v2309
        %v2311 = vpop.f32.mrb[0].mxu0
        %2312 = vdwg.mxu0
        %v2313 = vadd.f32 %v2169, %v2239
        %v2314 = vxor.u32 %v2313, 2147483648
        %v2315 = vmul.f32 %v2314, 1.442695
        %v2316 = vpow.pop %v2315
        %v2317 = vadd.f32 %v2316, 1.0
        %v2318 = vrcp.pop %v2317
        %v2319 = vmul.f32 1.0, %v2318
        %v2320 = vadd.f32 %v2170, %v2241
        %v2321 = vxor.u32 %v2320, 2147483648
        %v2322 = vmul.f32 %v2321, 1.442695
        %v2323 = vpow.pop %v2322
        %v2324 = vadd.f32 %v2323, 1.0
        %v2325 = vrcp.pop %v2324
        %v2326 = vmul.f32 1.0, %v2325
        %v2327 = vadd.f32 %v2310, %v566
        %v2328 = vmul.f32 %v2319, %v2327
        %v2329 = vadd.f32 %v2171, %v2328
        %v2330 = vtanh.pop %v2329
        %v2331 = vsub.f32 1.0, %v2326
        %v2332 = vmul.f32 %v2331, %v2330
        %v2333 = vmul.f32 %v2326, %v2167
        %v2334 = vadd.f32 %v2332, %v2333
        %v2335 = vsel %vm387, 1, 0
        %2336 = vset.pattern.permute.xlu0 0
        %2337 = vperm.xlu0 %2336, %v2335
        %v2338 = vpop.permute.xlu0 %2337
        %vm2339 = vcmp.eq.s32.totalorder %v2338, 1
        %v2340 = vsel %vm2339, %v2334, 0.0
        %s2341 = scalar_lea.vmem %s291, 80 [#allocation8]
        %2342 = vst [vmem:[%s2341] sm:$0xff] %v2340
        %v2343 = vsel %vm2339, %v2334, %v2167
        %s2344 = scalar_lea.vmem %s259, 264 [#allocation3]
        %v2345 = vld [vmem:[%s2344] sm:$0xff]
        %v2346 = vld [vmem:[%s2344 + $0x8] sm:$0xff]
        %v2347 = vld [vmem:[%s2344 + $0x10] sm:$0xff]
        %2348 = vmatprep.subr.mxu0 %v306
        %2349 = vmatpush1.msra.mxu0 %v305
        %2350 = vmatprep.subr.mxu0 %v309
        %2351 = vmatpush1.msra.mxu0 %v308
        %2352 = vmatprep.subr.mxu0 %v312
        %2353 = vmatpush1.msra.mxu0 %v311
        %2354 = vmatprep.subr.mxu0 %v315
        %2355 = vmatpush1.msra.mxu0 %v314
        %2356 = vmatprep.subr.mxu0 %v318
        %2357 = vmatpush1.msra.mxu0 %v317
        %2358 = vmatprep.subr.mxu0 %v321
        %2359 = vmatpush1.msra.mxu0 %v320
        %2360 = vmatprep.subr.mxu0 %v324
        %2361 = vmatpush1.msra.mxu0 %v323
        %2362 = vmatprep.subr.mxu0 %v327
        %2363 = vmatpush1.msra.mxu0 %v326
        %2364 = vmatprep.subr.mxu0 %v330
        %2365 = vmatpush1.msra.mxu0 %v329
        %2366 = vmatprep.subr.mxu0 %v333
        %2367 = vmatpush1.msra.mxu0 %v332
        %2368 = vmatprep.subr.mxu0 %v336
        %2369 = vmatpush1.msra.mxu0 %v335
        %2370 = vmatprep.subr.mxu0 %v339
        %2371 = vmatpush1.msra.mxu0 %v338
        %2372 = vmatprep.subr.mxu0 %v342
        %2373 = vmatpush1.msra.mxu0 %v341
        %2374 = vmatprep.subr.mxu0 %v345
        %2375 = vmatpush1.msra.mxu0 %v344
        %2376 = vmatprep.subr.mxu0 %v348
        %2377 = vmatpush1.msra.mxu0 %v347
        %2378 = vmatprep.subr.mxu0 %v351
        %2379 = vmatpush1.msra.mxu0 %v350
        %2380 = vmatprep.subr.mxu0 0.0
        %2381 = vmatpush1.msra.mxu0 0.0
        %2382 = vmatprep.subr.mxu0 0.0
        %2383 = vmatpush1.msra.mxu0 0.0
        %2384 = vmatprep.subr.mxu0 0.0
        %2385 = vmatpush1.msra.mxu0 0.0
        %2386 = vmatprep.subr.mxu0 0.0
        %2387 = vmatpush1.msra.mxu0 0.0
        %2388 = vmatprep.subr.mxu0 0.0
        %2389 = vmatpush1.msra.mxu0 0.0
        %2390 = vmatprep.subr.mxu0 0.0
        %2391 = vmatpush1.msra.mxu0 0.0
        %2392 = vmatprep.subr.mxu0 0.0
        %2393 = vmatpush1.msra.mxu0 0.0
        %2394 = vmatprep.subr.mxu0 0.0
        %2395 = vmatpush1.msra.mxu0 0.0
        %2396 = vmatprep.subr.mxu0 0.0
        %2397 = vmatpush1.msra.mxu0 0.0
        %2398 = vmatprep.subr.mxu0 0.0
        %2399 = vmatpush1.msra.mxu0 0.0
        %2400 = vmatprep.subr.mxu0 0.0
        %2401 = vmatpush1.msra.mxu0 0.0
        %2402 = vmatprep.subr.mxu0 0.0
        %2403 = vmatpush1.msra.mxu0 0.0
        %2404 = vmatprep.subr.mxu0 0.0
        %2405 = vmatpush1.msra.mxu0 0.0
        %2406 = vmatprep.subr.mxu0 0.0
        %2407 = vmatpush1.msra.mxu0 0.0
        %2408 = vmatprep.subr.mxu0 0.0
        %2409 = vmatpush1.msra.mxu0 0.0
        %2410 = vmatprep.subr.mxu0 0.0
        %2411 = vmatpush1.msra.mxu0 0.0
        %2412 = vmatprep.mubr.f32.mxu0 0.0
        %2413 = vmatmul.mubr.f32.gmra.mrb[0].mxu0 %v2343
        %v2414 = vpop.f32.mrb[0].mxu0
        %v2415 = vadd.f32 0.0, %v2414
        %v2416 = vpop.f32.mrb[0].mxu0
        %v2417 = vadd.f32 0.0, %v2416
        %2418 = vdwg.mxu0
        %2419 = vmatprep.subr.mxu0 0.0
        %2420 = vmatpush1.msra.mxu0 %v307
        %2421 = vmatprep.subr.mxu0 0.0
        %2422 = vmatpush1.msra.mxu0 %v310
        %2423 = vmatprep.subr.mxu0 0.0
        %2424 = vmatpush1.msra.mxu0 %v313
        %2425 = vmatprep.subr.mxu0 0.0
        %2426 = vmatpush1.msra.mxu0 %v316
        %2427 = vmatprep.subr.mxu0 0.0
        %2428 = vmatpush1.msra.mxu0 %v319
        %2429 = vmatprep.subr.mxu0 0.0
        %2430 = vmatpush1.msra.mxu0 %v322
        %2431 = vmatprep.subr.mxu0 0.0
        %2432 = vmatpush1.msra.mxu0 %v325
        %2433 = vmatprep.subr.mxu0 0.0
        %2434 = vmatpush1.msra.mxu0 %v328
        %2435 = vmatprep.subr.mxu0 0.0
        %2436 = vmatpush1.msra.mxu0 %v331
        %2437 = vmatprep.subr.mxu0 0.0
        %2438 = vmatpush1.msra.mxu0 %v334
        %2439 = vmatprep.subr.mxu0 0.0
        %2440 = vmatpush1.msra.mxu0 %v337
        %2441 = vmatprep.subr.mxu0 0.0
        %2442 = vmatpush1.msra.mxu0 %v340
        %2443 = vmatprep.subr.mxu0 0.0
        %2444 = vmatpush1.msra.mxu0 %v343
        %2445 = vmatprep.subr.mxu0 0.0
        %2446 = vmatpush1.msra.mxu0 %v346
        %2447 = vmatprep.subr.mxu0 0.0
        %2448 = vmatpush1.msra.mxu0 %v349
        %2449 = vmatprep.subr.mxu0 0.0
        %2450 = vmatpush1.msra.mxu0 %v352
        %2451 = vmatprep.subr.mxu0 0.0
        %2452 = vmatpush1.msra.mxu0 0.0
        %2453 = vmatprep.subr.mxu0 0.0
        %2454 = vmatpush1.msra.mxu0 0.0
        %2455 = vmatprep.subr.mxu0 0.0
        %2456 = vmatpush1.msra.mxu0 0.0
        %2457 = vmatprep.subr.mxu0 0.0
        %2458 = vmatpush1.msra.mxu0 0.0
        %2459 = vmatprep.subr.mxu0 0.0
        %2460 = vmatpush1.msra.mxu0 0.0
        %2461 = vmatprep.subr.mxu0 0.0
        %2462 = vmatpush1.msra.mxu0 0.0
        %2463 = vmatprep.subr.mxu0 0.0
        %2464 = vmatpush1.msra.mxu0 0.0
        %2465 = vmatprep.subr.mxu0 0.0
        %2466 = vmatpush1.msra.mxu0 0.0
        %2467 = vmatprep.subr.mxu0 0.0
        %2468 = vmatpush1.msra.mxu0 0.0
        %2469 = vmatprep.subr.mxu0 0.0
        %2470 = vmatpush1.msra.mxu0 0.0
        %2471 = vmatprep.subr.mxu0 0.0
        %2472 = vmatpush1.msra.mxu0 0.0
        %2473 = vmatprep.subr.mxu0 0.0
        %2474 = vmatpush1.msra.mxu0 0.0
        %2475 = vmatprep.subr.mxu0 0.0
        %2476 = vmatpush1.msra.mxu0 0.0
        %2477 = vmatprep.subr.mxu0 0.0
        %2478 = vmatpush1.msra.mxu0 0.0
        %2479 = vmatprep.subr.mxu0 0.0
        %2480 = vmatpush1.msra.mxu0 0.0
        %2481 = vmatprep.subr.mxu0 0.0
        %2482 = vmatpush1.msra.mxu0 0.0
        %2483 = vmatprep.mubr.f32.mxu0 0.0
        %2484 = vmatmul.mubr.f32.gmra.mrb[0].mxu0 %v2343
        %v2485 = vpop.f32.mrb[0].mxu0
        %v2486 = vadd.f32 0.0, %v2485
        %v2487 = vpop.f32.mrb[0].mxu0
        %2488 = vdwg.mxu0
        %v2489 = vadd.f32 %v2345, %v2415
        %v2490 = vxor.u32 %v2489, 2147483648
        %v2491 = vmul.f32 %v2490, 1.442695
        %v2492 = vpow.pop %v2491
        %v2493 = vadd.f32 %v2492, 1.0
        %v2494 = vrcp.pop %v2493
        %v2495 = vmul.f32 1.0, %v2494
        %v2496 = vadd.f32 %v2346, %v2417
        %v2497 = vxor.u32 %v2496, 2147483648
        %v2498 = vmul.f32 %v2497, 1.442695
        %v2499 = vpow.pop %v2498
        %v2500 = vadd.f32 %v2499, 1.0
        %v2501 = vrcp.pop %v2500
        %v2502 = vmul.f32 1.0, %v2501
        %v2503 = vadd.f32 %v2486, %v566
        %v2504 = vmul.f32 %v2495, %v2503
        %v2505 = vadd.f32 %v2347, %v2504
        %v2506 = vtanh.pop %v2505
        %v2507 = vsub.f32 1.0, %v2502
        %v2508 = vmul.f32 %v2507, %v2506
        %v2509 = vmul.f32 %v2502, %v2343
        %v2510 = vadd.f32 %v2508, %v2509
        %v2511 = vsel %vm390, 1, 0
        %2512 = vset.pattern.permute.xlu0 0
        %2513 = vperm.xlu0 %2512, %v2511
        %v2514 = vpop.permute.xlu0 %2513
        %vm2515 = vcmp.eq.s32.totalorder %v2514, 1
        %v2516 = vsel %vm2515, %v2510, 0.0
        %s2517 = scalar_lea.vmem %s291, 88 [#allocation8]
        %2518 = vst [vmem:[%s2517] sm:$0xff] %v2516
        %v2519 = vsel %vm2515, %v2510, %v2343
        %s2520 = scalar_lea.vmem %s259, 288 [#allocation3]
        %v2521 = vld [vmem:[%s2520] sm:$0xff]
        %v2522 = vld [vmem:[%s2520 + $0x8] sm:$0xff]
        %v2523 = vld [vmem:[%s2520 + $0x10] sm:$0xff]
        %2524 = vmatprep.subr.mxu0 %v306
        %2525 = vmatpush1.msra.mxu0 %v305
        %2526 = vmatprep.subr.mxu0 %v309
        %2527 = vmatpush1.msra.mxu0 %v308
        %2528 = vmatprep.subr.mxu0 %v312
        %2529 = vmatpush1.msra.mxu0 %v311
        %2530 = vmatprep.subr.mxu0 %v315
        %2531 = vmatpush1.msra.mxu0 %v314
        %2532 = vmatprep.subr.mxu0 %v318
        %2533 = vmatpush1.msra.mxu0 %v317
        %2534 = vmatprep.subr.mxu0 %v321
        %2535 = vmatpush1.msra.mxu0 %v320
        %2536 = vmatprep.subr.mxu0 %v324
        %2537 = vmatpush1.msra.mxu0 %v323
        %2538 = vmatprep.subr.mxu0 %v327
        %2539 = vmatpush1.msra.mxu0 %v326
        %2540 = vmatprep.subr.mxu0 %v330
        %2541 = vmatpush1.msra.mxu0 %v329
        %2542 = vmatprep.subr.mxu0 %v333
        %2543 = vmatpush1.msra.mxu0 %v332
        %2544 = vmatprep.subr.mxu0 %v336
        %2545 = vmatpush1.msra.mxu0 %v335
        %2546 = vmatprep.subr.mxu0 %v339
        %2547 = vmatpush1.msra.mxu0 %v338
        %2548 = vmatprep.subr.mxu0 %v342
        %2549 = vmatpush1.msra.mxu0 %v341
        %2550 = vmatprep.subr.mxu0 %v345
        %2551 = vmatpush1.msra.mxu0 %v344
        %2552 = vmatprep.subr.mxu0 %v348
        %2553 = vmatpush1.msra.mxu0 %v347
        %2554 = vmatprep.subr.mxu0 %v351
        %2555 = vmatpush1.msra.mxu0 %v350
        %2556 = vmatprep.subr.mxu0 0.0
        %2557 = vmatpush1.msra.mxu0 0.0
        %2558 = vmatprep.subr.mxu0 0.0
        %2559 = vmatpush1.msra.mxu0 0.0
        %2560 = vmatprep.subr.mxu0 0.0
        %2561 = vmatpush1.msra.mxu0 0.0
        %2562 = vmatprep.subr.mxu0 0.0
        %2563 = vmatpush1.msra.mxu0 0.0
        %2564 = vmatprep.subr.mxu0 0.0
        %2565 = vmatpush1.msra.mxu0 0.0
        %2566 = vmatprep.subr.mxu0 0.0
        %2567 = vmatpush1.msra.mxu0 0.0
        %2568 = vmatprep.subr.mxu0 0.0
        %2569 = vmatpush1.msra.mxu0 0.0
        %2570 = vmatprep.subr.mxu0 0.0
        %2571 = vmatpush1.msra.mxu0 0.0
        %2572 = vmatprep.subr.mxu0 0.0
        %2573 = vmatpush1.msra.mxu0 0.0
        %2574 = vmatprep.subr.mxu0 0.0
        %2575 = vmatpush1.msra.mxu0 0.0
        %2576 = vmatprep.subr.mxu0 0.0
        %2577 = vmatpush1.msra.mxu0 0.0
        %2578 = vmatprep.subr.mxu0 0.0
        %2579 = vmatpush1.msra.mxu0 0.0
        %2580 = vmatprep.subr.mxu0 0.0
        %2581 = vmatpush1.msra.mxu0 0.0
        %2582 = vmatprep.subr.mxu0 0.0
        %2583 = vmatpush1.msra.mxu0 0.0
        %2584 = vmatprep.subr.mxu0 0.0
        %2585 = vmatpush1.msra.mxu0 0.0
        %2586 = vmatprep.subr.mxu0 0.0
        %2587 = vmatpush1.msra.mxu0 0.0
        %2588 = vmatprep.mubr.f32.mxu0 0.0
        %2589 = vmatmul.mubr.f32.gmra.mrb[0].mxu0 %v2519
        %v2590 = vpop.f32.mrb[0].mxu0
        %v2591 = vadd.f32 0.0, %v2590
        %v2592 = vpop.f32.mrb[0].mxu0
        %v2593 = vadd.f32 0.0, %v2592
        %2594 = vdwg.mxu0
        %2595 = vmatprep.subr.mxu0 0.0
        %2596 = vmatpush1.msra.mxu0 %v307
        %2597 = vmatprep.subr.mxu0 0.0
        %2598 = vmatpush1.msra.mxu0 %v310
        %2599 = vmatprep.subr.mxu0 0.0
        %2600 = vmatpush1.msra.mxu0 %v313
        %2601 = vmatprep.subr.mxu0 0.0
        %2602 = vmatpush1.msra.mxu0 %v316
        %2603 = vmatprep.subr.mxu0 0.0
        %2604 = vmatpush1.msra.mxu0 %v319
        %2605 = vmatprep.subr.mxu0 0.0
        %2606 = vmatpush1.msra.mxu0 %v322
        %2607 = vmatprep.subr.mxu0 0.0
        %2608 = vmatpush1.msra.mxu0 %v325
        %2609 = vmatprep.subr.mxu0 0.0
        %2610 = vmatpush1.msra.mxu0 %v328
        %2611 = vmatprep.subr.mxu0 0.0
        %2612 = vmatpush1.msra.mxu0 %v331
        %2613 = vmatprep.subr.mxu0 0.0
        %2614 = vmatpush1.msra.mxu0 %v334
        %2615 = vmatprep.subr.mxu0 0.0
        %2616 = vmatpush1.msra.mxu0 %v337
        %2617 = vmatprep.subr.mxu0 0.0
        %2618 = vmatpush1.msra.mxu0 %v340
        %2619 = vmatprep.subr.mxu0 0.0
        %2620 = vmatpush1.msra.mxu0 %v343
        %2621 = vmatprep.subr.mxu0 0.0
        %2622 = vmatpush1.msra.mxu0 %v346
        %2623 = vmatprep.subr.mxu0 0.0
        %2624 = vmatpush1.msra.mxu0 %v349
        %2625 = vmatprep.subr.mxu0 0.0
        %2626 = vmatpush1.msra.mxu0 %v352
        %2627 = vmatprep.subr.mxu0 0.0
        %2628 = vmatpush1.msra.mxu0 0.0
        %2629 = vmatprep.subr.mxu0 0.0
        %2630 = vmatpush1.msra.mxu0 0.0
        %2631 = vmatprep.subr.mxu0 0.0
        %2632 = vmatpush1.msra.mxu0 0.0
        %2633 = vmatprep.subr.mxu0 0.0
        %2634 = vmatpush1.msra.mxu0 0.0
        %2635 = vmatprep.subr.mxu0 0.0
        %2636 = vmatpush1.msra.mxu0 0.0
        %2637 = vmatprep.subr.mxu0 0.0
        %2638 = vmatpush1.msra.mxu0 0.0
        %2639 = vmatprep.subr.mxu0 0.0
        %2640 = vmatpush1.msra.mxu0 0.0
        %2641 = vmatprep.subr.mxu0 0.0
        %2642 = vmatpush1.msra.mxu0 0.0
        %2643 = vmatprep.subr.mxu0 0.0
        %2644 = vmatpush1.msra.mxu0 0.0
        %2645 = vmatprep.subr.mxu0 0.0
        %2646 = vmatpush1.msra.mxu0 0.0
        %2647 = vmatprep.subr.mxu0 0.0
        %2648 = vmatpush1.msra.mxu0 0.0
        %2649 = vmatprep.subr.mxu0 0.0
        %2650 = vmatpush1.msra.mxu0 0.0
        %2651 = vmatprep.subr.mxu0 0.0
        %2652 = vmatpush1.msra.mxu0 0.0
        %2653 = vmatprep.subr.mxu0 0.0
        %2654 = vmatpush1.msra.mxu0 0.0
        %2655 = vmatprep.subr.mxu0 0.0
        %2656 = vmatpush1.msra.mxu0 0.0
        %2657 = vmatprep.subr.mxu0 0.0
        %2658 = vmatpush1.msra.mxu0 0.0
        %2659 = vmatprep.mubr.f32.mxu0 0.0
        %2660 = vmatmul.mubr.f32.gmra.mrb[0].mxu0 %v2519
        %v2661 = vpop.f32.mrb[0].mxu0
        %v2662 = vadd.f32 0.0, %v2661
        %v2663 = vpop.f32.mrb[0].mxu0
        %2664 = vdwg.mxu0
        %v2665 = vadd.f32 %v2521, %v2591
        %v2666 = vxor.u32 %v2665, 2147483648
        %v2667 = vmul.f32 %v2666, 1.442695
        %v2668 = vpow.pop %v2667
        %v2669 = vadd.f32 %v2668, 1.0
        %v2670 = vrcp.pop %v2669
        %v2671 = vmul.f32 1.0, %v2670
        %v2672 = vadd.f32 %v2522, %v2593
        %v2673 = vxor.u32 %v2672, 2147483648
        %v2674 = vmul.f32 %v2673, 1.442695
        %v2675 = vpow.pop %v2674
        %v2676 = vadd.f32 %v2675, 1.0
        %v2677 = vrcp.pop %v2676
        %v2678 = vmul.f32 1.0, %v2677
        %v2679 = vadd.f32 %v2662, %v566
        %v2680 = vmul.f32 %v2671, %v2679
        %v2681 = vadd.f32 %v2523, %v2680
        %v2682 = vtanh.pop %v2681
        %v2683 = vsub.f32 1.0, %v2678
        %v2684 = vmul.f32 %v2683, %v2682
        %v2685 = vmul.f32 %v2678, %v2519
        %v2686 = vadd.f32 %v2684, %v2685
        %v2687 = vsel %vm393, 1, 0
        %2688 = vset.pattern.permute.xlu0 0
        %2689 = vperm.xlu0 %2688, %v2687
        %v2690 = vpop.permute.xlu0 %2689
        %vm2691 = vcmp.eq.s32.totalorder %v2690, 1
        %v2692 = vsel %vm2691, %v2686, 0.0
        %s2693 = scalar_lea.vmem %s291, 96 [#allocation8]
        %2694 = vst [vmem:[%s2693] sm:$0xff] %v2692
        %v2695 = vsel %vm2691, %v2686, %v2519
        %s2696 = scalar_lea.vmem %s259, 312 [#allocation3]
        %v2697 = vld [vmem:[%s2696] sm:$0xff]
        %v2698 = vld [vmem:[%s2696 + $0x8] sm:$0xff]
        %v2699 = vld [vmem:[%s2696 + $0x10] sm:$0xff]
        %2700 = vmatprep.subr.mxu0 %v306
        %2701 = vmatpush1.msra.mxu0 %v305
        %2702 = vmatprep.subr.mxu0 %v309
        %2703 = vmatpush1.msra.mxu0 %v308
        %2704 = vmatprep.subr.mxu0 %v312
        %2705 = vmatpush1.msra.mxu0 %v311
        %2706 = vmatprep.subr.mxu0 %v315
        %2707 = vmatpush1.msra.mxu0 %v314
        %2708 = vmatprep.subr.mxu0 %v318
        %2709 = vmatpush1.msra.mxu0 %v317
        %2710 = vmatprep.subr.mxu0 %v321
        %2711 = vmatpush1.msra.mxu0 %v320
        %2712 = vmatprep.subr.mxu0 %v324
        %2713 = vmatpush1.msra.mxu0 %v323
        %2714 = vmatprep.subr.mxu0 %v327
        %2715 = vmatpush1.msra.mxu0 %v326
        %2716 = vmatprep.subr.mxu0 %v330
        %2717 = vmatpush1.msra.mxu0 %v329
        %2718 = vmatprep.subr.mxu0 %v333
        %2719 = vmatpush1.msra.mxu0 %v332
        %2720 = vmatprep.subr.mxu0 %v336
        %2721 = vmatpush1.msra.mxu0 %v335
        %2722 = vmatprep.subr.mxu0 %v339
        %2723 = vmatpush1.msra.mxu0 %v338
        %2724 = vmatprep.subr.mxu0 %v342
        %2725 = vmatpush1.msra.mxu0 %v341
        %2726 = vmatprep.subr.mxu0 %v345
        %2727 = vmatpush1.msra.mxu0 %v344
        %2728 = vmatprep.subr.mxu0 %v348
        %2729 = vmatpush1.msra.mxu0 %v347
        %2730 = vmatprep.subr.mxu0 %v351
        %2731 = vmatpush1.msra.mxu0 %v350
        %2732 = vmatprep.subr.mxu0 0.0
        %2733 = vmatpush1.msra.mxu0 0.0
        %2734 = vmatprep.subr.mxu0 0.0
        %2735 = vmatpush1.msra.mxu0 0.0
        %2736 = vmatprep.subr.mxu0 0.0
        %2737 = vmatpush1.msra.mxu0 0.0
        %2738 = vmatprep.subr.mxu0 0.0
        %2739 = vmatpush1.msra.mxu0 0.0
        %2740 = vmatprep.subr.mxu0 0.0
        %2741 = vmatpush1.msra.mxu0 0.0
        %2742 = vmatprep.subr.mxu0 0.0
        %2743 = vmatpush1.msra.mxu0 0.0
        %2744 = vmatprep.subr.mxu0 0.0
        %2745 = vmatpush1.msra.mxu0 0.0
        %2746 = vmatprep.subr.mxu0 0.0
        %2747 = vmatpush1.msra.mxu0 0.0
        %2748 = vmatprep.subr.mxu0 0.0
        %2749 = vmatpush1.msra.mxu0 0.0
        %2750 = vmatprep.subr.mxu0 0.0
        %2751 = vmatpush1.msra.mxu0 0.0
        %2752 = vmatprep.subr.mxu0 0.0
        %2753 = vmatpush1.msra.mxu0 0.0
        %2754 = vmatprep.subr.mxu0 0.0
        %2755 = vmatpush1.msra.mxu0 0.0
        %2756 = vmatprep.subr.mxu0 0.0
        %2757 = vmatpush1.msra.mxu0 0.0
        %2758 = vmatprep.subr.mxu0 0.0
        %2759 = vmatpush1.msra.mxu0 0.0
        %2760 = vmatprep.subr.mxu0 0.0
        %2761 = vmatpush1.msra.mxu0 0.0
        %2762 = vmatprep.subr.mxu0 0.0
        %2763 = vmatpush1.msra.mxu0 0.0
        %2764 = vmatprep.mubr.f32.mxu0 0.0
        %2765 = vmatmul.mubr.f32.gmra.mrb[0].mxu0 %v2695
        %v2766 = vpop.f32.mrb[0].mxu0
        %v2767 = vadd.f32 0.0, %v2766
        %v2768 = vpop.f32.mrb[0].mxu0
        %v2769 = vadd.f32 0.0, %v2768
        %2770 = vdwg.mxu0
        %2771 = vmatprep.subr.mxu0 0.0
        %2772 = vmatpush1.msra.mxu0 %v307
        %2773 = vmatprep.subr.mxu0 0.0
        %2774 = vmatpush1.msra.mxu0 %v310
        %2775 = vmatprep.subr.mxu0 0.0
        %2776 = vmatpush1.msra.mxu0 %v313
        %2777 = vmatprep.subr.mxu0 0.0
        %2778 = vmatpush1.msra.mxu0 %v316
        %2779 = vmatprep.subr.mxu0 0.0
        %2780 = vmatpush1.msra.mxu0 %v319
        %2781 = vmatprep.subr.mxu0 0.0
        %2782 = vmatpush1.msra.mxu0 %v322
        %2783 = vmatprep.subr.mxu0 0.0
        %2784 = vmatpush1.msra.mxu0 %v325
        %2785 = vmatprep.subr.mxu0 0.0
        %2786 = vmatpush1.msra.mxu0 %v328
        %2787 = vmatprep.subr.mxu0 0.0
        %2788 = vmatpush1.msra.mxu0 %v331
        %2789 = vmatprep.subr.mxu0 0.0
        %2790 = vmatpush1.msra.mxu0 %v334
        %2791 = vmatprep.subr.mxu0 0.0
        %2792 = vmatpush1.msra.mxu0 %v337
        %2793 = vmatprep.subr.mxu0 0.0
        %2794 = vmatpush1.msra.mxu0 %v340
        %2795 = vmatprep.subr.mxu0 0.0
        %2796 = vmatpush1.msra.mxu0 %v343
        %2797 = vmatprep.subr.mxu0 0.0
        %2798 = vmatpush1.msra.mxu0 %v346
        %2799 = vmatprep.subr.mxu0 0.0
        %2800 = vmatpush1.msra.mxu0 %v349
        %2801 = vmatprep.subr.mxu0 0.0
        %2802 = vmatpush1.msra.mxu0 %v352
        %2803 = vmatprep.subr.mxu0 0.0
        %2804 = vmatpush1.msra.mxu0 0.0
        %2805 = vmatprep.subr.mxu0 0.0
        %2806 = vmatpush1.msra.mxu0 0.0
        %2807 = vmatprep.subr.mxu0 0.0
        %2808 = vmatpush1.msra.mxu0 0.0
        %2809 = vmatprep.subr.mxu0 0.0
        %2810 = vmatpush1.msra.mxu0 0.0
        %2811 = vmatprep.subr.mxu0 0.0
        %2812 = vmatpush1.msra.mxu0 0.0
        %2813 = vmatprep.subr.mxu0 0.0
        %2814 = vmatpush1.msra.mxu0 0.0
        %2815 = vmatprep.subr.mxu0 0.0
        %2816 = vmatpush1.msra.mxu0 0.0
        %2817 = vmatprep.subr.mxu0 0.0
        %2818 = vmatpush1.msra.mxu0 0.0
        %2819 = vmatprep.subr.mxu0 0.0
        %2820 = vmatpush1.msra.mxu0 0.0
        %2821 = vmatprep.subr.mxu0 0.0
        %2822 = vmatpush1.msra.mxu0 0.0
        %2823 = vmatprep.subr.mxu0 0.0
        %2824 = vmatpush1.msra.mxu0 0.0
        %2825 = vmatprep.subr.mxu0 0.0
        %2826 = vmatpush1.msra.mxu0 0.0
        %2827 = vmatprep.subr.mxu0 0.0
        %2828 = vmatpush1.msra.mxu0 0.0
        %2829 = vmatprep.subr.mxu0 0.0
        %2830 = vmatpush1.msra.mxu0 0.0
        %2831 = vmatprep.subr.mxu0 0.0
        %2832 = vmatpush1.msra.mxu0 0.0
        %2833 = vmatprep.subr.mxu0 0.0
        %2834 = vmatpush1.msra.mxu0 0.0
        %2835 = vmatprep.mubr.f32.mxu0 0.0
        %2836 = vmatmul.mubr.f32.gmra.mrb[0].mxu0 %v2695
        %v2837 = vpop.f32.mrb[0].mxu0
        %v2838 = vadd.f32 0.0, %v2837
        %v2839 = vpop.f32.mrb[0].mxu0
        %2840 = vdwg.mxu0
        %v2841 = vadd.f32 %v2697, %v2767
        %v2842 = vxor.u32 %v2841, 2147483648
        %v2843 = vmul.f32 %v2842, 1.442695
        %v2844 = vpow.pop %v2843
        %v2845 = vadd.f32 %v2844, 1.0
        %v2846 = vrcp.pop %v2845
        %v2847 = vmul.f32 1.0, %v2846
        %v2848 = vadd.f32 %v2698, %v2769
        %v2849 = vxor.u32 %v2848, 2147483648
        %v2850 = vmul.f32 %v2849, 1.442695
        %v2851 = vpow.pop %v2850
        %v2852 = vadd.f32 %v2851, 1.0
        %v2853 = vrcp.pop %v2852
        %v2854 = vmul.f32 1.0, %v2853
        %v2855 = vadd.f32 %v2838, %v566
        %v2856 = vmul.f32 %v2847, %v2855
        %v2857 = vadd.f32 %v2699, %v2856
        %v2858 = vtanh.pop %v2857
        %v2859 = vsub.f32 1.0, %v2854
        %v2860 = vmul.f32 %v2859, %v2858
        %v2861 = vmul.f32 %v2854, %v2695
        %v2862 = vadd.f32 %v2860, %v2861
        %v2863 = vsel %vm396, 1, 0
        %2864 = vset.pattern.permute.xlu0 0
        %2865 = vperm.xlu0 %2864, %v2863
        %v2866 = vpop.permute.xlu0 %2865
        %vm2867 = vcmp.eq.s32.totalorder %v2866, 1
        %v2868 = vsel %vm2867, %v2862, 0.0
        %s2869 = scalar_lea.vmem %s291, 104 [#allocation8]
        %2870 = vst [vmem:[%s2869] sm:$0xff] %v2868
        %v2871 = vsel %vm2867, %v2862, %v2695
        %s2872 = scalar_lea.vmem %s259, 336 [#allocation3]
        %v2873 = vld [vmem:[%s2872] sm:$0xff]
        %v2874 = vld [vmem:[%s2872 + $0x8] sm:$0xff]
        %v2875 = vld [vmem:[%s2872 + $0x10] sm:$0xff]
        %2876 = vmatprep.subr.mxu0 %v306
        %2877 = vmatpush1.msra.mxu0 %v305
        %2878 = vmatprep.subr.mxu0 %v309
        %2879 = vmatpush1.msra.mxu0 %v308
        %2880 = vmatprep.subr.mxu0 %v312
        %2881 = vmatpush1.msra.mxu0 %v311
        %2882 = vmatprep.subr.mxu0 %v315
        %2883 = vmatpush1.msra.mxu0 %v314
        %2884 = vmatprep.subr.mxu0 %v318
        %2885 = vmatpush1.msra.mxu0 %v317
        %2886 = vmatprep.subr.mxu0 %v321
        %2887 = vmatpush1.msra.mxu0 %v320
        %2888 = vmatprep.subr.mxu0 %v324
        %2889 = vmatpush1.msra.mxu0 %v323
        %2890 = vmatprep.subr.mxu0 %v327
        %2891 = vmatpush1.msra.mxu0 %v326
        %2892 = vmatprep.subr.mxu0 %v330
        %2893 = vmatpush1.msra.mxu0 %v329
        %2894 = vmatprep.subr.mxu0 %v333
        %2895 = vmatpush1.msra.mxu0 %v332
        %2896 = vmatprep.subr.mxu0 %v336
        %2897 = vmatpush1.msra.mxu0 %v335
        %2898 = vmatprep.subr.mxu0 %v339
        %2899 = vmatpush1.msra.mxu0 %v338
        %2900 = vmatprep.subr.mxu0 %v342
        %2901 = vmatpush1.msra.mxu0 %v341
        %2902 = vmatprep.subr.mxu0 %v345
        %2903 = vmatpush1.msra.mxu0 %v344
        %2904 = vmatprep.subr.mxu0 %v348
        %2905 = vmatpush1.msra.mxu0 %v347
        %2906 = vmatprep.subr.mxu0 %v351
        %2907 = vmatpush1.msra.mxu0 %v350
        %2908 = vmatprep.subr.mxu0 0.0
        %2909 = vmatpush1.msra.mxu0 0.0
        %2910 = vmatprep.subr.mxu0 0.0
        %2911 = vmatpush1.msra.mxu0 0.0
        %2912 = vmatprep.subr.mxu0 0.0
        %2913 = vmatpush1.msra.mxu0 0.0
        %2914 = vmatprep.subr.mxu0 0.0
        %2915 = vmatpush1.msra.mxu0 0.0
        %2916 = vmatprep.subr.mxu0 0.0
        %2917 = vmatpush1.msra.mxu0 0.0
        %2918 = vmatprep.subr.mxu0 0.0
        %2919 = vmatpush1.msra.mxu0 0.0
        %2920 = vmatprep.subr.mxu0 0.0
        %2921 = vmatpush1.msra.mxu0 0.0
        %2922 = vmatprep.subr.mxu0 0.0
        %2923 = vmatpush1.msra.mxu0 0.0
        %2924 = vmatprep.subr.mxu0 0.0
        %2925 = vmatpush1.msra.mxu0 0.0
        %2926 = vmatprep.subr.mxu0 0.0
        %2927 = vmatpush1.msra.mxu0 0.0
        %2928 = vmatprep.subr.mxu0 0.0
        %2929 = vmatpush1.msra.mxu0 0.0
        %2930 = vmatprep.subr.mxu0 0.0
        %2931 = vmatpush1.msra.mxu0 0.0
        %2932 = vmatprep.subr.mxu0 0.0
        %2933 = vmatpush1.msra.mxu0 0.0
        %2934 = vmatprep.subr.mxu0 0.0
        %2935 = vmatpush1.msra.mxu0 0.0
        %2936 = vmatprep.subr.mxu0 0.0
        %2937 = vmatpush1.msra.mxu0 0.0
        %2938 = vmatprep.subr.mxu0 0.0
        %2939 = vmatpush1.msra.mxu0 0.0
        %2940 = vmatprep.mubr.f32.mxu0 0.0
        %2941 = vmatmul.mubr.f32.gmra.mrb[0].mxu0 %v2871
        %v2942 = vpop.f32.mrb[0].mxu0
        %v2943 = vadd.f32 0.0, %v2942
        %v2944 = vpop.f32.mrb[0].mxu0
        %v2945 = vadd.f32 0.0, %v2944
        %2946 = vdwg.mxu0
        %2947 = vmatprep.subr.mxu0 0.0
        %2948 = vmatpush1.msra.mxu0 %v307
        %2949 = vmatprep.subr.mxu0 0.0
        %2950 = vmatpush1.msra.mxu0 %v310
        %2951 = vmatprep.subr.mxu0 0.0
        %2952 = vmatpush1.msra.mxu0 %v313
        %2953 = vmatprep.subr.mxu0 0.0
        %2954 = vmatpush1.msra.mxu0 %v316
        %2955 = vmatprep.subr.mxu0 0.0
        %2956 = vmatpush1.msra.mxu0 %v319
        %2957 = vmatprep.subr.mxu0 0.0
        %2958 = vmatpush1.msra.mxu0 %v322
        %2959 = vmatprep.subr.mxu0 0.0
        %2960 = vmatpush1.msra.mxu0 %v325
        %2961 = vmatprep.subr.mxu0 0.0
        %2962 = vmatpush1.msra.mxu0 %v328
        %2963 = vmatprep.subr.mxu0 0.0
        %2964 = vmatpush1.msra.mxu0 %v331
        %2965 = vmatprep.subr.mxu0 0.0
        %2966 = vmatpush1.msra.mxu0 %v334
        %2967 = vmatprep.subr.mxu0 0.0
        %2968 = vmatpush1.msra.mxu0 %v337
        %2969 = vmatprep.subr.mxu0 0.0
        %2970 = vmatpush1.msra.mxu0 %v340
        %2971 = vmatprep.subr.mxu0 0.0
        %2972 = vmatpush1.msra.mxu0 %v343
        %2973 = vmatprep.subr.mxu0 0.0
        %2974 = vmatpush1.msra.mxu0 %v346
        %2975 = vmatprep.subr.mxu0 0.0
        %2976 = vmatpush1.msra.mxu0 %v349
        %2977 = vmatprep.subr.mxu0 0.0
        %2978 = vmatpush1.msra.mxu0 %v352
        %2979 = vmatprep.subr.mxu0 0.0
        %2980 = vmatpush1.msra.mxu0 0.0
        %2981 = vmatprep.subr.mxu0 0.0
        %2982 = vmatpush1.msra.mxu0 0.0
        %2983 = vmatprep.subr.mxu0 0.0
        %2984 = vmatpush1.msra.mxu0 0.0
        %2985 = vmatprep.subr.mxu0 0.0
        %2986 = vmatpush1.msra.mxu0 0.0
        %2987 = vmatprep.subr.mxu0 0.0
        %2988 = vmatpush1.msra.mxu0 0.0
        %2989 = vmatprep.subr.mxu0 0.0
        %2990 = vmatpush1.msra.mxu0 0.0
        %2991 = vmatprep.subr.mxu0 0.0
        %2992 = vmatpush1.msra.mxu0 0.0
        %2993 = vmatprep.subr.mxu0 0.0
        %2994 = vmatpush1.msra.mxu0 0.0
        %2995 = vmatprep.subr.mxu0 0.0
        %2996 = vmatpush1.msra.mxu0 0.0
        %2997 = vmatprep.subr.mxu0 0.0
        %2998 = vmatpush1.msra.mxu0 0.0
        %2999 = vmatprep.subr.mxu0 0.0
        %3000 = vmatpush1.msra.mxu0 0.0
        %3001 = vmatprep.subr.mxu0 0.0
        %3002 = vmatpush1.msra.mxu0 0.0
        %3003 = vmatprep.subr.mxu0 0.0
        %3004 = vmatpush1.msra.mxu0 0.0
        %3005 = vmatprep.subr.mxu0 0.0
        %3006 = vmatpush1.msra.mxu0 0.0
        %3007 = vmatprep.subr.mxu0 0.0
        %3008 = vmatpush1.msra.mxu0 0.0
        %3009 = vmatprep.subr.mxu0 0.0
        %3010 = vmatpush1.msra.mxu0 0.0
        %3011 = vmatprep.mubr.f32.mxu0 0.0
        %3012 = vmatmul.mubr.f32.gmra.mrb[0].mxu0 %v2871
        %v3013 = vpop.f32.mrb[0].mxu0
        %v3014 = vadd.f32 0.0, %v3013
        %v3015 = vpop.f32.mrb[0].mxu0
        %3016 = vdwg.mxu0
        %v3017 = vadd.f32 %v2873, %v2943
        %v3018 = vxor.u32 %v3017, 2147483648
        %v3019 = vmul.f32 %v3018, 1.442695
        %v3020 = vpow.pop %v3019
        %v3021 = vadd.f32 %v3020, 1.0
        %v3022 = vrcp.pop %v3021
        %v3023 = vmul.f32 1.0, %v3022
        %v3024 = vadd.f32 %v2874, %v2945
        %v3025 = vxor.u32 %v3024, 2147483648
        %v3026 = vmul.f32 %v3025, 1.442695
        %v3027 = vpow.pop %v3026
        %v3028 = vadd.f32 %v3027, 1.0
        %v3029 = vrcp.pop %v3028
        %v3030 = vmul.f32 1.0, %v3029
        %v3031 = vadd.f32 %v3014, %v566
        %v3032 = vmul.f32 %v3023, %v3031
        %v3033 = vadd.f32 %v2875, %v3032
        %v3034 = vtanh.pop %v3033
        %v3035 = vsub.f32 1.0, %v3030
        %v3036 = vmul.f32 %v3035, %v3034
        %v3037 = vmul.f32 %v3030, %v2871
        %v3038 = vadd.f32 %v3036, %v3037
        %v3039 = vsel %vm399, 1, 0
        %3040 = vset.pattern.permute.xlu0 0
        %3041 = vperm.xlu0 %3040, %v3039
        %v3042 = vpop.permute.xlu0 %3041
        %vm3043 = vcmp.eq.s32.totalorder %v3042, 1
        %v3044 = vsel %vm3043, %v3038, 0.0
        %s3045 = scalar_lea.vmem %s291, 112 [#allocation8]
        %3046 = vst [vmem:[%s3045] sm:$0xff] %v3044
        %v3047 = vsel %vm3043, %v3038, %v2871
        %s3048 = scalar_lea.vmem %s259, 360 [#allocation3]
        %v3049 = vld [vmem:[%s3048] sm:$0xff]
        %v3050 = vld [vmem:[%s3048 + $0x8] sm:$0xff]
        %v3051 = vld [vmem:[%s3048 + $0x10] sm:$0xff]
        %3052 = vmatprep.subr.mxu0 %v306
        %3053 = vmatpush1.msra.mxu0 %v305
        %3054 = vmatprep.subr.mxu0 %v309
        %3055 = vmatpush1.msra.mxu0 %v308
        %3056 = vmatprep.subr.mxu0 %v312
        %3057 = vmatpush1.msra.mxu0 %v311
        %3058 = vmatprep.subr.mxu0 %v315
        %3059 = vmatpush1.msra.mxu0 %v314
        %3060 = vmatprep.subr.mxu0 %v318
        %3061 = vmatpush1.msra.mxu0 %v317
        %3062 = vmatprep.subr.mxu0 %v321
        %3063 = vmatpush1.msra.mxu0 %v320
        %3064 = vmatprep.subr.mxu0 %v324
        %3065 = vmatpush1.msra.mxu0 %v323
        %3066 = vmatprep.subr.mxu0 %v327
        %3067 = vmatpush1.msra.mxu0 %v326
        %3068 = vmatprep.subr.mxu0 %v330
        %3069 = vmatpush1.msra.mxu0 %v329
        %3070 = vmatprep.subr.mxu0 %v333
        %3071 = vmatpush1.msra.mxu0 %v332
        %3072 = vmatprep.subr.mxu0 %v336
        %3073 = vmatpush1.msra.mxu0 %v335
        %3074 = vmatprep.subr.mxu0 %v339
        %3075 = vmatpush1.msra.mxu0 %v338
        %3076 = vmatprep.subr.mxu0 %v342
        %3077 = vmatpush1.msra.mxu0 %v341
        %3078 = vmatprep.subr.mxu0 %v345
        %3079 = vmatpush1.msra.mxu0 %v344
        %3080 = vmatprep.subr.mxu0 %v348
        %3081 = vmatpush1.msra.mxu0 %v347
        %3082 = vmatprep.subr.mxu0 %v351
        %3083 = vmatpush1.msra.mxu0 %v350
        %3084 = vmatprep.subr.mxu0 0.0
        %3085 = vmatpush1.msra.mxu0 0.0
        %3086 = vmatprep.subr.mxu0 0.0
        %3087 = vmatpush1.msra.mxu0 0.0
        %3088 = vmatprep.subr.mxu0 0.0
        %3089 = vmatpush1.msra.mxu0 0.0
        %3090 = vmatprep.subr.mxu0 0.0
        %3091 = vmatpush1.msra.mxu0 0.0
        %3092 = vmatprep.subr.mxu0 0.0
        %3093 = vmatpush1.msra.mxu0 0.0
        %3094 = vmatprep.subr.mxu0 0.0
        %3095 = vmatpush1.msra.mxu0 0.0
        %3096 = vmatprep.subr.mxu0 0.0
        %3097 = vmatpush1.msra.mxu0 0.0
        %3098 = vmatprep.subr.mxu0 0.0
        %3099 = vmatpush1.msra.mxu0 0.0
        %3100 = vmatprep.subr.mxu0 0.0
        %3101 = vmatpush1.msra.mxu0 0.0
        %3102 = vmatprep.subr.mxu0 0.0
        %3103 = vmatpush1.msra.mxu0 0.0
        %3104 = vmatprep.subr.mxu0 0.0
        %3105 = vmatpush1.msra.mxu0 0.0
        %3106 = vmatprep.subr.mxu0 0.0
        %3107 = vmatpush1.msra.mxu0 0.0
        %3108 = vmatprep.subr.mxu0 0.0
        %3109 = vmatpush1.msra.mxu0 0.0
        %3110 = vmatprep.subr.mxu0 0.0
        %3111 = vmatpush1.msra.mxu0 0.0
        %3112 = vmatprep.subr.mxu0 0.0
        %3113 = vmatpush1.msra.mxu0 0.0
        %3114 = vmatprep.subr.mxu0 0.0
        %3115 = vmatpush1.msra.mxu0 0.0
        %3116 = vmatprep.mubr.f32.mxu0 0.0
        %3117 = vmatmul.mubr.f32.gmra.mrb[0].mxu0 %v3047
        %v3118 = vpop.f32.mrb[0].mxu0
        %v3119 = vadd.f32 0.0, %v3118
        %v3120 = vpop.f32.mrb[0].mxu0
        %v3121 = vadd.f32 0.0, %v3120
        %3122 = vdwg.mxu0
        %3123 = vmatprep.subr.mxu0 0.0
        %3124 = vmatpush1.msra.mxu0 %v307
        %3125 = vmatprep.subr.mxu0 0.0
        %3126 = vmatpush1.msra.mxu0 %v310
        %3127 = vmatprep.subr.mxu0 0.0
        %3128 = vmatpush1.msra.mxu0 %v313
        %3129 = vmatprep.subr.mxu0 0.0
        %3130 = vmatpush1.msra.mxu0 %v316
        %3131 = vmatprep.subr.mxu0 0.0
        %3132 = vmatpush1.msra.mxu0 %v319
        %3133 = vmatprep.subr.mxu0 0.0
        %3134 = vmatpush1.msra.mxu0 %v322
        %3135 = vmatprep.subr.mxu0 0.0
        %3136 = vmatpush1.msra.mxu0 %v325
        %3137 = vmatprep.subr.mxu0 0.0
        %3138 = vmatpush1.msra.mxu0 %v328
        %3139 = vmatprep.subr.mxu0 0.0
        %3140 = vmatpush1.msra.mxu0 %v331
        %3141 = vmatprep.subr.mxu0 0.0
        %3142 = vmatpush1.msra.mxu0 %v334
        %3143 = vmatprep.subr.mxu0 0.0
        %3144 = vmatpush1.msra.mxu0 %v337
        %3145 = vmatprep.subr.mxu0 0.0
        %3146 = vmatpush1.msra.mxu0 %v340
        %3147 = vmatprep.subr.mxu0 0.0
        %3148 = vmatpush1.msra.mxu0 %v343
        %3149 = vmatprep.subr.mxu0 0.0
        %3150 = vmatpush1.msra.mxu0 %v346
        %3151 = vmatprep.subr.mxu0 0.0
        %3152 = vmatpush1.msra.mxu0 %v349
        %3153 = vmatprep.subr.mxu0 0.0
        %3154 = vmatpush1.msra.mxu0 %v352
        %3155 = vmatprep.subr.mxu0 0.0
        %3156 = vmatpush1.msra.mxu0 0.0
        %3157 = vmatprep.subr.mxu0 0.0
        %3158 = vmatpush1.msra.mxu0 0.0
        %3159 = vmatprep.subr.mxu0 0.0
        %3160 = vmatpush1.msra.mxu0 0.0
        %3161 = vmatprep.subr.mxu0 0.0
        %3162 = vmatpush1.msra.mxu0 0.0
        %3163 = vmatprep.subr.mxu0 0.0
        %3164 = vmatpush1.msra.mxu0 0.0
        %3165 = vmatprep.subr.mxu0 0.0
        %3166 = vmatpush1.msra.mxu0 0.0
        %3167 = vmatprep.subr.mxu0 0.0
        %3168 = vmatpush1.msra.mxu0 0.0
        %3169 = vmatprep.subr.mxu0 0.0
        %3170 = vmatpush1.msra.mxu0 0.0
        %3171 = vmatprep.subr.mxu0 0.0
        %3172 = vmatpush1.msra.mxu0 0.0
        %3173 = vmatprep.subr.mxu0 0.0
        %3174 = vmatpush1.msra.mxu0 0.0
        %3175 = vmatprep.subr.mxu0 0.0
        %3176 = vmatpush1.msra.mxu0 0.0
        %3177 = vmatprep.subr.mxu0 0.0
        %3178 = vmatpush1.msra.mxu0 0.0
        %3179 = vmatprep.subr.mxu0 0.0
        %3180 = vmatpush1.msra.mxu0 0.0
        %3181 = vmatprep.subr.mxu0 0.0
        %3182 = vmatpush1.msra.mxu0 0.0
        %3183 = vmatprep.subr.mxu0 0.0
        %3184 = vmatpush1.msra.mxu0 0.0
        %3185 = vmatprep.subr.mxu0 0.0
        %3186 = vmatpush1.msra.mxu0 0.0
        %3187 = vmatprep.mubr.f32.mxu0 0.0
        %3188 = vmatmul.mubr.f32.gmra.mrb[0].mxu0 %v3047
        %v3189 = vpop.f32.mrb[0].mxu0
        %v3190 = vadd.f32 0.0, %v3189
        %v3191 = vpop.f32.mrb[0].mxu0
        %3192 = vdwg.mxu0
        %v3193 = vadd.f32 %v3049, %v3119
        %v3194 = vxor.u32 %v3193, 2147483648
        %v3195 = vmul.f32 %v3194, 1.442695
        %v3196 = vpow.pop %v3195
        %v3197 = vadd.f32 %v3196, 1.0
        %v3198 = vrcp.pop %v3197
        %v3199 = vmul.f32 1.0, %v3198
        %v3200 = vadd.f32 %v3050, %v3121
        %v3201 = vxor.u32 %v3200, 2147483648
        %v3202 = vmul.f32 %v3201, 1.442695
        %v3203 = vpow.pop %v3202
        %v3204 = vadd.f32 %v3203, 1.0
        %v3205 = vrcp.pop %v3204
        %v3206 = vmul.f32 1.0, %v3205
        %v3207 = vadd.f32 %v3190, %v566
        %v3208 = vmul.f32 %v3199, %v3207
        %v3209 = vadd.f32 %v3051, %v3208
        %v3210 = vtanh.pop %v3209
        %v3211 = vsub.f32 1.0, %v3206
        %v3212 = vmul.f32 %v3211, %v3210
        %v3213 = vmul.f32 %v3206, %v3047
        %v3214 = vadd.f32 %v3212, %v3213
        %v3215 = vsel %vm402, 1, 0
        %3216 = vset.pattern.permute.xlu0 0
        %3217 = vperm.xlu0 %3216, %v3215
        %v3218 = vpop.permute.xlu0 %3217
        %vm3219 = vcmp.eq.s32.totalorder %v3218, 1
        %v3220 = vsel %vm3219, %v3214, 0.0
        %s3221 = scalar_lea.vmem %s291, 120 [#allocation8]
        %3222 = vst [vmem:[%s3221] sm:$0xff] %v3220
        %v3223 = vsel %vm3219, %v3214, %v3047
        %3224 = vst [vmem:[#allocation2] sm:$0xff] %v3223
        %p3225 = scmp.eq.s32.totalorder %s30, 1
        // Predicated region
        $region49: #{tpu_custom_call.1} parent=35 // pred_check
          %p3226 = pneg %p3225
        $region50: #{tpu_custom_call.1} parent=35 // pred_check_branch
          %3228 = sbr.rel (%p3226) target = $region52
        $region51: #{tpu_custom_call.1} parent=35 // pred_region
          %3229 = vst [vmem:[#allocation9] sm:$0xff] %v3223
        $region52: #{tpu_custom_call.1} parent=35 // pred_fallthru
          _
        %s3230 = sand.u32 %s143, 1
        %s3231 = scalar_lea.sflag [#allocation5], %s3230
        %s3232 = sand.u32 %s143, 1
        %s3233 = smul.addr %s3232, 128
        %s3234 = scalar_lea.vmem [#allocation8], %s3233
        // Predicated region
        $region53: #{tpu_custom_call.1} parent=35 // pred_check
          %p3235 = pneg %p153
        $region54: #{tpu_custom_call.1} parent=35 // pred_check_branch
          %3237 = sbr.rel (%p3235) target = $region56
        $region55: #{tpu_custom_call.1} parent=35 // pred_region
          %s3238 = smul.u32 16, %s30
          %s3240 = ssub.s32 2048, 2048
          %3241 = vsyncadd %s3231, %s3240
          %s3242 = sadd.s32 %s29, %s3238
          %s3243 = smul.addr %s3242, 128
          %s3244 = scalar_lea.hbm %s4, %s3243
          %s3245 = sshll.u32 %s3234, 4
          %s3246 = int_to_ptr.vmem [resolvable:$true] %s3245
          %3251 = dma.vmem_to_hbm [thread:$0]  %s3246, 2048, %s3244, %s3231, 128, 128, 8
        $region56: #{tpu_custom_call.1} parent=35 // pred_fallthru
          _
        // Predicated region
        $region57: #{tpu_custom_call.1} parent=35 // pred_check
          %p3252 = pneg %p179
        $region58: #{tpu_custom_call.1} parent=35 // pred_check_branch
          %3254 = sbr.rel (%p3252) target = $region60
        $region59: #{tpu_custom_call.1} parent=35 // pred_region
          %s3256 = ssub.s32 128, 128
          %3257 = vsyncadd [#allocation10], %s3256
          %s3258 = smul.addr %s29, 128
          %s3259 = scalar_lea.hbm %s5, %s3258
          %s3261 = sshll.u32 [#allocation9], 4
          %s3262 = int_to_ptr.vmem [resolvable:$true] %s3261
          %3264 = dma.vmem_to_hbm [thread:$0]  %s3262, 128, %s3259, [#allocation10]
        $region60: #{tpu_custom_call.1} parent=35 // pred_fallthru
          _
        // Predicated region
        $region61: #{tpu_custom_call.1} parent=35 // pred_check
          %p3265 = pneg %p179
        $region62: #{tpu_custom_call.1} parent=35 // pred_check_branch
          %3267 = sbr.rel (%p3265) target = $region64
        $region63: #{tpu_custom_call.1} parent=35 // pred_region
          %3268 = dma.done [#allocation10], 128
        $region64: #{tpu_custom_call.1} parent=35 // pred_fallthru
          _
      $region36: #{tpu_custom_call.1} parent=5 // pred_fallthru
        _
      %p3269 = scmp.le.s32.totalorder 2, %s20
      // Predicated region
      $region65: #{tpu_custom_call.1} parent=5 // pred_check
        %p3270 = pneg %p3269
      $region66: #{tpu_custom_call.1} parent=5 // pred_check_branch
        %3272 = sbr.rel (%p3270) target = $region68
      $region67: #{tpu_custom_call.1} parent=5 // pred_region
        %s3273 = ssub.s32 %s20, 2
        // Predicated region
        $region69: #{tpu_custom_call.1} parent=67 // pred_check
          %p3274 = pneg %p159
        $region70: #{tpu_custom_call.1} parent=67 // pred_check_branch
          %3276 = sbr.rel (%p3274) target = $region72
        $region71: #{tpu_custom_call.1} parent=67 // pred_region
          %s3277 = sand.u32 %s144, 1
          %s3278 = scalar_lea.sflag [#allocation5], %s3277
          %s3279 = sand.u32 %s144, 1
          %s3280 = smul.addr %s3279, 128
          %s3281 = scalar_lea.vmem [#allocation8], %s3280
          %3282 = dma.done %s3278, 2048
        $region72: #{tpu_custom_call.1} parent=67 // pred_fallthru
          _
      $region68: #{tpu_custom_call.1} parent=5 // pred_fallthru
        _
    $region6: #{tpu_custom_call.1} parent=1 // loop_footer
      %s24 = sadd.s32 1, %s20
    $region7: #{tpu_custom_call.1} parent=1 // loop_footer_branch
      %19 = sbr.rel target = $region3
    $region8: #{tpu_custom_call.1} parent=1 // loop_exit
      _
    %3283 = vsyncpa [#allocation4], 1
    %s3284 = scalar_lea.sflag [#allocation4], 1
    %3285 = vsyncpa %s3284, 1
    %3286 = vsyncpa [#allocation7], 1
    %3287 = vsyncpa [#allocation5], 1
    %s3288 = scalar_lea.sflag [#allocation5], 1
    %3289 = vsyncpa %s3288, 1
    %3290 = vsyncpa [#allocation10], 1

</llo_original>
